<compile_context>
chip_gen: v6e
topology: v6e:2x2x1
jax: 0.10.0
libtpu: 0.0.40
codegen_flags: <defaults>
</compile_context>

<pallas_src>
import math
import jax
import jax.numpy as jnp
from jax.experimental import pallas as pl
from jax.experimental.pallas import tpu as pltpu

LAYER_DIMS = [2048, 512, 128, 32, 8, 2, 1]
N_BF16_LAYERS = 3  # layers whose weights are stored / consumed as bf16


def mlp_kernel(x_ref,
               w1_ref, b1_ref,
               w2_ref, b2_ref,
               w3_ref, b3_ref,
               w4_ref, b4_ref,
               w5_ref, b5_ref,
               w6_ref, b6_ref,
               o_ref):
    def dot_bias(h, w_ref, b_ref):
        # MXU matmul with f32 accumulation, f32 bias add.
        return jnp.dot(h, w_ref[...], preferred_element_type=jnp.float32) + b_ref[...]

    h = x_ref[...]                                                    # (TB, 2048) bf16
    h = jnp.maximum(dot_bias(h, w1_ref, b1_ref), 0.0).astype(jnp.bfloat16)  # (TB, 512)
    h = jnp.maximum(dot_bias(h, w2_ref, b2_ref), 0.0).astype(jnp.bfloat16)  # (TB, 128)
    h = jnp.maximum(dot_bias(h, w3_ref, b3_ref), 0.0)                       # (TB, 32) f32
    h = jnp.maximum(dot_bias(h, w4_ref, b4_ref), 0.0)                       # (TB, 8)
    h = jnp.maximum(dot_bias(h, w5_ref, b5_ref), 0.0)                       # (TB, 2)
    logits = dot_bias(h, w6_ref, b6_ref)                                    # (TB, 1)

    # Softmax over dim=1. The final feature dim is 1, so this is identically
    # 1.0 — kept to match the PyTorch module's (degenerate) semantics exactly.
    m = jnp.max(logits, axis=-1, keepdims=True)
    e = jnp.exp(logits - m)
    s = jnp.sum(e, axis=-1, keepdims=True)
    o_ref[...] = (e / s).astype(o_ref.dtype)


def mlp_forward(x, params, *, max_block_b=128):
    """x: (B, 2048) f32; params: list of (W(in,out) f32, b(1,out) f32)."""
    B, D = x.shape
    assert D == LAYER_DIMS[0]

    # Batch tile: multiple of 8 (sublane), capped at max_block_b.
    tb = min(max_block_b, ((B + 7) // 8) * 8)
    b_pad = pl.cdiv(B, tb) * tb
    nb = b_pad // tb

    x_in = x.astype(jnp.bfloat16)
    if b_pad != B:
        x_in = jnp.pad(x_in, ((0, b_pad - B), (0, 0)))

    def resident(shape):
        # Constant block index => weight/bias stays in VMEM across grid steps.
        return pl.BlockSpec(shape, lambda i: tuple(0 for _ in shape))

    in_specs = [pl.BlockSpec((tb, D), lambda i: (i, 0))]
    args = [x_in]
    for idx, (w, b) in enumerate(params):
        w_dtype = jnp.bfloat16 if idx < N_BF16_LAYERS else jnp.float32
        in_specs.append(resident(w.shape))
        in_specs.append(resident(b.shape))
        args.append(w.astype(w_dtype))
        args.append(b.astype(jnp.float32))

    out = pl.pallas_call(
        mlp_kernel,
        out_shape=jax.ShapeDtypeStruct((b_pad, 1), jnp.float32),
        grid=(nb,),
        in_specs=in_specs,
        # Last-dim-1 output block equals the full array dim (legal); at this
        # output size a lane-dense staging slab is not worth the extra bytes.
        out_specs=pl.BlockSpec((tb, 1), lambda i: (i, 0)),
        compiler_params=pltpu.CompilerParams(
            dimension_semantics=("parallel",),
        ),
    )(*args)
    return out[:B]


def init_params(key):
    """Deterministic init mirroring the PyTorch module's init scheme (f32 master)."""
    params = []
    n_layers = len(LAYER_DIMS) - 1
    for i in range(n_layers):
        fan_in, fan_out = LAYER_DIMS[i], LAYER_DIMS[i + 1]
        key, kw, kb = jax.random.split(key, 3)
        if i < n_layers - 1:
            # kaiming_uniform_(nonlinearity='relu'): bound = sqrt(6 / fan_in)
            bound_w = math.sqrt(6.0 / fan_in)
        else:
            # xavier_uniform_: bound = sqrt(6 / (fan_in + fan_out))
            bound_w = math.sqrt(6.0 / (fan_in + fan_out))
        # stored as (in, out) = transpose of PyTorch's (out, in) weight
        w = jax.random.uniform(kw, (fan_in, fan_out), jnp.float32,
                               minval=-bound_w, maxval=bound_w)
        # default nn.Linear bias init: U(-1/sqrt(fan_in), 1/sqrt(fan_in))
        bound_b = 1.0 / math.sqrt(fan_in)
        b = jax.random.uniform(kb, (1, fan_out), jnp.float32,
                               minval=-bound_b, maxval=bound_b)
        params.append((w, b))
    return params


def reference_forward(x, params):
    h = x
    n = len(params)
    for i, (w, b) in enumerate(params):
        h = h @ w + b
        if i < n - 1:
            h = jnp.maximum(h, 0.0)
    return jax.nn.softmax(h, axis=1)


if __name__ == "__main__":
    key = jax.random.PRNGKey(0)
    key, kx = jax.random.split(key)
    B = 8
    x = jax.random.normal(kx, (B, 2048), jnp.float32)
    params = init_params(key)

    y = mlp_forward(x, params)
    y = jax.block_until_ready(y)

    # NOTE: the module ends with Softmax(dim=1) over a width-1 feature dim, so
    # the true output is identically 1.0; the comparison below is exact even
    # with bf16 weights on the early layers.
    y_ref = reference_forward(x, params)
    assert y.shape == (B, 1), y.shape
    assert bool(jnp.allclose(y, y_ref, atol=1e-5, rtol=1e-5)), (y, y_ref)

    print("KERNEL_OK")
</pallas_src>

<mosaic_0001>
module attributes {stable_mosaic.version = 11 : i64} {
  func.func @mlp_kernel(%arg0: i32, %arg1: memref<8x2048xbf16, #tpu.memory_space<vmem>>, %arg2: memref<2048x512xbf16, #tpu.memory_space<vmem>>, %arg3: memref<1x512xf32, #tpu.memory_space<vmem>>, %arg4: memref<512x128xbf16, #tpu.memory_space<vmem>>, %arg5: memref<1x128xf32, #tpu.memory_space<vmem>>, %arg6: memref<128x32xbf16, #tpu.memory_space<vmem>>, %arg7: memref<1x32xf32, #tpu.memory_space<vmem>>, %arg8: memref<32x8xf32, #tpu.memory_space<vmem>>, %arg9: memref<1x8xf32, #tpu.memory_space<vmem>>, %arg10: memref<8x2xf32, #tpu.memory_space<vmem>>, %arg11: memref<1x2xf32, #tpu.memory_space<vmem>>, %arg12: memref<2x1xf32, #tpu.memory_space<vmem>>, %arg13: memref<1x1xf32, #tpu.memory_space<vmem>>, %arg14: memref<8x1xf32, #tpu.memory_space<vmem>>) attributes {dimension_semantics = [#tpu.dimension_semantics<parallel>], iteration_bounds = array<i64: 1>, scalar_prefetch = 0 : i64, scratch_operands = 0 : i64, tpu.core_type = #tpu.core_type<tc>, window_params = [{transform_indices = @transform_0, window_bounds = array<i64: 8, 2048>}, {pipeline_mode = #tpu.pipeline_mode<synchronous>, transform_indices = @transform_1, window_bounds = array<i64: 2048, 512>}, {pipeline_mode = #tpu.pipeline_mode<synchronous>, transform_indices = @transform_2, window_bounds = array<i64: 1, 512>}, {pipeline_mode = #tpu.pipeline_mode<synchronous>, transform_indices = @transform_3, window_bounds = array<i64: 512, 128>}, {pipeline_mode = #tpu.pipeline_mode<synchronous>, transform_indices = @transform_4, window_bounds = array<i64: 1, 128>}, {pipeline_mode = #tpu.pipeline_mode<synchronous>, transform_indices = @transform_5, window_bounds = array<i64: 128, 32>}, {pipeline_mode = #tpu.pipeline_mode<synchronous>, transform_indices = @transform_6, window_bounds = array<i64: 1, 32>}, {pipeline_mode = #tpu.pipeline_mode<synchronous>, transform_indices = @transform_7, window_bounds = array<i64: 32, 8>}, {pipeline_mode = #tpu.pipeline_mode<synchronous>, transform_indices = @transform_8, window_bounds = array<i64: 1, 8>}, {pipeline_mode = #tpu.pipeline_mode<synchronous>, transform_indices = @transform_9, window_bounds = array<i64: 8, 2>}, {pipeline_mode = #tpu.pipeline_mode<synchronous>, transform_indices = @transform_10, window_bounds = array<i64: 1, 2>}, {pipeline_mode = #tpu.pipeline_mode<synchronous>, transform_indices = @transform_11, window_bounds = array<i64: 2, 1>}, {pipeline_mode = #tpu.pipeline_mode<synchronous>, transform_indices = @transform_12, window_bounds = array<i64: 1, 1>}, {transform_indices = @transform_13, window_bounds = array<i64: 8, 1>}]} {
    %c0 = arith.constant 0 : index
    %c0_0 = arith.constant 0 : index
    %0 = vector.load %arg1[%c0, %c0_0] : memref<8x2048xbf16, #tpu.memory_space<vmem>>, vector<8x2048xbf16>
    %c0_1 = arith.constant 0 : index
    %c0_2 = arith.constant 0 : index
    %1 = vector.load %arg2[%c0_1, %c0_2] : memref<2048x512xbf16, #tpu.memory_space<vmem>>, vector<2048x512xbf16>
    %cst = arith.constant dense<0.000000e+00> : vector<8x512xf32>
    %2 = tpu.matmul %0, %1, %cst {dimension_numbers = #tpu.dot_dimension_numbers<[1], [0], [0], [1], [0, 0, 1, 1], [], []>} : vector<8x2048xbf16>, vector<2048x512xbf16>, vector<8x512xf32> -> vector<8x512xf32>
    %c0_3 = arith.constant 0 : index
    %c0_4 = arith.constant 0 : index
    %3 = vector.load %arg3[%c0_3, %c0_4] : memref<1x512xf32, #tpu.memory_space<vmem>>, vector<1x512xf32>
    %4 = vector.broadcast %3 : vector<1x512xf32> to vector<8x512xf32>
    %5 = arith.addf %2, %4 : vector<8x512xf32>
    %cst_5 = arith.constant 0.000000e+00 : f32
    %6 = vector.broadcast %cst_5 : f32 to vector<8x512xf32>
    %7 = arith.maximumf %5, %6 : vector<8x512xf32>
    %8 = arith.truncf %7 : vector<8x512xf32> to vector<8x512xbf16>
    %c0_6 = arith.constant 0 : index
    %c0_7 = arith.constant 0 : index
    %9 = vector.load %arg4[%c0_6, %c0_7] : memref<512x128xbf16, #tpu.memory_space<vmem>>, vector<512x128xbf16>
    %cst_8 = arith.constant dense<0.000000e+00> : vector<8x128xf32>
    %10 = tpu.matmul %8, %9, %cst_8 {dimension_numbers = #tpu.dot_dimension_numbers<[1], [0], [0], [1], [0, 0, 1, 1], [], []>} : vector<8x512xbf16>, vector<512x128xbf16>, vector<8x128xf32> -> vector<8x128xf32>
    %c0_9 = arith.constant 0 : index
    %c0_10 = arith.constant 0 : index
    %11 = vector.load %arg5[%c0_9, %c0_10] : memref<1x128xf32, #tpu.memory_space<vmem>>, vector<1x128xf32>
    %12 = vector.broadcast %11 : vector<1x128xf32> to vector<8x128xf32>
    %13 = arith.addf %10, %12 : vector<8x128xf32>
    %cst_11 = arith.constant 0.000000e+00 : f32
    %14 = vector.broadcast %cst_11 : f32 to vector<8x128xf32>
    %15 = arith.maximumf %13, %14 : vector<8x128xf32>
    %16 = arith.truncf %15 : vector<8x128xf32> to vector<8x128xbf16>
    %c0_12 = arith.constant 0 : index
    %c0_13 = arith.constant 0 : index
    %17 = vector.load %arg6[%c0_12, %c0_13] : memref<128x32xbf16, #tpu.memory_space<vmem>>, vector<128x32xbf16>
    %cst_14 = arith.constant dense<0.000000e+00> : vector<8x32xf32>
    %18 = tpu.matmul %16, %17, %cst_14 {dimension_numbers = #tpu.dot_dimension_numbers<[1], [0], [0], [1], [0, 0, 1, 1], [], []>} : vector<8x128xbf16>, vector<128x32xbf16>, vector<8x32xf32> -> vector<8x32xf32>
    %c0_15 = arith.constant 0 : index
    %c0_16 = arith.constant 0 : index
    %19 = vector.load %arg7[%c0_15, %c0_16] : memref<1x32xf32, #tpu.memory_space<vmem>>, vector<1x32xf32>
    %20 = vector.broadcast %19 : vector<1x32xf32> to vector<8x32xf32>
    %21 = arith.addf %18, %20 : vector<8x32xf32>
    %cst_17 = arith.constant 0.000000e+00 : f32
    %22 = vector.broadcast %cst_17 : f32 to vector<8x32xf32>
    %23 = arith.maximumf %21, %22 : vector<8x32xf32>
    %c0_18 = arith.constant 0 : index
    %c0_19 = arith.constant 0 : index
    %24 = vector.load %arg8[%c0_18, %c0_19] : memref<32x8xf32, #tpu.memory_space<vmem>>, vector<32x8xf32>
    %cst_20 = arith.constant dense<0.000000e+00> : vector<8x8xf32>
    %25 = tpu.matmul %23, %24, %cst_20 {dimension_numbers = #tpu.dot_dimension_numbers<[1], [0], [0], [1], [0, 0, 1, 1], [], []>} : vector<8x32xf32>, vector<32x8xf32>, vector<8x8xf32> -> vector<8x8xf32>
    %c0_21 = arith.constant 0 : index
    %c0_22 = arith.constant 0 : index
    %26 = vector.load %arg9[%c0_21, %c0_22] : memref<1x8xf32, #tpu.memory_space<vmem>>, vector<1x8xf32>
    %27 = vector.broadcast %26 : vector<1x8xf32> to vector<8x8xf32>
    %28 = arith.addf %25, %27 : vector<8x8xf32>
    %cst_23 = arith.constant 0.000000e+00 : f32
    %29 = vector.broadcast %cst_23 : f32 to vector<8x8xf32>
    %30 = arith.maximumf %28, %29 : vector<8x8xf32>
    %c0_24 = arith.constant 0 : index
    %c0_25 = arith.constant 0 : index
    %31 = vector.load %arg10[%c0_24, %c0_25] : memref<8x2xf32, #tpu.memory_space<vmem>>, vector<8x2xf32>
    %cst_26 = arith.constant dense<0.000000e+00> : vector<8x2xf32>
    %32 = tpu.matmul %30, %31, %cst_26 {dimension_numbers = #tpu.dot_dimension_numbers<[1], [0], [0], [1], [0, 0, 1, 1], [], []>} : vector<8x8xf32>, vector<8x2xf32>, vector<8x2xf32> -> vector<8x2xf32>
    %c0_27 = arith.constant 0 : index
    %c0_28 = arith.constant 0 : index
    %33 = vector.load %arg11[%c0_27, %c0_28] : memref<1x2xf32, #tpu.memory_space<vmem>>, vector<1x2xf32>
    %34 = vector.broadcast %33 : vector<1x2xf32> to vector<8x2xf32>
    %35 = arith.addf %32, %34 : vector<8x2xf32>
    %cst_29 = arith.constant 0.000000e+00 : f32
    %36 = vector.broadcast %cst_29 : f32 to vector<8x2xf32>
    %37 = arith.maximumf %35, %36 : vector<8x2xf32>
    %c0_30 = arith.constant 0 : index
    %c0_31 = arith.constant 0 : index
    %38 = vector.load %arg12[%c0_30, %c0_31] : memref<2x1xf32, #tpu.memory_space<vmem>>, vector<2x1xf32>
    %cst_32 = arith.constant dense<0.000000e+00> : vector<8x1xf32>
    %39 = tpu.matmul %37, %38, %cst_32 {dimension_numbers = #tpu.dot_dimension_numbers<[1], [0], [0], [1], [0, 0, 1, 1], [], []>} : vector<8x2xf32>, vector<2x1xf32>, vector<8x1xf32> -> vector<8x1xf32>
    %c0_33 = arith.constant 0 : index
    %c0_34 = arith.constant 0 : index
    %40 = vector.load %arg13[%c0_33, %c0_34] : memref<1x1xf32, #tpu.memory_space<vmem>>, vector<1x1xf32>
    %41 = vector.broadcast %40 : vector<1x1xf32> to vector<8x1xf32>
    %42 = arith.addf %39, %41 : vector<8x1xf32>
    %cst_35 = arith.constant dense<0xFF800000> : vector<8xf32>
    %43 = vector.multi_reduction <maximumf>, %42, %cst_35 [1] : vector<8x1xf32> to vector<8xf32>
    %44 = vector.shape_cast %43 : vector<8xf32> to vector<8x1xf32>
    %45 = arith.subf %42, %44 : vector<8x1xf32>
    %46 = math.exp %45 : vector<8x1xf32>
    %cst_36 = arith.constant dense<0.000000e+00> : vector<8xf32>
    %47 = vector.multi_reduction <add>, %46, %cst_36 [1] : vector<8x1xf32> to vector<8xf32>
    %48 = vector.shape_cast %47 : vector<8xf32> to vector<8x1xf32>
    %49 = arith.divf %46, %48 : vector<8x1xf32>
    %c0_37 = arith.constant 0 : index
    %c0_38 = arith.constant 0 : index
    %50 = vector.load %arg14[%c0_37, %c0_38] : memref<8x1xf32, #tpu.memory_space<vmem>>, vector<8x1xf32>
    tpu.vector_store %arg14[%c0_37, %c0_38], %49 {strides = array<i32>} : memref<8x1xf32, #tpu.memory_space<vmem>>, vector<8x1xf32>,
    return
  }
  func.func @transform_0(%arg0: i32) -> (i32, i32) {
    %c0_i32 = arith.constant 0 : i32
    %c0_i32_0 = arith.constant 0 : i32
    return %arg0, %c0_i32 : i32, i32
  }
  func.func @transform_1(%arg0: i32) -> (i32, i32) {
    %c0_i32 = arith.constant 0 : i32
    %c0_i32_0 = arith.constant 0 : i32
    %c0_i32_1 = arith.constant 0 : i32
    return %c0_i32, %c0_i32_0 : i32, i32
  }
  func.func @transform_2(%arg0: i32) -> (i32, i32) {
    %c0_i32 = arith.constant 0 : i32
    %c0_i32_0 = arith.constant 0 : i32
    %c0_i32_1 = arith.constant 0 : i32
    return %c0_i32, %c0_i32_0 : i32, i32
  }
  func.func @transform_3(%arg0: i32) -> (i32, i32) {
    %c0_i32 = arith.constant 0 : i32
    %c0_i32_0 = arith.constant 0 : i32
    %c0_i32_1 = arith.constant 0 : i32
    return %c0_i32, %c0_i32_0 : i32, i32
  }
  func.func @transform_4(%arg0: i32) -> (i32, i32) {
    %c0_i32 = arith.constant 0 : i32
    %c0_i32_0 = arith.constant 0 : i32
    %c0_i32_1 = arith.constant 0 : i32
    return %c0_i32, %c0_i32_0 : i32, i32
  }
  func.func @transform_5(%arg0: i32) -> (i32, i32) {
    %c0_i32 = arith.constant 0 : i32
    %c0_i32_0 = arith.constant 0 : i32
    %c0_i32_1 = arith.constant 0 : i32
    return %c0_i32, %c0_i32_0 : i32, i32
  }
  func.func @transform_6(%arg0: i32) -> (i32, i32) {
    %c0_i32 = arith.constant 0 : i32
    %c0_i32_0 = arith.constant 0 : i32
    %c0_i32_1 = arith.constant 0 : i32
    return %c0_i32, %c0_i32_0 : i32, i32
  }
  func.func @transform_7(%arg0: i32) -> (i32, i32) {
    %c0_i32 = arith.constant 0 : i32
    %c0_i32_0 = arith.constant 0 : i32
    %c0_i32_1 = arith.constant 0 : i32
    return %c0_i32, %c0_i32_0 : i32, i32
  }
  func.func @transform_8(%arg0: i32) -> (i32, i32) {
    %c0_i32 = arith.constant 0 : i32
    %c0_i32_0 = arith.constant 0 : i32
    %c0_i32_1 = arith.constant 0 : i32
    return %c0_i32, %c0_i32_0 : i32, i32
  }
  func.func @transform_9(%arg0: i32) -> (i32, i32) {
    %c0_i32 = arith.constant 0 : i32
    %c0_i32_0 = arith.constant 0 : i32
    %c0_i32_1 = arith.constant 0 : i32
    return %c0_i32, %c0_i32_0 : i32, i32
  }
  func.func @transform_10(%arg0: i32) -> (i32, i32) {
    %c0_i32 = arith.constant 0 : i32
    %c0_i32_0 = arith.constant 0 : i32
    %c0_i32_1 = arith.constant 0 : i32
    return %c0_i32, %c0_i32_0 : i32, i32
  }
  func.func @transform_11(%arg0: i32) -> (i32, i32) {
    %c0_i32 = arith.constant 0 : i32
    %c0_i32_0 = arith.constant 0 : i32
    %c0_i32_1 = arith.constant 0 : i32
    return %c0_i32, %c0_i32_0 : i32, i32
  }
  func.func @transform_12(%arg0: i32) -> (i32, i32) {
    %c0_i32 = arith.constant 0 : i32
    %c0_i32_0 = arith.constant 0 : i32
    %c0_i32_1 = arith.constant 0 : i32
    return %c0_i32, %c0_i32_0 : i32, i32
  }
  func.func @transform_13(%arg0: i32) -> (i32, i32) {
    %c0_i32 = arith.constant 0 : i32
    %c0_i32_0 = arith.constant 0 : i32
    return %arg0, %c0_i32 : i32, i32
  }
}

</mosaic_0001>

<llo_original>
// kernel: tpu_custom_call.1
$region0: #{tpu_custom_call.1}
  #allocation0 [shape = 'u32[]', space=smem, size = 0x4, offset = 0x4, fixed_abs, tag = 'smem constant byte address 0x4 - core index']
  #allocation1 [shape = 'u32[144,128]{1,0:T(1,128)}', space=vmem, size = 0x12000, scoped, tag = 'internal scratch']
  #allocation2 [shape = 'f32[1,1]{1,0:T(1,128)S(1)}', space=vmem, size = 0x200, scoped, tag = 'scoped memory for tpu_custom_call.1']
  %s0 = inlined_call_operand.hbm [shape: bf16[8,2048], index: 0, kind: input, shape index: {}]
  %s1 = inlined_call_operand.hbm [shape: bf16[2048,512], index: 1, kind: input, shape index: {}]
  %s2 = inlined_call_operand.hbm [shape: f32[1,512], index: 2, kind: input, shape index: {}]
  %s3 = inlined_call_operand.hbm [shape: bf16[512,128], index: 3, kind: input, shape index: {}]
  %s4 = inlined_call_operand.hbm [shape: f32[1,128], index: 4, kind: input, shape index: {}]
  %s5 = inlined_call_operand.vmem [shape: bf16[128,32], index: 5, kind: input, shape index: {}]
  %s6 = inlined_call_operand.hbm [shape: f32[1,32], index: 6, kind: input, shape index: {}]
  %s7 = inlined_call_operand.vmem [shape: f32[32,8], index: 7, kind: input, shape index: {}]
  %s8 = inlined_call_operand.hbm [shape: f32[1,8], index: 8, kind: input, shape index: {}]
  %s9 = inlined_call_operand.vmem [shape: f32[8,2], index: 9, kind: input, shape index: {}]
  %s10 = inlined_call_operand.hbm [shape: f32[1,2], index: 10, kind: input, shape index: {}]
  %s11 = inlined_call_operand.vmem [shape: f32[2,1], index: 11, kind: input, shape index: {}]
  %s12 = inlined_call_operand.<no memory space> [shape: f32[1,1], index: 12, kind: input, shape index: {}]
  %s13 = inlined_call_operand.vmem [shape: f32[8,1], index: 13, kind: output, shape index: {}]
  %s14 = sld [smem:[#allocation0]]
  $region94: #{tpu_custom_call.1} parent=0
    _
  %s16 = ssub.s32 1, %s14
  %s17 = scalar_select 0, %s16, %s14
  %v18 = vstv %s12
  %19 = vst [vmem:[#allocation2] sm:$0x1] %v18
  $region1: #{tpu_custom_call.1} parent=0
    #allocation3 [shape = 'u8[32768]{0}', space=vmem, size = 0x8000, scoped, tag = 'input window, operand 0, single buffered']
    #allocation4 [shape = 's32[1]{0}', space=sflag, size = 0x4, scoped, tag = 'scoped memory for tpu_custom_call.1']
    #allocation5 [shape = 'u8[2097152]{0}', space=vmem, size = 0x200000, scoped, tag = 'input window, operand 1, single buffered']
    #allocation6 [shape = 's32[1]{0}', space=sflag, size = 0x4, scoped, tag = 'scoped memory for tpu_custom_call.1']
    #allocation7 [shape = 'u8[2048]{0}', space=vmem, size = 0x800, scoped, tag = 'input window, operand 2, single buffered']
    #allocation8 [shape = 'u8[131072]{0}', space=vmem, size = 0x20000, scoped, tag = 'input window, operand 3, single buffered']
    #allocation9 [shape = 's32[1]{0}', space=sflag, size = 0x4, scoped, tag = 'scoped memory for tpu_custom_call.1']
    #allocation10 [shape = 'u8[512]{0}', space=vmem, size = 0x400, scoped, tag = 'input window, operand 4, single buffered']
    #allocation11 [shape = 'u8[512]{0}', space=vmem, size = 0x400, scoped, tag = 'input window, operand 6, single buffered']
    #allocation12 [shape = 's32[1]{0}', space=sflag, size = 0x4, scoped, tag = 'scoped memory for tpu_custom_call.1']
    #allocation13 [shape = 'u8[512]{0}', space=vmem, size = 0x400, scoped, tag = 'input window, operand 8, single buffered']
    #allocation14 [shape = 'u8[512]{0}', space=vmem, size = 0x400, scoped, tag = 'input window, operand 10, single buffered']
    #allocation15 [shape = 's32[1]{0}', space=sflag, size = 0x4, scoped, tag = 'scoped memory for tpu_custom_call.1']
    %20 = vsyncpa [#allocation4], 0
    %21 = vsyncpa [#allocation6], 0
    %22 = vsyncpa [#allocation9], 0
    %23 = vsyncpa [#allocation12], 0
    %24 = vsyncpa [#allocation15], 0
    // Predicated region
    $region2: #{tpu_custom_call.1} parent=1 // pred_check
      _
    $region3: #{tpu_custom_call.1} parent=1 // pred_check_branch
      %26 = sbr.rel (0) target = $region5
    $region4: #{tpu_custom_call.1} parent=1 // pred_region
      %s28 = ssub.s32 1024, 1024
      %29 = vsyncadd [#allocation4], %s28
      %s31 = sshll.u32 [#allocation3], 4
      %s32 = int_to_ptr.vmem [resolvable:$true] %s31
      %34 = dma.hbm_to_vmem [thread:$0]  %s0, 1024, %s32, [#allocation4]
    $region5: #{tpu_custom_call.1} parent=1 // pred_fallthru
      _
    // Predicated region
    $region6: #{tpu_custom_call.1} parent=1 // pred_check
      _
    $region7: #{tpu_custom_call.1} parent=1 // pred_check_branch
      %36 = sbr.rel (0) target = $region9
    $region8: #{tpu_custom_call.1} parent=1 // pred_region
      %s38 = ssub.s32 65536, 65536
      %39 = vsyncadd [#allocation6], %s38
      %s40 = sshll.u32 [#allocation5], 4
      %s41 = int_to_ptr.vmem [resolvable:$true] %s40
      %46 = dma.hbm_to_vmem [thread:$0]  %s1, 65536, %s41, [#allocation6], 256, 256, 16
    $region9: #{tpu_custom_call.1} parent=1 // pred_fallthru
      _
    // Predicated region
    $region10: #{tpu_custom_call.1} parent=1 // pred_check
      _
    $region11: #{tpu_custom_call.1} parent=1 // pred_check_branch
      %48 = sbr.rel (0) target = $region13
    $region12: #{tpu_custom_call.1} parent=1 // pred_region
      %s50 = ssub.s32 64, 64
      %51 = vsyncadd [#allocation6], %s50
      %s53 = sshll.u32 [#allocation7], 4
      %s54 = int_to_ptr.vmem [resolvable:$true] %s53
      %56 = dma.hbm_to_vmem [thread:$0]  %s2, 64, %s54, [#allocation6]
    $region13: #{tpu_custom_call.1} parent=1 // pred_fallthru
      _
    // Predicated region
    $region14: #{tpu_custom_call.1} parent=1 // pred_check
      _
    $region15: #{tpu_custom_call.1} parent=1 // pred_check_branch
      %58 = sbr.rel (0) target = $region17
    $region16: #{tpu_custom_call.1} parent=1 // pred_region
      %s60 = ssub.s32 4096, 4096
      %61 = vsyncadd [#allocation9], %s60
      %s62 = sshll.u32 [#allocation8], 4
      %s63 = int_to_ptr.vmem [resolvable:$true] %s62
      %68 = dma.hbm_to_vmem [thread:$0]  %s3, 4096, %s63, [#allocation9], 64, 64, 4
    $region17: #{tpu_custom_call.1} parent=1 // pred_fallthru
      _
    // Predicated region
    $region18: #{tpu_custom_call.1} parent=1 // pred_check
      _
    $region19: #{tpu_custom_call.1} parent=1 // pred_check_branch
      %70 = sbr.rel (0) target = $region21
    $region20: #{tpu_custom_call.1} parent=1 // pred_region
      %s72 = ssub.s32 16, 16
      %73 = vsyncadd [#allocation9], %s72
      %s75 = sshll.u32 [#allocation10], 4
      %s76 = int_to_ptr.vmem [resolvable:$true] %s75
      %78 = dma.hbm_to_vmem [thread:$0]  %s4, 16, %s76, [#allocation9]
    $region21: #{tpu_custom_call.1} parent=1 // pred_fallthru
      _
    // Predicated region
    $region22: #{tpu_custom_call.1} parent=1 // pred_check
      _
    $region23: #{tpu_custom_call.1} parent=1 // pred_check_branch
      %80 = sbr.rel (0) target = $region25
    $region24: #{tpu_custom_call.1} parent=1 // pred_region
      _
    $region25: #{tpu_custom_call.1} parent=1 // pred_fallthru
      _
    // Predicated region
    $region26: #{tpu_custom_call.1} parent=1 // pred_check
      _
    $region27: #{tpu_custom_call.1} parent=1 // pred_check_branch
      %82 = sbr.rel (0) target = $region29
    $region28: #{tpu_custom_call.1} parent=1 // pred_region
      %s84 = ssub.s32 16, 16
      %85 = vsyncadd [#allocation12], %s84
      %s87 = sshll.u32 [#allocation11], 4
      %s88 = int_to_ptr.vmem [resolvable:$true] %s87
      %90 = dma.hbm_to_vmem [thread:$0]  %s6, 16, %s88, [#allocation12]
    $region29: #{tpu_custom_call.1} parent=1 // pred_fallthru
      _
    // Predicated region
    $region30: #{tpu_custom_call.1} parent=1 // pred_check
      _
    $region31: #{tpu_custom_call.1} parent=1 // pred_check_branch
      %92 = sbr.rel (0) target = $region33
    $region32: #{tpu_custom_call.1} parent=1 // pred_region
      _
    $region33: #{tpu_custom_call.1} parent=1 // pred_fallthru
      _
    // Predicated region
    $region34: #{tpu_custom_call.1} parent=1 // pred_check
      _
    $region35: #{tpu_custom_call.1} parent=1 // pred_check_branch
      %94 = sbr.rel (0) target = $region37
    $region36: #{tpu_custom_call.1} parent=1 // pred_region
      %s96 = ssub.s32 16, 16
      %97 = vsyncadd [#allocation12], %s96
      %s99 = sshll.u32 [#allocation13], 4
      %s100 = int_to_ptr.vmem [resolvable:$true] %s99
      %102 = dma.hbm_to_vmem [thread:$0]  %s8, 16, %s100, [#allocation12]
    $region37: #{tpu_custom_call.1} parent=1 // pred_fallthru
      _
    // Predicated region
    $region38: #{tpu_custom_call.1} parent=1 // pred_check
      _
    $region39: #{tpu_custom_call.1} parent=1 // pred_check_branch
      %104 = sbr.rel (0) target = $region41
    $region40: #{tpu_custom_call.1} parent=1 // pred_region
      _
    $region41: #{tpu_custom_call.1} parent=1 // pred_fallthru
      _
    // Predicated region
    $region42: #{tpu_custom_call.1} parent=1 // pred_check
      _
    $region43: #{tpu_custom_call.1} parent=1 // pred_check_branch
      %106 = sbr.rel (0) target = $region45
    $region44: #{tpu_custom_call.1} parent=1 // pred_region
      %s108 = ssub.s32 16, 16
      %109 = vsyncadd [#allocation15], %s108
      %s111 = sshll.u32 [#allocation14], 4
      %s112 = int_to_ptr.vmem [resolvable:$true] %s111
      %114 = dma.hbm_to_vmem [thread:$0]  %s10, 16, %s112, [#allocation15]
    $region45: #{tpu_custom_call.1} parent=1 // pred_fallthru
      _
    // Predicated region
    $region46: #{tpu_custom_call.1} parent=1 // pred_check
      _
    $region47: #{tpu_custom_call.1} parent=1 // pred_check_branch
      %116 = sbr.rel (0) target = $region49
    $region48: #{tpu_custom_call.1} parent=1 // pred_region
      _
    $region49: #{tpu_custom_call.1} parent=1 // pred_fallthru
      _
    // Predicated region
    $region50: #{tpu_custom_call.1} parent=1 // pred_check
      _
    $region51: #{tpu_custom_call.1} parent=1 // pred_check_branch
      %118 = sbr.rel (0) target = $region53
    $region52: #{tpu_custom_call.1} parent=1 // pred_region
      _
    $region53: #{tpu_custom_call.1} parent=1 // pred_fallthru
      _
    // Predicated region
    $region54: #{tpu_custom_call.1} parent=1 // pred_check
      _
    $region55: #{tpu_custom_call.1} parent=1 // pred_check_branch
      %120 = sbr.rel (0) target = $region57
    $region56: #{tpu_custom_call.1} parent=1 // pred_region
      %121 = dma.done [#allocation4], 1024
    $region57: #{tpu_custom_call.1} parent=1 // pred_fallthru
      _
    // Predicated region
    $region58: #{tpu_custom_call.1} parent=1 // pred_check
      _
    $region59: #{tpu_custom_call.1} parent=1 // pred_check_branch
      %123 = sbr.rel (0) target = $region61
    $region60: #{tpu_custom_call.1} parent=1 // pred_region
      %124 = dma.done [#allocation6], 65536
    $region61: #{tpu_custom_call.1} parent=1 // pred_fallthru
      _
    // Predicated region
    $region62: #{tpu_custom_call.1} parent=1 // pred_check
      _
    $region63: #{tpu_custom_call.1} parent=1 // pred_check_branch
      %126 = sbr.rel (0) target = $region65
    $region64: #{tpu_custom_call.1} parent=1 // pred_region
      %127 = dma.done [#allocation6], 64
    $region65: #{tpu_custom_call.1} parent=1 // pred_fallthru
      _
    // Predicated region
    $region66: #{tpu_custom_call.1} parent=1 // pred_check
      _
    $region67: #{tpu_custom_call.1} parent=1 // pred_check_branch
      %129 = sbr.rel (0) target = $region69
    $region68: #{tpu_custom_call.1} parent=1 // pred_region
      %130 = dma.done [#allocation9], 4096
    $region69: #{tpu_custom_call.1} parent=1 // pred_fallthru
      _
    // Predicated region
    $region70: #{tpu_custom_call.1} parent=1 // pred_check
      _
    $region71: #{tpu_custom_call.1} parent=1 // pred_check_branch
      %132 = sbr.rel (0) target = $region73
    $region72: #{tpu_custom_call.1} parent=1 // pred_region
      %133 = dma.done [#allocation9], 16
    $region73: #{tpu_custom_call.1} parent=1 // pred_fallthru
      _
    // Predicated region
    $region74: #{tpu_custom_call.1} parent=1 // pred_check
      _
    $region75: #{tpu_custom_call.1} parent=1 // pred_check_branch
      %135 = sbr.rel (0) target = $region77
    $region76: #{tpu_custom_call.1} parent=1 // pred_region
      %136 = dma.done [#allocation12], 16
    $region77: #{tpu_custom_call.1} parent=1 // pred_fallthru
      _
    // Predicated region
    $region78: #{tpu_custom_call.1} parent=1 // pred_check
      _
    $region79: #{tpu_custom_call.1} parent=1 // pred_check_branch
      %138 = sbr.rel (0) target = $region81
    $region80: #{tpu_custom_call.1} parent=1 // pred_region
      %139 = dma.done [#allocation12], 16
    $region81: #{tpu_custom_call.1} parent=1 // pred_fallthru
      _
    // Predicated region
    $region82: #{tpu_custom_call.1} parent=1 // pred_check
      _
    $region83: #{tpu_custom_call.1} parent=1 // pred_check_branch
      %141 = sbr.rel (0) target = $region85
    $region84: #{tpu_custom_call.1} parent=1 // pred_region
      %142 = dma.done [#allocation15], 16
    $region85: #{tpu_custom_call.1} parent=1 // pred_fallthru
      _
    %v144 = vld [vmem:[#allocation3] sm:$0xff]
    %v145 = vld [vmem:[#allocation3 + $0x8] sm:$0xff]
    %v146 = vld [vmem:[#allocation3 + $0x10] sm:$0xff]
    %v147 = vld [vmem:[#allocation3 + $0x18] sm:$0xff]
    %v148 = vld [vmem:[#allocation3 + $0x20] sm:$0xff]
    %v149 = vld [vmem:[#allocation3 + $0x28] sm:$0xff]
    %v150 = vld [vmem:[#allocation3 + $0x30] sm:$0xff]
    %v151 = vld [vmem:[#allocation3 + $0x38] sm:$0xff]
    %v152 = vld [vmem:[#allocation5] sm:$0xff]
    %v153 = vld [vmem:[#allocation5 + $0x8] sm:$0xff]
    %v154 = vld [vmem:[#allocation5 + $0x10] sm:$0xff]
    %v155 = vld [vmem:[#allocation5 + $0x18] sm:$0xff]
    %v156 = vld [vmem:[#allocation5 + $0x20] sm:$0xff]
    %v157 = vld [vmem:[#allocation5 + $0x28] sm:$0xff]
    %v158 = vld [vmem:[#allocation5 + $0x30] sm:$0xff]
    %v159 = vld [vmem:[#allocation5 + $0x38] sm:$0xff]
    %v160 = vld [vmem:[#allocation5 + $0x40] sm:$0xff]
    %v161 = vld [vmem:[#allocation5 + $0x48] sm:$0xff]
    %v162 = vld [vmem:[#allocation5 + $0x50] sm:$0xff]
    %v163 = vld [vmem:[#allocation5 + $0x58] sm:$0xff]
    %v164 = vld [vmem:[#allocation5 + $0x60] sm:$0xff]
    %v165 = vld [vmem:[#allocation5 + $0x68] sm:$0xff]
    %v166 = vld [vmem:[#allocation5 + $0x70] sm:$0xff]
    %v167 = vld [vmem:[#allocation5 + $0x78] sm:$0xff]
    %v168 = vld [vmem:[#allocation5 + $0x80] sm:$0xff]
    %v169 = vld [vmem:[#allocation5 + $0x88] sm:$0xff]
    %v170 = vld [vmem:[#allocation5 + $0x90] sm:$0xff]
    %v171 = vld [vmem:[#allocation5 + $0x98] sm:$0xff]
    %v172 = vld [vmem:[#allocation5 + $0xa0] sm:$0xff]
    %v173 = vld [vmem:[#allocation5 + $0xa8] sm:$0xff]
    %v174 = vld [vmem:[#allocation5 + $0xb0] sm:$0xff]
    %v175 = vld [vmem:[#allocation5 + $0xb8] sm:$0xff]
    %v176 = vld [vmem:[#allocation5 + $0xc0] sm:$0xff]
    %v177 = vld [vmem:[#allocation5 + $0xc8] sm:$0xff]
    %v178 = vld [vmem:[#allocation5 + $0xd0] sm:$0xff]
    %v179 = vld [vmem:[#allocation5 + $0xd8] sm:$0xff]
    %v180 = vld [vmem:[#allocation5 + $0xe0] sm:$0xff]
    %v181 = vld [vmem:[#allocation5 + $0xe8] sm:$0xff]
    %v182 = vld [vmem:[#allocation5 + $0xf0] sm:$0xff]
    %v183 = vld [vmem:[#allocation5 + $0xf8] sm:$0xff]
    %v184 = vld [vmem:[#allocation5 + $0x100] sm:$0xff]
    %v185 = vld [vmem:[#allocation5 + $0x108] sm:$0xff]
    %v186 = vld [vmem:[#allocation5 + $0x110] sm:$0xff]
    %v187 = vld [vmem:[#allocation5 + $0x118] sm:$0xff]
    %v188 = vld [vmem:[#allocation5 + $0x120] sm:$0xff]
    %v189 = vld [vmem:[#allocation5 + $0x128] sm:$0xff]
    %v190 = vld [vmem:[#allocation5 + $0x130] sm:$0xff]
    %v191 = vld [vmem:[#allocation5 + $0x138] sm:$0xff]
    %v192 = vld [vmem:[#allocation5 + $0x140] sm:$0xff]
    %v193 = vld [vmem:[#allocation5 + $0x148] sm:$0xff]
    %v194 = vld [vmem:[#allocation5 + $0x150] sm:$0xff]
    %v195 = vld [vmem:[#allocation5 + $0x158] sm:$0xff]
    %v196 = vld [vmem:[#allocation5 + $0x160] sm:$0xff]
    %v197 = vld [vmem:[#allocation5 + $0x168] sm:$0xff]
    %v198 = vld [vmem:[#allocation5 + $0x170] sm:$0xff]
    %v199 = vld [vmem:[#allocation5 + $0x178] sm:$0xff]
    %v200 = vld [vmem:[#allocation5 + $0x180] sm:$0xff]
    %v201 = vld [vmem:[#allocation5 + $0x188] sm:$0xff]
    %v202 = vld [vmem:[#allocation5 + $0x190] sm:$0xff]
    %v203 = vld [vmem:[#allocation5 + $0x198] sm:$0xff]
    %v204 = vld [vmem:[#allocation5 + $0x1a0] sm:$0xff]
    %v205 = vld [vmem:[#allocation5 + $0x1a8] sm:$0xff]
    %v206 = vld [vmem:[#allocation5 + $0x1b0] sm:$0xff]
    %v207 = vld [vmem:[#allocation5 + $0x1b8] sm:$0xff]
    %v208 = vld [vmem:[#allocation5 + $0x1c0] sm:$0xff]
    %v209 = vld [vmem:[#allocation5 + $0x1c8] sm:$0xff]
    %v210 = vld [vmem:[#allocation5 + $0x1d0] sm:$0xff]
    %v211 = vld [vmem:[#allocation5 + $0x1d8] sm:$0xff]
    %v212 = vld [vmem:[#allocation5 + $0x1e0] sm:$0xff]
    %v213 = vld [vmem:[#allocation5 + $0x1e8] sm:$0xff]
    %v214 = vld [vmem:[#allocation5 + $0x1f0] sm:$0xff]
    %v215 = vld [vmem:[#allocation5 + $0x1f8] sm:$0xff]
    %v216 = vld [vmem:[#allocation5 + $0x200] sm:$0xff]
    %v217 = vld [vmem:[#allocation5 + $0x208] sm:$0xff]
    %v218 = vld [vmem:[#allocation5 + $0x210] sm:$0xff]
    %v219 = vld [vmem:[#allocation5 + $0x218] sm:$0xff]
    %v220 = vld [vmem:[#allocation5 + $0x220] sm:$0xff]
    %v221 = vld [vmem:[#allocation5 + $0x228] sm:$0xff]
    %v222 = vld [vmem:[#allocation5 + $0x230] sm:$0xff]
    %v223 = vld [vmem:[#allocation5 + $0x238] sm:$0xff]
    %v224 = vld [vmem:[#allocation5 + $0x240] sm:$0xff]
    %v225 = vld [vmem:[#allocation5 + $0x248] sm:$0xff]
    %v226 = vld [vmem:[#allocation5 + $0x250] sm:$0xff]
    %v227 = vld [vmem:[#allocation5 + $0x258] sm:$0xff]
    %v228 = vld [vmem:[#allocation5 + $0x260] sm:$0xff]
    %v229 = vld [vmem:[#allocation5 + $0x268] sm:$0xff]
    %v230 = vld [vmem:[#allocation5 + $0x270] sm:$0xff]
    %v231 = vld [vmem:[#allocation5 + $0x278] sm:$0xff]
    %v232 = vld [vmem:[#allocation5 + $0x280] sm:$0xff]
    %v233 = vld [vmem:[#allocation5 + $0x288] sm:$0xff]
    %v234 = vld [vmem:[#allocation5 + $0x290] sm:$0xff]
    %v235 = vld [vmem:[#allocation5 + $0x298] sm:$0xff]
    %v236 = vld [vmem:[#allocation5 + $0x2a0] sm:$0xff]
    %v237 = vld [vmem:[#allocation5 + $0x2a8] sm:$0xff]
    %v238 = vld [vmem:[#allocation5 + $0x2b0] sm:$0xff]
    %v239 = vld [vmem:[#allocation5 + $0x2b8] sm:$0xff]
    %v240 = vld [vmem:[#allocation5 + $0x2c0] sm:$0xff]
    %v241 = vld [vmem:[#allocation5 + $0x2c8] sm:$0xff]
    %v242 = vld [vmem:[#allocation5 + $0x2d0] sm:$0xff]
    %v243 = vld [vmem:[#allocation5 + $0x2d8] sm:$0xff]
    %v244 = vld [vmem:[#allocation5 + $0x2e0] sm:$0xff]
    %v245 = vld [vmem:[#allocation5 + $0x2e8] sm:$0xff]
    %v246 = vld [vmem:[#allocation5 + $0x2f0] sm:$0xff]
    %v247 = vld [vmem:[#allocation5 + $0x2f8] sm:$0xff]
    %v248 = vld [vmem:[#allocation5 + $0x300] sm:$0xff]
    %v249 = vld [vmem:[#allocation5 + $0x308] sm:$0xff]
    %v250 = vld [vmem:[#allocation5 + $0x310] sm:$0xff]
    %v251 = vld [vmem:[#allocation5 + $0x318] sm:$0xff]
    %v252 = vld [vmem:[#allocation5 + $0x320] sm:$0xff]
    %v253 = vld [vmem:[#allocation5 + $0x328] sm:$0xff]
    %v254 = vld [vmem:[#allocation5 + $0x330] sm:$0xff]
    %v255 = vld [vmem:[#allocation5 + $0x338] sm:$0xff]
    %v256 = vld [vmem:[#allocation5 + $0x340] sm:$0xff]
    %v257 = vld [vmem:[#allocation5 + $0x348] sm:$0xff]
    %v258 = vld [vmem:[#allocation5 + $0x350] sm:$0xff]
    %v259 = vld [vmem:[#allocation5 + $0x358] sm:$0xff]
    %v260 = vld [vmem:[#allocation5 + $0x360] sm:$0xff]
    %v261 = vld [vmem:[#allocation5 + $0x368] sm:$0xff]
    %v262 = vld [vmem:[#allocation5 + $0x370] sm:$0xff]
    %v263 = vld [vmem:[#allocation5 + $0x378] sm:$0xff]
    %v264 = vld [vmem:[#allocation5 + $0x380] sm:$0xff]
    %v265 = vld [vmem:[#allocation5 + $0x388] sm:$0xff]
    %v266 = vld [vmem:[#allocation5 + $0x390] sm:$0xff]
    %v267 = vld [vmem:[#allocation5 + $0x398] sm:$0xff]
    %v268 = vld [vmem:[#allocation5 + $0x3a0] sm:$0xff]
    %v269 = vld [vmem:[#allocation5 + $0x3a8] sm:$0xff]
    %v270 = vld [vmem:[#allocation5 + $0x3b0] sm:$0xff]
    %v271 = vld [vmem:[#allocation5 + $0x3b8] sm:$0xff]
    %v272 = vld [vmem:[#allocation5 + $0x3c0] sm:$0xff]
    %v273 = vld [vmem:[#allocation5 + $0x3c8] sm:$0xff]
    %v274 = vld [vmem:[#allocation5 + $0x3d0] sm:$0xff]
    %v275 = vld [vmem:[#allocation5 + $0x3d8] sm:$0xff]
    %v276 = vld [vmem:[#allocation5 + $0x3e0] sm:$0xff]
    %v277 = vld [vmem:[#allocation5 + $0x3e8] sm:$0xff]
    %v278 = vld [vmem:[#allocation5 + $0x3f0] sm:$0xff]
    %v279 = vld [vmem:[#allocation5 + $0x3f8] sm:$0xff]
    %v280 = vld [vmem:[#allocation5 + $0x400] sm:$0xff]
    %v281 = vld [vmem:[#allocation5 + $0x408] sm:$0xff]
    %v282 = vld [vmem:[#allocation5 + $0x410] sm:$0xff]
    %v283 = vld [vmem:[#allocation5 + $0x418] sm:$0xff]
    %v284 = vld [vmem:[#allocation5 + $0x420] sm:$0xff]
    %v285 = vld [vmem:[#allocation5 + $0x428] sm:$0xff]
    %v286 = vld [vmem:[#allocation5 + $0x430] sm:$0xff]
    %v287 = vld [vmem:[#allocation5 + $0x438] sm:$0xff]
    %v288 = vld [vmem:[#allocation5 + $0x440] sm:$0xff]
    %v289 = vld [vmem:[#allocation5 + $0x448] sm:$0xff]
    %v290 = vld [vmem:[#allocation5 + $0x450] sm:$0xff]
    %v291 = vld [vmem:[#allocation5 + $0x458] sm:$0xff]
    %v292 = vld [vmem:[#allocation5 + $0x460] sm:$0xff]
    %v293 = vld [vmem:[#allocation5 + $0x468] sm:$0xff]
    %v294 = vld [vmem:[#allocation5 + $0x470] sm:$0xff]
    %v295 = vld [vmem:[#allocation5 + $0x478] sm:$0xff]
    %v296 = vld [vmem:[#allocation5 + $0x480] sm:$0xff]
    %v297 = vld [vmem:[#allocation5 + $0x488] sm:$0xff]
    %v298 = vld [vmem:[#allocation5 + $0x490] sm:$0xff]
    %v299 = vld [vmem:[#allocation5 + $0x498] sm:$0xff]
    %v300 = vld [vmem:[#allocation5 + $0x4a0] sm:$0xff]
    %v301 = vld [vmem:[#allocation5 + $0x4a8] sm:$0xff]
    %v302 = vld [vmem:[#allocation5 + $0x4b0] sm:$0xff]
    %v303 = vld [vmem:[#allocation5 + $0x4b8] sm:$0xff]
    %v304 = vld [vmem:[#allocation5 + $0x4c0] sm:$0xff]
    %v305 = vld [vmem:[#allocation5 + $0x4c8] sm:$0xff]
    %v306 = vld [vmem:[#allocation5 + $0x4d0] sm:$0xff]
    %v307 = vld [vmem:[#allocation5 + $0x4d8] sm:$0xff]
    %v308 = vld [vmem:[#allocation5 + $0x4e0] sm:$0xff]
    %v309 = vld [vmem:[#allocation5 + $0x4e8] sm:$0xff]
    %v310 = vld [vmem:[#allocation5 + $0x4f0] sm:$0xff]
    %v311 = vld [vmem:[#allocation5 + $0x4f8] sm:$0xff]
    %v312 = vld [vmem:[#allocation5 + $0x500] sm:$0xff]
    %v313 = vld [vmem:[#allocation5 + $0x508] sm:$0xff]
    %v314 = vld [vmem:[#allocation5 + $0x510] sm:$0xff]
    %v315 = vld [vmem:[#allocation5 + $0x518] sm:$0xff]
    %v316 = vld [vmem:[#allocation5 + $0x520] sm:$0xff]
    %v317 = vld [vmem:[#allocation5 + $0x528] sm:$0xff]
    %v318 = vld [vmem:[#allocation5 + $0x530] sm:$0xff]
    %v319 = vld [vmem:[#allocation5 + $0x538] sm:$0xff]
    %v320 = vld [vmem:[#allocation5 + $0x540] sm:$0xff]
    %v321 = vld [vmem:[#allocation5 + $0x548] sm:$0xff]
    %v322 = vld [vmem:[#allocation5 + $0x550] sm:$0xff]
    %v323 = vld [vmem:[#allocation5 + $0x558] sm:$0xff]
    %v324 = vld [vmem:[#allocation5 + $0x560] sm:$0xff]
    %v325 = vld [vmem:[#allocation5 + $0x568] sm:$0xff]
    %v326 = vld [vmem:[#allocation5 + $0x570] sm:$0xff]
    %v327 = vld [vmem:[#allocation5 + $0x578] sm:$0xff]
    %v328 = vld [vmem:[#allocation5 + $0x580] sm:$0xff]
    %v329 = vld [vmem:[#allocation5 + $0x588] sm:$0xff]
    %v330 = vld [vmem:[#allocation5 + $0x590] sm:$0xff]
    %v331 = vld [vmem:[#allocation5 + $0x598] sm:$0xff]
    %v332 = vld [vmem:[#allocation5 + $0x5a0] sm:$0xff]
    %v333 = vld [vmem:[#allocation5 + $0x5a8] sm:$0xff]
    %v334 = vld [vmem:[#allocation5 + $0x5b0] sm:$0xff]
    %v335 = vld [vmem:[#allocation5 + $0x5b8] sm:$0xff]
    %v336 = vld [vmem:[#allocation5 + $0x5c0] sm:$0xff]
    %v337 = vld [vmem:[#allocation5 + $0x5c8] sm:$0xff]
    %v338 = vld [vmem:[#allocation5 + $0x5d0] sm:$0xff]
    %v339 = vld [vmem:[#allocation5 + $0x5d8] sm:$0xff]
    %v340 = vld [vmem:[#allocation5 + $0x5e0] sm:$0xff]
    %v341 = vld [vmem:[#allocation5 + $0x5e8] sm:$0xff]
    %v342 = vld [vmem:[#allocation5 + $0x5f0] sm:$0xff]
    %v343 = vld [vmem:[#allocation5 + $0x5f8] sm:$0xff]
    %v344 = vld [vmem:[#allocation5 + $0x600] sm:$0xff]
    %v345 = vld [vmem:[#allocation5 + $0x608] sm:$0xff]
    %v346 = vld [vmem:[#allocation5 + $0x610] sm:$0xff]
    %v347 = vld [vmem:[#allocation5 + $0x618] sm:$0xff]
    %v348 = vld [vmem:[#allocation5 + $0x620] sm:$0xff]
    %v349 = vld [vmem:[#allocation5 + $0x628] sm:$0xff]
    %v350 = vld [vmem:[#allocation5 + $0x630] sm:$0xff]
    %v351 = vld [vmem:[#allocation5 + $0x638] sm:$0xff]
    %v352 = vld [vmem:[#allocation5 + $0x640] sm:$0xff]
    %v353 = vld [vmem:[#allocation5 + $0x648] sm:$0xff]
    %v354 = vld [vmem:[#allocation5 + $0x650] sm:$0xff]
    %v355 = vld [vmem:[#allocation5 + $0x658] sm:$0xff]
    %v356 = vld [vmem:[#allocation5 + $0x660] sm:$0xff]
    %v357 = vld [vmem:[#allocation5 + $0x668] sm:$0xff]
    %v358 = vld [vmem:[#allocation5 + $0x670] sm:$0xff]
    %v359 = vld [vmem:[#allocation5 + $0x678] sm:$0xff]
    %v360 = vld [vmem:[#allocation5 + $0x680] sm:$0xff]
    %v361 = vld [vmem:[#allocation5 + $0x688] sm:$0xff]
    %v362 = vld [vmem:[#allocation5 + $0x690] sm:$0xff]
    %v363 = vld [vmem:[#allocation5 + $0x698] sm:$0xff]
    %v364 = vld [vmem:[#allocation5 + $0x6a0] sm:$0xff]
    %v365 = vld [vmem:[#allocation5 + $0x6a8] sm:$0xff]
    %v366 = vld [vmem:[#allocation5 + $0x6b0] sm:$0xff]
    %v367 = vld [vmem:[#allocation5 + $0x6b8] sm:$0xff]
    %v368 = vld [vmem:[#allocation5 + $0x6c0] sm:$0xff]
    %v369 = vld [vmem:[#allocation5 + $0x6c8] sm:$0xff]
    %v370 = vld [vmem:[#allocation5 + $0x6d0] sm:$0xff]
    %v371 = vld [vmem:[#allocation5 + $0x6d8] sm:$0xff]
    %v372 = vld [vmem:[#allocation5 + $0x6e0] sm:$0xff]
    %v373 = vld [vmem:[#allocation5 + $0x6e8] sm:$0xff]
    %v374 = vld [vmem:[#allocation5 + $0x6f0] sm:$0xff]
    %v375 = vld [vmem:[#allocation5 + $0x6f8] sm:$0xff]
    %v376 = vld [vmem:[#allocation5 + $0x700] sm:$0xff]
    %v377 = vld [vmem:[#allocation5 + $0x708] sm:$0xff]
    %v378 = vld [vmem:[#allocation5 + $0x710] sm:$0xff]
    %v379 = vld [vmem:[#allocation5 + $0x718] sm:$0xff]
    %v380 = vld [vmem:[#allocation5 + $0x720] sm:$0xff]
    %v381 = vld [vmem:[#allocation5 + $0x728] sm:$0xff]
    %v382 = vld [vmem:[#allocation5 + $0x730] sm:$0xff]
    %v383 = vld [vmem:[#allocation5 + $0x738] sm:$0xff]
    %v384 = vld [vmem:[#allocation5 + $0x740] sm:$0xff]
    %v385 = vld [vmem:[#allocation5 + $0x748] sm:$0xff]
    %v386 = vld [vmem:[#allocation5 + $0x750] sm:$0xff]
    %v387 = vld [vmem:[#allocation5 + $0x758] sm:$0xff]
    %v388 = vld [vmem:[#allocation5 + $0x760] sm:$0xff]
    %v389 = vld [vmem:[#allocation5 + $0x768] sm:$0xff]
    %v390 = vld [vmem:[#allocation5 + $0x770] sm:$0xff]
    %v391 = vld [vmem:[#allocation5 + $0x778] sm:$0xff]
    %v392 = vld [vmem:[#allocation5 + $0x780] sm:$0xff]
    %v393 = vld [vmem:[#allocation5 + $0x788] sm:$0xff]
    %v394 = vld [vmem:[#allocation5 + $0x790] sm:$0xff]
    %v395 = vld [vmem:[#allocation5 + $0x798] sm:$0xff]
    %v396 = vld [vmem:[#allocation5 + $0x7a0] sm:$0xff]
    %v397 = vld [vmem:[#allocation5 + $0x7a8] sm:$0xff]
    %v398 = vld [vmem:[#allocation5 + $0x7b0] sm:$0xff]
    %v399 = vld [vmem:[#allocation5 + $0x7b8] sm:$0xff]
    %v400 = vld [vmem:[#allocation5 + $0x7c0] sm:$0xff]
    %v401 = vld [vmem:[#allocation5 + $0x7c8] sm:$0xff]
    %v402 = vld [vmem:[#allocation5 + $0x7d0] sm:$0xff]
    %v403 = vld [vmem:[#allocation5 + $0x7d8] sm:$0xff]
    %v404 = vld [vmem:[#allocation5 + $0x7e0] sm:$0xff]
    %v405 = vld [vmem:[#allocation5 + $0x7e8] sm:$0xff]
    %v406 = vld [vmem:[#allocation5 + $0x7f0] sm:$0xff]
    %v407 = vld [vmem:[#allocation5 + $0x7f8] sm:$0xff]
    %v408 = vld [vmem:[#allocation5 + $0x800] sm:$0xff]
    %v409 = vld [vmem:[#allocation5 + $0x808] sm:$0xff]
    %v410 = vld [vmem:[#allocation5 + $0x810] sm:$0xff]
    %v411 = vld [vmem:[#allocation5 + $0x818] sm:$0xff]
    %v412 = vld [vmem:[#allocation5 + $0x820] sm:$0xff]
    %v413 = vld [vmem:[#allocation5 + $0x828] sm:$0xff]
    %v414 = vld [vmem:[#allocation5 + $0x830] sm:$0xff]
    %v415 = vld [vmem:[#allocation5 + $0x838] sm:$0xff]
    %v416 = vld [vmem:[#allocation5 + $0x840] sm:$0xff]
    %v417 = vld [vmem:[#allocation5 + $0x848] sm:$0xff]
    %v418 = vld [vmem:[#allocation5 + $0x850] sm:$0xff]
    %v419 = vld [vmem:[#allocation5 + $0x858] sm:$0xff]
    %v420 = vld [vmem:[#allocation5 + $0x860] sm:$0xff]
    %v421 = vld [vmem:[#allocation5 + $0x868] sm:$0xff]
    %v422 = vld [vmem:[#allocation5 + $0x870] sm:$0xff]
    %v423 = vld [vmem:[#allocation5 + $0x878] sm:$0xff]
    %v424 = vld [vmem:[#allocation5 + $0x880] sm:$0xff]
    %v425 = vld [vmem:[#allocation5 + $0x888] sm:$0xff]
    %v426 = vld [vmem:[#allocation5 + $0x890] sm:$0xff]
    %v427 = vld [vmem:[#allocation5 + $0x898] sm:$0xff]
    %v428 = vld [vmem:[#allocation5 + $0x8a0] sm:$0xff]
    %v429 = vld [vmem:[#allocation5 + $0x8a8] sm:$0xff]
    %v430 = vld [vmem:[#allocation5 + $0x8b0] sm:$0xff]
    %v431 = vld [vmem:[#allocation5 + $0x8b8] sm:$0xff]
    %v432 = vld [vmem:[#allocation5 + $0x8c0] sm:$0xff]
    %v433 = vld [vmem:[#allocation5 + $0x8c8] sm:$0xff]
    %v434 = vld [vmem:[#allocation5 + $0x8d0] sm:$0xff]
    %v435 = vld [vmem:[#allocation5 + $0x8d8] sm:$0xff]
    %v436 = vld [vmem:[#allocation5 + $0x8e0] sm:$0xff]
    %v437 = vld [vmem:[#allocation5 + $0x8e8] sm:$0xff]
    %v438 = vld [vmem:[#allocation5 + $0x8f0] sm:$0xff]
    %v439 = vld [vmem:[#allocation5 + $0x8f8] sm:$0xff]
    %v440 = vld [vmem:[#allocation5 + $0x900] sm:$0xff]
    %v441 = vld [vmem:[#allocation5 + $0x908] sm:$0xff]
    %v442 = vld [vmem:[#allocation5 + $0x910] sm:$0xff]
    %v443 = vld [vmem:[#allocation5 + $0x918] sm:$0xff]
    %v444 = vld [vmem:[#allocation5 + $0x920] sm:$0xff]
    %v445 = vld [vmem:[#allocation5 + $0x928] sm:$0xff]
    %v446 = vld [vmem:[#allocation5 + $0x930] sm:$0xff]
    %v447 = vld [vmem:[#allocation5 + $0x938] sm:$0xff]
    %v448 = vld [vmem:[#allocation5 + $0x940] sm:$0xff]
    %v449 = vld [vmem:[#allocation5 + $0x948] sm:$0xff]
    %v450 = vld [vmem:[#allocation5 + $0x950] sm:$0xff]
    %v451 = vld [vmem:[#allocation5 + $0x958] sm:$0xff]
    %v452 = vld [vmem:[#allocation5 + $0x960] sm:$0xff]
    %v453 = vld [vmem:[#allocation5 + $0x968] sm:$0xff]
    %v454 = vld [vmem:[#allocation5 + $0x970] sm:$0xff]
    %v455 = vld [vmem:[#allocation5 + $0x978] sm:$0xff]
    %v456 = vld [vmem:[#allocation5 + $0x980] sm:$0xff]
    %v457 = vld [vmem:[#allocation5 + $0x988] sm:$0xff]
    %v458 = vld [vmem:[#allocation5 + $0x990] sm:$0xff]
    %v459 = vld [vmem:[#allocation5 + $0x998] sm:$0xff]
    %v460 = vld [vmem:[#allocation5 + $0x9a0] sm:$0xff]
    %v461 = vld [vmem:[#allocation5 + $0x9a8] sm:$0xff]
    %v462 = vld [vmem:[#allocation5 + $0x9b0] sm:$0xff]
    %v463 = vld [vmem:[#allocation5 + $0x9b8] sm:$0xff]
    %v464 = vld [vmem:[#allocation5 + $0x9c0] sm:$0xff]
    %v465 = vld [vmem:[#allocation5 + $0x9c8] sm:$0xff]
    %v466 = vld [vmem:[#allocation5 + $0x9d0] sm:$0xff]
    %v467 = vld [vmem:[#allocation5 + $0x9d8] sm:$0xff]
    %v468 = vld [vmem:[#allocation5 + $0x9e0] sm:$0xff]
    %v469 = vld [vmem:[#allocation5 + $0x9e8] sm:$0xff]
    %v470 = vld [vmem:[#allocation5 + $0x9f0] sm:$0xff]
    %v471 = vld [vmem:[#allocation5 + $0x9f8] sm:$0xff]
    %v472 = vld [vmem:[#allocation5 + $0xa00] sm:$0xff]
    %v473 = vld [vmem:[#allocation5 + $0xa08] sm:$0xff]
    %v474 = vld [vmem:[#allocation5 + $0xa10] sm:$0xff]
    %v475 = vld [vmem:[#allocation5 + $0xa18] sm:$0xff]
    %v476 = vld [vmem:[#allocation5 + $0xa20] sm:$0xff]
    %v477 = vld [vmem:[#allocation5 + $0xa28] sm:$0xff]
    %v478 = vld [vmem:[#allocation5 + $0xa30] sm:$0xff]
    %v479 = vld [vmem:[#allocation5 + $0xa38] sm:$0xff]
    %v480 = vld [vmem:[#allocation5 + $0xa40] sm:$0xff]
    %v481 = vld [vmem:[#allocation5 + $0xa48] sm:$0xff]
    %v482 = vld [vmem:[#allocation5 + $0xa50] sm:$0xff]
    %v483 = vld [vmem:[#allocation5 + $0xa58] sm:$0xff]
    %v484 = vld [vmem:[#allocation5 + $0xa60] sm:$0xff]
    %v485 = vld [vmem:[#allocation5 + $0xa68] sm:$0xff]
    %v486 = vld [vmem:[#allocation5 + $0xa70] sm:$0xff]
    %v487 = vld [vmem:[#allocation5 + $0xa78] sm:$0xff]
    %v488 = vld [vmem:[#allocation5 + $0xa80] sm:$0xff]
    %v489 = vld [vmem:[#allocation5 + $0xa88] sm:$0xff]
    %v490 = vld [vmem:[#allocation5 + $0xa90] sm:$0xff]
    %v491 = vld [vmem:[#allocation5 + $0xa98] sm:$0xff]
    %v492 = vld [vmem:[#allocation5 + $0xaa0] sm:$0xff]
    %v493 = vld [vmem:[#allocation5 + $0xaa8] sm:$0xff]
    %v494 = vld [vmem:[#allocation5 + $0xab0] sm:$0xff]
    %v495 = vld [vmem:[#allocation5 + $0xab8] sm:$0xff]
    %v496 = vld [vmem:[#allocation5 + $0xac0] sm:$0xff]
    %v497 = vld [vmem:[#allocation5 + $0xac8] sm:$0xff]
    %v498 = vld [vmem:[#allocation5 + $0xad0] sm:$0xff]
    %v499 = vld [vmem:[#allocation5 + $0xad8] sm:$0xff]
    %v500 = vld [vmem:[#allocation5 + $0xae0] sm:$0xff]
    %v501 = vld [vmem:[#allocation5 + $0xae8] sm:$0xff]
    %v502 = vld [vmem:[#allocation5 + $0xaf0] sm:$0xff]
    %v503 = vld [vmem:[#allocation5 + $0xaf8] sm:$0xff]
    %v504 = vld [vmem:[#allocation5 + $0xb00] sm:$0xff]
    %v505 = vld [vmem:[#allocation5 + $0xb08] sm:$0xff]
    %v506 = vld [vmem:[#allocation5 + $0xb10] sm:$0xff]
    %v507 = vld [vmem:[#allocation5 + $0xb18] sm:$0xff]
    %v508 = vld [vmem:[#allocation5 + $0xb20] sm:$0xff]
    %v509 = vld [vmem:[#allocation5 + $0xb28] sm:$0xff]
    %v510 = vld [vmem:[#allocation5 + $0xb30] sm:$0xff]
    %v511 = vld [vmem:[#allocation5 + $0xb38] sm:$0xff]
    %v512 = vld [vmem:[#allocation5 + $0xb40] sm:$0xff]
    %v513 = vld [vmem:[#allocation5 + $0xb48] sm:$0xff]
    %v514 = vld [vmem:[#allocation5 + $0xb50] sm:$0xff]
    %v515 = vld [vmem:[#allocation5 + $0xb58] sm:$0xff]
    %v516 = vld [vmem:[#allocation5 + $0xb60] sm:$0xff]
    %v517 = vld [vmem:[#allocation5 + $0xb68] sm:$0xff]
    %v518 = vld [vmem:[#allocation5 + $0xb70] sm:$0xff]
    %v519 = vld [vmem:[#allocation5 + $0xb78] sm:$0xff]
    %v520 = vld [vmem:[#allocation5 + $0xb80] sm:$0xff]
    %v521 = vld [vmem:[#allocation5 + $0xb88] sm:$0xff]
    %v522 = vld [vmem:[#allocation5 + $0xb90] sm:$0xff]
    %v523 = vld [vmem:[#allocation5 + $0xb98] sm:$0xff]
    %v524 = vld [vmem:[#allocation5 + $0xba0] sm:$0xff]
    %v525 = vld [vmem:[#allocation5 + $0xba8] sm:$0xff]
    %v526 = vld [vmem:[#allocation5 + $0xbb0] sm:$0xff]
    %v527 = vld [vmem:[#allocation5 + $0xbb8] sm:$0xff]
    %v528 = vld [vmem:[#allocation5 + $0xbc0] sm:$0xff]
    %v529 = vld [vmem:[#allocation5 + $0xbc8] sm:$0xff]
    %v530 = vld [vmem:[#allocation5 + $0xbd0] sm:$0xff]
    %v531 = vld [vmem:[#allocation5 + $0xbd8] sm:$0xff]
    %v532 = vld [vmem:[#allocation5 + $0xbe0] sm:$0xff]
    %v533 = vld [vmem:[#allocation5 + $0xbe8] sm:$0xff]
    %v534 = vld [vmem:[#allocation5 + $0xbf0] sm:$0xff]
    %v535 = vld [vmem:[#allocation5 + $0xbf8] sm:$0xff]
    %v536 = vld [vmem:[#allocation5 + $0xc00] sm:$0xff]
    %v537 = vld [vmem:[#allocation5 + $0xc08] sm:$0xff]
    %v538 = vld [vmem:[#allocation5 + $0xc10] sm:$0xff]
    %v539 = vld [vmem:[#allocation5 + $0xc18] sm:$0xff]
    %v540 = vld [vmem:[#allocation5 + $0xc20] sm:$0xff]
    %v541 = vld [vmem:[#allocation5 + $0xc28] sm:$0xff]
    %v542 = vld [vmem:[#allocation5 + $0xc30] sm:$0xff]
    %v543 = vld [vmem:[#allocation5 + $0xc38] sm:$0xff]
    %v544 = vld [vmem:[#allocation5 + $0xc40] sm:$0xff]
    %v545 = vld [vmem:[#allocation5 + $0xc48] sm:$0xff]
    %v546 = vld [vmem:[#allocation5 + $0xc50] sm:$0xff]
    %v547 = vld [vmem:[#allocation5 + $0xc58] sm:$0xff]
    %v548 = vld [vmem:[#allocation5 + $0xc60] sm:$0xff]
    %v549 = vld [vmem:[#allocation5 + $0xc68] sm:$0xff]
    %v550 = vld [vmem:[#allocation5 + $0xc70] sm:$0xff]
    %v551 = vld [vmem:[#allocation5 + $0xc78] sm:$0xff]
    %v552 = vld [vmem:[#allocation5 + $0xc80] sm:$0xff]
    %v553 = vld [vmem:[#allocation5 + $0xc88] sm:$0xff]
    %v554 = vld [vmem:[#allocation5 + $0xc90] sm:$0xff]
    %v555 = vld [vmem:[#allocation5 + $0xc98] sm:$0xff]
    %v556 = vld [vmem:[#allocation5 + $0xca0] sm:$0xff]
    %v557 = vld [vmem:[#allocation5 + $0xca8] sm:$0xff]
    %v558 = vld [vmem:[#allocation5 + $0xcb0] sm:$0xff]
    %v559 = vld [vmem:[#allocation5 + $0xcb8] sm:$0xff]
    %v560 = vld [vmem:[#allocation5 + $0xcc0] sm:$0xff]
    %v561 = vld [vmem:[#allocation5 + $0xcc8] sm:$0xff]
    %v562 = vld [vmem:[#allocation5 + $0xcd0] sm:$0xff]
    %v563 = vld [vmem:[#allocation5 + $0xcd8] sm:$0xff]
    %v564 = vld [vmem:[#allocation5 + $0xce0] sm:$0xff]
    %v565 = vld [vmem:[#allocation5 + $0xce8] sm:$0xff]
    %v566 = vld [vmem:[#allocation5 + $0xcf0] sm:$0xff]
    %v567 = vld [vmem:[#allocation5 + $0xcf8] sm:$0xff]
    %v568 = vld [vmem:[#allocation5 + $0xd00] sm:$0xff]
    %v569 = vld [vmem:[#allocation5 + $0xd08] sm:$0xff]
    %v570 = vld [vmem:[#allocation5 + $0xd10] sm:$0xff]
    %v571 = vld [vmem:[#allocation5 + $0xd18] sm:$0xff]
    %v572 = vld [vmem:[#allocation5 + $0xd20] sm:$0xff]
    %v573 = vld [vmem:[#allocation5 + $0xd28] sm:$0xff]
    %v574 = vld [vmem:[#allocation5 + $0xd30] sm:$0xff]
    %v575 = vld [vmem:[#allocation5 + $0xd38] sm:$0xff]
    %v576 = vld [vmem:[#allocation5 + $0xd40] sm:$0xff]
    %v577 = vld [vmem:[#allocation5 + $0xd48] sm:$0xff]
    %v578 = vld [vmem:[#allocation5 + $0xd50] sm:$0xff]
    %v579 = vld [vmem:[#allocation5 + $0xd58] sm:$0xff]
    %v580 = vld [vmem:[#allocation5 + $0xd60] sm:$0xff]
    %v581 = vld [vmem:[#allocation5 + $0xd68] sm:$0xff]
    %v582 = vld [vmem:[#allocation5 + $0xd70] sm:$0xff]
    %v583 = vld [vmem:[#allocation5 + $0xd78] sm:$0xff]
    %v584 = vld [vmem:[#allocation5 + $0xd80] sm:$0xff]
    %v585 = vld [vmem:[#allocation5 + $0xd88] sm:$0xff]
    %v586 = vld [vmem:[#allocation5 + $0xd90] sm:$0xff]
    %v587 = vld [vmem:[#allocation5 + $0xd98] sm:$0xff]
    %v588 = vld [vmem:[#allocation5 + $0xda0] sm:$0xff]
    %v589 = vld [vmem:[#allocation5 + $0xda8] sm:$0xff]
    %v590 = vld [vmem:[#allocation5 + $0xdb0] sm:$0xff]
    %v591 = vld [vmem:[#allocation5 + $0xdb8] sm:$0xff]
    %v592 = vld [vmem:[#allocation5 + $0xdc0] sm:$0xff]
    %v593 = vld [vmem:[#allocation5 + $0xdc8] sm:$0xff]
    %v594 = vld [vmem:[#allocation5 + $0xdd0] sm:$0xff]
    %v595 = vld [vmem:[#allocation5 + $0xdd8] sm:$0xff]
    %v596 = vld [vmem:[#allocation5 + $0xde0] sm:$0xff]
    %v597 = vld [vmem:[#allocation5 + $0xde8] sm:$0xff]
    %v598 = vld [vmem:[#allocation5 + $0xdf0] sm:$0xff]
    %v599 = vld [vmem:[#allocation5 + $0xdf8] sm:$0xff]
    %v600 = vld [vmem:[#allocation5 + $0xe00] sm:$0xff]
    %v601 = vld [vmem:[#allocation5 + $0xe08] sm:$0xff]
    %v602 = vld [vmem:[#allocation5 + $0xe10] sm:$0xff]
    %v603 = vld [vmem:[#allocation5 + $0xe18] sm:$0xff]
    %v604 = vld [vmem:[#allocation5 + $0xe20] sm:$0xff]
    %v605 = vld [vmem:[#allocation5 + $0xe28] sm:$0xff]
    %v606 = vld [vmem:[#allocation5 + $0xe30] sm:$0xff]
    %v607 = vld [vmem:[#allocation5 + $0xe38] sm:$0xff]
    %v608 = vld [vmem:[#allocation5 + $0xe40] sm:$0xff]
    %v609 = vld [vmem:[#allocation5 + $0xe48] sm:$0xff]
    %v610 = vld [vmem:[#allocation5 + $0xe50] sm:$0xff]
    %v611 = vld [vmem:[#allocation5 + $0xe58] sm:$0xff]
    %v612 = vld [vmem:[#allocation5 + $0xe60] sm:$0xff]
    %v613 = vld [vmem:[#allocation5 + $0xe68] sm:$0xff]
    %v614 = vld [vmem:[#allocation5 + $0xe70] sm:$0xff]
    %v615 = vld [vmem:[#allocation5 + $0xe78] sm:$0xff]
    %v616 = vld [vmem:[#allocation5 + $0xe80] sm:$0xff]
    %v617 = vld [vmem:[#allocation5 + $0xe88] sm:$0xff]
    %v618 = vld [vmem:[#allocation5 + $0xe90] sm:$0xff]
    %v619 = vld [vmem:[#allocation5 + $0xe98] sm:$0xff]
    %v620 = vld [vmem:[#allocation5 + $0xea0] sm:$0xff]
    %v621 = vld [vmem:[#allocation5 + $0xea8] sm:$0xff]
    %v622 = vld [vmem:[#allocation5 + $0xeb0] sm:$0xff]
    %v623 = vld [vmem:[#allocation5 + $0xeb8] sm:$0xff]
    %v624 = vld [vmem:[#allocation5 + $0xec0] sm:$0xff]
    %v625 = vld [vmem:[#allocation5 + $0xec8] sm:$0xff]
    %v626 = vld [vmem:[#allocation5 + $0xed0] sm:$0xff]
    %v627 = vld [vmem:[#allocation5 + $0xed8] sm:$0xff]
    %v628 = vld [vmem:[#allocation5 + $0xee0] sm:$0xff]
    %v629 = vld [vmem:[#allocation5 + $0xee8] sm:$0xff]
    %v630 = vld [vmem:[#allocation5 + $0xef0] sm:$0xff]
    %v631 = vld [vmem:[#allocation5 + $0xef8] sm:$0xff]
    %v632 = vld [vmem:[#allocation5 + $0xf00] sm:$0xff]
    %v633 = vld [vmem:[#allocation5 + $0xf08] sm:$0xff]
    %v634 = vld [vmem:[#allocation5 + $0xf10] sm:$0xff]
    %v635 = vld [vmem:[#allocation5 + $0xf18] sm:$0xff]
    %v636 = vld [vmem:[#allocation5 + $0xf20] sm:$0xff]
    %v637 = vld [vmem:[#allocation5 + $0xf28] sm:$0xff]
    %v638 = vld [vmem:[#allocation5 + $0xf30] sm:$0xff]
    %v639 = vld [vmem:[#allocation5 + $0xf38] sm:$0xff]
    %v640 = vld [vmem:[#allocation5 + $0xf40] sm:$0xff]
    %v641 = vld [vmem:[#allocation5 + $0xf48] sm:$0xff]
    %v642 = vld [vmem:[#allocation5 + $0xf50] sm:$0xff]
    %v643 = vld [vmem:[#allocation5 + $0xf58] sm:$0xff]
    %v644 = vld [vmem:[#allocation5 + $0xf60] sm:$0xff]
    %v645 = vld [vmem:[#allocation5 + $0xf68] sm:$0xff]
    %v646 = vld [vmem:[#allocation5 + $0xf70] sm:$0xff]
    %v647 = vld [vmem:[#allocation5 + $0xf78] sm:$0xff]
    %v648 = vld [vmem:[#allocation5 + $0xf80] sm:$0xff]
    %v649 = vld [vmem:[#allocation5 + $0xf88] sm:$0xff]
    %v650 = vld [vmem:[#allocation5 + $0xf90] sm:$0xff]
    %v651 = vld [vmem:[#allocation5 + $0xf98] sm:$0xff]
    %v652 = vld [vmem:[#allocation5 + $0xfa0] sm:$0xff]
    %v653 = vld [vmem:[#allocation5 + $0xfa8] sm:$0xff]
    %v654 = vld [vmem:[#allocation5 + $0xfb0] sm:$0xff]
    %v655 = vld [vmem:[#allocation5 + $0xfb8] sm:$0xff]
    %v656 = vld [vmem:[#allocation5 + $0xfc0] sm:$0xff]
    %v657 = vld [vmem:[#allocation5 + $0xfc8] sm:$0xff]
    %v658 = vld [vmem:[#allocation5 + $0xfd0] sm:$0xff]
    %v659 = vld [vmem:[#allocation5 + $0xfd8] sm:$0xff]
    %v660 = vld [vmem:[#allocation5 + $0xfe0] sm:$0xff]
    %v661 = vld [vmem:[#allocation5 + $0xfe8] sm:$0xff]
    %v662 = vld [vmem:[#allocation5 + $0xff0] sm:$0xff]
    %v663 = vld [vmem:[#allocation5 + $0xff8] sm:$0xff]
    %v664 = vld [vmem:[#allocation7] sm:$0xf]
    %v666 = vlaneseq
    %v667 = vshrl.u32 %v666, 7
    %v668 = vsub.s32 0, %v667
    %v669 = vrot.slane %v664, %v668
    %v670 = vlaneseq
    %v671 = vshrl.u32 %v670, 7
    %v672 = vsub.s32 1, %v671
    %v673 = vrot.slane %v664, %v672
    %v674 = vlaneseq
    %v675 = vshrl.u32 %v674, 7
    %v676 = vsub.s32 2, %v675
    %v677 = vrot.slane %v664, %v676
    %v678 = vlaneseq
    %v679 = vshrl.u32 %v678, 7
    %v680 = vsub.s32 3, %v679
    %v681 = vrot.slane %v664, %v680
    %v694 = vunpack.c.l.b16 %v144
    %v695 = vunpack.c.h.b16 %v144
    %v696 = vunpack.c.l.b16 %v145
    %v697 = vunpack.c.h.b16 %v145
    %v698 = vunpack.c.l.b16 %v146
    %v699 = vunpack.c.h.b16 %v146
    %v700 = vunpack.c.l.b16 %v147
    %v701 = vunpack.c.h.b16 %v147
    %v702 = vunpack.c.l.b16 %v148
    %v703 = vunpack.c.h.b16 %v148
    %v704 = vunpack.c.l.b16 %v149
    %v705 = vunpack.c.h.b16 %v149
    %v706 = vunpack.c.l.b16 %v150
    %v707 = vunpack.c.h.b16 %v150
    %v708 = vunpack.c.l.b16 %v151
    %v709 = vunpack.c.h.b16 %v151
    %v710 = vpack.c.b16 %v694, %v694
    %v711 = vpack.c.b16 %v695, %v695
    %v712 = vpack.c.b16 %v696, %v696
    %v713 = vpack.c.b16 %v697, %v697
    %v714 = vpack.c.b16 %v698, %v698
    %v715 = vpack.c.b16 %v699, %v699
    %v716 = vpack.c.b16 %v700, %v700
    %v717 = vpack.c.b16 %v701, %v701
    %v718 = vpack.c.b16 %v702, %v702
    %v719 = vpack.c.b16 %v703, %v703
    %v720 = vpack.c.b16 %v704, %v704
    %v721 = vpack.c.b16 %v705, %v705
    %v722 = vpack.c.b16 %v706, %v706
    %v723 = vpack.c.b16 %v707, %v707
    %v724 = vpack.c.b16 %v708, %v708
    %v725 = vpack.c.b16 %v709, %v709
    %v1254 = vunpack.c.l.b16 %v152
    %v1255 = vunpack.c.h.b16 %v152
    %v1256 = vunpack.c.l.b16 %v153
    %v1257 = vunpack.c.h.b16 %v153
    %v1258 = vunpack.c.l.b16 %v154
    %v1259 = vunpack.c.h.b16 %v154
    %v1260 = vunpack.c.l.b16 %v155
    %v1261 = vunpack.c.h.b16 %v155
    %v1262 = vunpack.c.l.b16 %v156
    %v1263 = vunpack.c.h.b16 %v156
    %v1264 = vunpack.c.l.b16 %v157
    %v1265 = vunpack.c.h.b16 %v157
    %v1266 = vunpack.c.l.b16 %v158
    %v1267 = vunpack.c.h.b16 %v158
    %v1268 = vunpack.c.l.b16 %v159
    %v1269 = vunpack.c.h.b16 %v159
    %v1270 = vunpack.c.l.b16 %v160
    %v1271 = vunpack.c.h.b16 %v160
    %v1272 = vunpack.c.l.b16 %v161
    %v1273 = vunpack.c.h.b16 %v161
    %v1274 = vunpack.c.l.b16 %v162
    %v1275 = vunpack.c.h.b16 %v162
    %v1276 = vunpack.c.l.b16 %v163
    %v1277 = vunpack.c.h.b16 %v163
    %v1278 = vunpack.c.l.b16 %v164
    %v1279 = vunpack.c.h.b16 %v164
    %v1280 = vunpack.c.l.b16 %v165
    %v1281 = vunpack.c.h.b16 %v165
    %v1282 = vunpack.c.l.b16 %v166
    %v1283 = vunpack.c.h.b16 %v166
    %v1284 = vunpack.c.l.b16 %v167
    %v1285 = vunpack.c.h.b16 %v167
    %v1286 = vunpack.c.l.b16 %v168
    %v1287 = vunpack.c.h.b16 %v168
    %v1288 = vunpack.c.l.b16 %v169
    %v1289 = vunpack.c.h.b16 %v169
    %v1290 = vunpack.c.l.b16 %v170
    %v1291 = vunpack.c.h.b16 %v170
    %v1292 = vunpack.c.l.b16 %v171
    %v1293 = vunpack.c.h.b16 %v171
    %v1294 = vunpack.c.l.b16 %v172
    %v1295 = vunpack.c.h.b16 %v172
    %v1296 = vunpack.c.l.b16 %v173
    %v1297 = vunpack.c.h.b16 %v173
    %v1298 = vunpack.c.l.b16 %v174
    %v1299 = vunpack.c.h.b16 %v174
    %v1300 = vunpack.c.l.b16 %v175
    %v1301 = vunpack.c.h.b16 %v175
    %v1302 = vunpack.c.l.b16 %v176
    %v1303 = vunpack.c.h.b16 %v176
    %v1304 = vunpack.c.l.b16 %v177
    %v1305 = vunpack.c.h.b16 %v177
    %v1306 = vunpack.c.l.b16 %v178
    %v1307 = vunpack.c.h.b16 %v178
    %v1308 = vunpack.c.l.b16 %v179
    %v1309 = vunpack.c.h.b16 %v179
    %v1310 = vunpack.c.l.b16 %v180
    %v1311 = vunpack.c.h.b16 %v180
    %v1312 = vunpack.c.l.b16 %v181
    %v1313 = vunpack.c.h.b16 %v181
    %v1314 = vunpack.c.l.b16 %v182
    %v1315 = vunpack.c.h.b16 %v182
    %v1316 = vunpack.c.l.b16 %v183
    %v1317 = vunpack.c.h.b16 %v183
    %v1318 = vunpack.c.l.b16 %v184
    %v1319 = vunpack.c.h.b16 %v184
    %v1320 = vunpack.c.l.b16 %v185
    %v1321 = vunpack.c.h.b16 %v185
    %v1322 = vunpack.c.l.b16 %v186
    %v1323 = vunpack.c.h.b16 %v186
    %v1324 = vunpack.c.l.b16 %v187
    %v1325 = vunpack.c.h.b16 %v187
    %v1326 = vunpack.c.l.b16 %v188
    %v1327 = vunpack.c.h.b16 %v188
    %v1328 = vunpack.c.l.b16 %v189
    %v1329 = vunpack.c.h.b16 %v189
    %v1330 = vunpack.c.l.b16 %v190
    %v1331 = vunpack.c.h.b16 %v190
    %v1332 = vunpack.c.l.b16 %v191
    %v1333 = vunpack.c.h.b16 %v191
    %v1334 = vunpack.c.l.b16 %v192
    %v1335 = vunpack.c.h.b16 %v192
    %v1336 = vunpack.c.l.b16 %v193
    %v1337 = vunpack.c.h.b16 %v193
    %v1338 = vunpack.c.l.b16 %v194
    %v1339 = vunpack.c.h.b16 %v194
    %v1340 = vunpack.c.l.b16 %v195
    %v1341 = vunpack.c.h.b16 %v195
    %v1342 = vunpack.c.l.b16 %v196
    %v1343 = vunpack.c.h.b16 %v196
    %v1344 = vunpack.c.l.b16 %v197
    %v1345 = vunpack.c.h.b16 %v197
    %v1346 = vunpack.c.l.b16 %v198
    %v1347 = vunpack.c.h.b16 %v198
    %v1348 = vunpack.c.l.b16 %v199
    %v1349 = vunpack.c.h.b16 %v199
    %v1350 = vunpack.c.l.b16 %v200
    %v1351 = vunpack.c.h.b16 %v200
    %v1352 = vunpack.c.l.b16 %v201
    %v1353 = vunpack.c.h.b16 %v201
    %v1354 = vunpack.c.l.b16 %v202
    %v1355 = vunpack.c.h.b16 %v202
    %v1356 = vunpack.c.l.b16 %v203
    %v1357 = vunpack.c.h.b16 %v203
    %v1358 = vunpack.c.l.b16 %v204
    %v1359 = vunpack.c.h.b16 %v204
    %v1360 = vunpack.c.l.b16 %v205
    %v1361 = vunpack.c.h.b16 %v205
    %v1362 = vunpack.c.l.b16 %v206
    %v1363 = vunpack.c.h.b16 %v206
    %v1364 = vunpack.c.l.b16 %v207
    %v1365 = vunpack.c.h.b16 %v207
    %v1366 = vunpack.c.l.b16 %v208
    %v1367 = vunpack.c.h.b16 %v208
    %v1368 = vunpack.c.l.b16 %v209
    %v1369 = vunpack.c.h.b16 %v209
    %v1370 = vunpack.c.l.b16 %v210
    %v1371 = vunpack.c.h.b16 %v210
    %v1372 = vunpack.c.l.b16 %v211
    %v1373 = vunpack.c.h.b16 %v211
    %v1374 = vunpack.c.l.b16 %v212
    %v1375 = vunpack.c.h.b16 %v212
    %v1376 = vunpack.c.l.b16 %v213
    %v1377 = vunpack.c.h.b16 %v213
    %v1378 = vunpack.c.l.b16 %v214
    %v1379 = vunpack.c.h.b16 %v214
    %v1380 = vunpack.c.l.b16 %v215
    %v1381 = vunpack.c.h.b16 %v215
    %v1382 = vunpack.c.l.b16 %v216
    %v1383 = vunpack.c.h.b16 %v216
    %v1384 = vunpack.c.l.b16 %v217
    %v1385 = vunpack.c.h.b16 %v217
    %v1386 = vunpack.c.l.b16 %v218
    %v1387 = vunpack.c.h.b16 %v218
    %v1388 = vunpack.c.l.b16 %v219
    %v1389 = vunpack.c.h.b16 %v219
    %v1390 = vunpack.c.l.b16 %v220
    %v1391 = vunpack.c.h.b16 %v220
    %v1392 = vunpack.c.l.b16 %v221
    %v1393 = vunpack.c.h.b16 %v221
    %v1394 = vunpack.c.l.b16 %v222
    %v1395 = vunpack.c.h.b16 %v222
    %v1396 = vunpack.c.l.b16 %v223
    %v1397 = vunpack.c.h.b16 %v223
    %v1398 = vunpack.c.l.b16 %v224
    %v1399 = vunpack.c.h.b16 %v224
    %v1400 = vunpack.c.l.b16 %v225
    %v1401 = vunpack.c.h.b16 %v225
    %v1402 = vunpack.c.l.b16 %v226
    %v1403 = vunpack.c.h.b16 %v226
    %v1404 = vunpack.c.l.b16 %v227
    %v1405 = vunpack.c.h.b16 %v227
    %v1406 = vunpack.c.l.b16 %v228
    %v1407 = vunpack.c.h.b16 %v228
    %v1408 = vunpack.c.l.b16 %v229
    %v1409 = vunpack.c.h.b16 %v229
    %v1410 = vunpack.c.l.b16 %v230
    %v1411 = vunpack.c.h.b16 %v230
    %v1412 = vunpack.c.l.b16 %v231
    %v1413 = vunpack.c.h.b16 %v231
    %v1414 = vunpack.c.l.b16 %v232
    %v1415 = vunpack.c.h.b16 %v232
    %v1416 = vunpack.c.l.b16 %v233
    %v1417 = vunpack.c.h.b16 %v233
    %v1418 = vunpack.c.l.b16 %v234
    %v1419 = vunpack.c.h.b16 %v234
    %v1420 = vunpack.c.l.b16 %v235
    %v1421 = vunpack.c.h.b16 %v235
    %v1422 = vunpack.c.l.b16 %v236
    %v1423 = vunpack.c.h.b16 %v236
    %v1424 = vunpack.c.l.b16 %v237
    %v1425 = vunpack.c.h.b16 %v237
    %v1426 = vunpack.c.l.b16 %v238
    %v1427 = vunpack.c.h.b16 %v238
    %v1428 = vunpack.c.l.b16 %v239
    %v1429 = vunpack.c.h.b16 %v239
    %v1430 = vunpack.c.l.b16 %v240
    %v1431 = vunpack.c.h.b16 %v240
    %v1432 = vunpack.c.l.b16 %v241
    %v1433 = vunpack.c.h.b16 %v241
    %v1434 = vunpack.c.l.b16 %v242
    %v1435 = vunpack.c.h.b16 %v242
    %v1436 = vunpack.c.l.b16 %v243
    %v1437 = vunpack.c.h.b16 %v243
    %v1438 = vunpack.c.l.b16 %v244
    %v1439 = vunpack.c.h.b16 %v244
    %v1440 = vunpack.c.l.b16 %v245
    %v1441 = vunpack.c.h.b16 %v245
    %v1442 = vunpack.c.l.b16 %v246
    %v1443 = vunpack.c.h.b16 %v246
    %v1444 = vunpack.c.l.b16 %v247
    %v1445 = vunpack.c.h.b16 %v247
    %v1446 = vunpack.c.l.b16 %v248
    %v1447 = vunpack.c.h.b16 %v248
    %v1448 = vunpack.c.l.b16 %v249
    %v1449 = vunpack.c.h.b16 %v249
    %v1450 = vunpack.c.l.b16 %v250
    %v1451 = vunpack.c.h.b16 %v250
    %v1452 = vunpack.c.l.b16 %v251
    %v1453 = vunpack.c.h.b16 %v251
    %v1454 = vunpack.c.l.b16 %v252
    %v1455 = vunpack.c.h.b16 %v252
    %v1456 = vunpack.c.l.b16 %v253
    %v1457 = vunpack.c.h.b16 %v253
    %v1458 = vunpack.c.l.b16 %v254
    %v1459 = vunpack.c.h.b16 %v254
    %v1460 = vunpack.c.l.b16 %v255
    %v1461 = vunpack.c.h.b16 %v255
    %v1462 = vunpack.c.l.b16 %v256
    %v1463 = vunpack.c.h.b16 %v256
    %v1464 = vunpack.c.l.b16 %v257
    %v1465 = vunpack.c.h.b16 %v257
    %v1466 = vunpack.c.l.b16 %v258
    %v1467 = vunpack.c.h.b16 %v258
    %v1468 = vunpack.c.l.b16 %v259
    %v1469 = vunpack.c.h.b16 %v259
    %v1470 = vunpack.c.l.b16 %v260
    %v1471 = vunpack.c.h.b16 %v260
    %v1472 = vunpack.c.l.b16 %v261
    %v1473 = vunpack.c.h.b16 %v261
    %v1474 = vunpack.c.l.b16 %v262
    %v1475 = vunpack.c.h.b16 %v262
    %v1476 = vunpack.c.l.b16 %v263
    %v1477 = vunpack.c.h.b16 %v263
    %v1478 = vunpack.c.l.b16 %v264
    %v1479 = vunpack.c.h.b16 %v264
    %v1480 = vunpack.c.l.b16 %v265
    %v1481 = vunpack.c.h.b16 %v265
    %v1482 = vunpack.c.l.b16 %v266
    %v1483 = vunpack.c.h.b16 %v266
    %v1484 = vunpack.c.l.b16 %v267
    %v1485 = vunpack.c.h.b16 %v267
    %v1486 = vunpack.c.l.b16 %v268
    %v1487 = vunpack.c.h.b16 %v268
    %v1488 = vunpack.c.l.b16 %v269
    %v1489 = vunpack.c.h.b16 %v269
    %v1490 = vunpack.c.l.b16 %v270
    %v1491 = vunpack.c.h.b16 %v270
    %v1492 = vunpack.c.l.b16 %v271
    %v1493 = vunpack.c.h.b16 %v271
    %v1494 = vunpack.c.l.b16 %v272
    %v1495 = vunpack.c.h.b16 %v272
    %v1496 = vunpack.c.l.b16 %v273
    %v1497 = vunpack.c.h.b16 %v273
    %v1498 = vunpack.c.l.b16 %v274
    %v1499 = vunpack.c.h.b16 %v274
    %v1500 = vunpack.c.l.b16 %v275
    %v1501 = vunpack.c.h.b16 %v275
    %v1502 = vunpack.c.l.b16 %v276
    %v1503 = vunpack.c.h.b16 %v276
    %v1504 = vunpack.c.l.b16 %v277
    %v1505 = vunpack.c.h.b16 %v277
    %v1506 = vunpack.c.l.b16 %v278
    %v1507 = vunpack.c.h.b16 %v278
    %v1508 = vunpack.c.l.b16 %v279
    %v1509 = vunpack.c.h.b16 %v279
    %v1510 = vunpack.c.l.b16 %v280
    %v1511 = vunpack.c.h.b16 %v280
    %v1512 = vunpack.c.l.b16 %v281
    %v1513 = vunpack.c.h.b16 %v281
    %v1514 = vunpack.c.l.b16 %v282
    %v1515 = vunpack.c.h.b16 %v282
    %v1516 = vunpack.c.l.b16 %v283
    %v1517 = vunpack.c.h.b16 %v283
    %v1518 = vunpack.c.l.b16 %v284
    %v1519 = vunpack.c.h.b16 %v284
    %v1520 = vunpack.c.l.b16 %v285
    %v1521 = vunpack.c.h.b16 %v285
    %v1522 = vunpack.c.l.b16 %v286
    %v1523 = vunpack.c.h.b16 %v286
    %v1524 = vunpack.c.l.b16 %v287
    %v1525 = vunpack.c.h.b16 %v287
    %v1526 = vunpack.c.l.b16 %v288
    %v1527 = vunpack.c.h.b16 %v288
    %v1528 = vunpack.c.l.b16 %v289
    %v1529 = vunpack.c.h.b16 %v289
    %v1530 = vunpack.c.l.b16 %v290
    %v1531 = vunpack.c.h.b16 %v290
    %v1532 = vunpack.c.l.b16 %v291
    %v1533 = vunpack.c.h.b16 %v291
    %v1534 = vunpack.c.l.b16 %v292
    %v1535 = vunpack.c.h.b16 %v292
    %v1536 = vunpack.c.l.b16 %v293
    %v1537 = vunpack.c.h.b16 %v293
    %v1538 = vunpack.c.l.b16 %v294
    %v1539 = vunpack.c.h.b16 %v294
    %v1540 = vunpack.c.l.b16 %v295
    %v1541 = vunpack.c.h.b16 %v295
    %v1542 = vunpack.c.l.b16 %v296
    %v1543 = vunpack.c.h.b16 %v296
    %v1544 = vunpack.c.l.b16 %v297
    %v1545 = vunpack.c.h.b16 %v297
    %v1546 = vunpack.c.l.b16 %v298
    %v1547 = vunpack.c.h.b16 %v298
    %v1548 = vunpack.c.l.b16 %v299
    %v1549 = vunpack.c.h.b16 %v299
    %v1550 = vunpack.c.l.b16 %v300
    %v1551 = vunpack.c.h.b16 %v300
    %v1552 = vunpack.c.l.b16 %v301
    %v1553 = vunpack.c.h.b16 %v301
    %v1554 = vunpack.c.l.b16 %v302
    %v1555 = vunpack.c.h.b16 %v302
    %v1556 = vunpack.c.l.b16 %v303
    %v1557 = vunpack.c.h.b16 %v303
    %v1558 = vunpack.c.l.b16 %v304
    %v1559 = vunpack.c.h.b16 %v304
    %v1560 = vunpack.c.l.b16 %v305
    %v1561 = vunpack.c.h.b16 %v305
    %v1562 = vunpack.c.l.b16 %v306
    %v1563 = vunpack.c.h.b16 %v306
    %v1564 = vunpack.c.l.b16 %v307
    %v1565 = vunpack.c.h.b16 %v307
    %v1566 = vunpack.c.l.b16 %v308
    %v1567 = vunpack.c.h.b16 %v308
    %v1568 = vunpack.c.l.b16 %v309
    %v1569 = vunpack.c.h.b16 %v309
    %v1570 = vunpack.c.l.b16 %v310
    %v1571 = vunpack.c.h.b16 %v310
    %v1572 = vunpack.c.l.b16 %v311
    %v1573 = vunpack.c.h.b16 %v311
    %v1574 = vunpack.c.l.b16 %v312
    %v1575 = vunpack.c.h.b16 %v312
    %v1576 = vunpack.c.l.b16 %v313
    %v1577 = vunpack.c.h.b16 %v313
    %v1578 = vunpack.c.l.b16 %v314
    %v1579 = vunpack.c.h.b16 %v314
    %v1580 = vunpack.c.l.b16 %v315
    %v1581 = vunpack.c.h.b16 %v315
    %v1582 = vunpack.c.l.b16 %v316
    %v1583 = vunpack.c.h.b16 %v316
    %v1584 = vunpack.c.l.b16 %v317
    %v1585 = vunpack.c.h.b16 %v317
    %v1586 = vunpack.c.l.b16 %v318
    %v1587 = vunpack.c.h.b16 %v318
    %v1588 = vunpack.c.l.b16 %v319
    %v1589 = vunpack.c.h.b16 %v319
    %v1590 = vunpack.c.l.b16 %v320
    %v1591 = vunpack.c.h.b16 %v320
    %v1592 = vunpack.c.l.b16 %v321
    %v1593 = vunpack.c.h.b16 %v321
    %v1594 = vunpack.c.l.b16 %v322
    %v1595 = vunpack.c.h.b16 %v322
    %v1596 = vunpack.c.l.b16 %v323
    %v1597 = vunpack.c.h.b16 %v323
    %v1598 = vunpack.c.l.b16 %v324
    %v1599 = vunpack.c.h.b16 %v324
    %v1600 = vunpack.c.l.b16 %v325
    %v1601 = vunpack.c.h.b16 %v325
    %v1602 = vunpack.c.l.b16 %v326
    %v1603 = vunpack.c.h.b16 %v326
    %v1604 = vunpack.c.l.b16 %v327
    %v1605 = vunpack.c.h.b16 %v327
    %v1606 = vunpack.c.l.b16 %v328
    %v1607 = vunpack.c.h.b16 %v328
    %v1608 = vunpack.c.l.b16 %v329
    %v1609 = vunpack.c.h.b16 %v329
    %v1610 = vunpack.c.l.b16 %v330
    %v1611 = vunpack.c.h.b16 %v330
    %v1612 = vunpack.c.l.b16 %v331
    %v1613 = vunpack.c.h.b16 %v331
    %v1614 = vunpack.c.l.b16 %v332
    %v1615 = vunpack.c.h.b16 %v332
    %v1616 = vunpack.c.l.b16 %v333
    %v1617 = vunpack.c.h.b16 %v333
    %v1618 = vunpack.c.l.b16 %v334
    %v1619 = vunpack.c.h.b16 %v334
    %v1620 = vunpack.c.l.b16 %v335
    %v1621 = vunpack.c.h.b16 %v335
    %v1622 = vunpack.c.l.b16 %v336
    %v1623 = vunpack.c.h.b16 %v336
    %v1624 = vunpack.c.l.b16 %v337
    %v1625 = vunpack.c.h.b16 %v337
    %v1626 = vunpack.c.l.b16 %v338
    %v1627 = vunpack.c.h.b16 %v338
    %v1628 = vunpack.c.l.b16 %v339
    %v1629 = vunpack.c.h.b16 %v339
    %v1630 = vunpack.c.l.b16 %v340
    %v1631 = vunpack.c.h.b16 %v340
    %v1632 = vunpack.c.l.b16 %v341
    %v1633 = vunpack.c.h.b16 %v341
    %v1634 = vunpack.c.l.b16 %v342
    %v1635 = vunpack.c.h.b16 %v342
    %v1636 = vunpack.c.l.b16 %v343
    %v1637 = vunpack.c.h.b16 %v343
    %v1638 = vunpack.c.l.b16 %v344
    %v1639 = vunpack.c.h.b16 %v344
    %v1640 = vunpack.c.l.b16 %v345
    %v1641 = vunpack.c.h.b16 %v345
    %v1642 = vunpack.c.l.b16 %v346
    %v1643 = vunpack.c.h.b16 %v346
    %v1644 = vunpack.c.l.b16 %v347
    %v1645 = vunpack.c.h.b16 %v347
    %v1646 = vunpack.c.l.b16 %v348
    %v1647 = vunpack.c.h.b16 %v348
    %v1648 = vunpack.c.l.b16 %v349
    %v1649 = vunpack.c.h.b16 %v349
    %v1650 = vunpack.c.l.b16 %v350
    %v1651 = vunpack.c.h.b16 %v350
    %v1652 = vunpack.c.l.b16 %v351
    %v1653 = vunpack.c.h.b16 %v351
    %v1654 = vunpack.c.l.b16 %v352
    %v1655 = vunpack.c.h.b16 %v352
    %v1656 = vunpack.c.l.b16 %v353
    %v1657 = vunpack.c.h.b16 %v353
    %v1658 = vunpack.c.l.b16 %v354
    %v1659 = vunpack.c.h.b16 %v354
    %v1660 = vunpack.c.l.b16 %v355
    %v1661 = vunpack.c.h.b16 %v355
    %v1662 = vunpack.c.l.b16 %v356
    %v1663 = vunpack.c.h.b16 %v356
    %v1664 = vunpack.c.l.b16 %v357
    %v1665 = vunpack.c.h.b16 %v357
    %v1666 = vunpack.c.l.b16 %v358
    %v1667 = vunpack.c.h.b16 %v358
    %v1668 = vunpack.c.l.b16 %v359
    %v1669 = vunpack.c.h.b16 %v359
    %v1670 = vunpack.c.l.b16 %v360
    %v1671 = vunpack.c.h.b16 %v360
    %v1672 = vunpack.c.l.b16 %v361
    %v1673 = vunpack.c.h.b16 %v361
    %v1674 = vunpack.c.l.b16 %v362
    %v1675 = vunpack.c.h.b16 %v362
    %v1676 = vunpack.c.l.b16 %v363
    %v1677 = vunpack.c.h.b16 %v363
    %v1678 = vunpack.c.l.b16 %v364
    %v1679 = vunpack.c.h.b16 %v364
    %v1680 = vunpack.c.l.b16 %v365
    %v1681 = vunpack.c.h.b16 %v365
    %v1682 = vunpack.c.l.b16 %v366
    %v1683 = vunpack.c.h.b16 %v366
    %v1684 = vunpack.c.l.b16 %v367
    %v1685 = vunpack.c.h.b16 %v367
    %v1686 = vunpack.c.l.b16 %v368
    %v1687 = vunpack.c.h.b16 %v368
    %v1688 = vunpack.c.l.b16 %v369
    %v1689 = vunpack.c.h.b16 %v369
    %v1690 = vunpack.c.l.b16 %v370
    %v1691 = vunpack.c.h.b16 %v370
    %v1692 = vunpack.c.l.b16 %v371
    %v1693 = vunpack.c.h.b16 %v371
    %v1694 = vunpack.c.l.b16 %v372
    %v1695 = vunpack.c.h.b16 %v372
    %v1696 = vunpack.c.l.b16 %v373
    %v1697 = vunpack.c.h.b16 %v373
    %v1698 = vunpack.c.l.b16 %v374
    %v1699 = vunpack.c.h.b16 %v374
    %v1700 = vunpack.c.l.b16 %v375
    %v1701 = vunpack.c.h.b16 %v375
    %v1702 = vunpack.c.l.b16 %v376
    %v1703 = vunpack.c.h.b16 %v376
    %v1704 = vunpack.c.l.b16 %v377
    %v1705 = vunpack.c.h.b16 %v377
    %v1706 = vunpack.c.l.b16 %v378
    %v1707 = vunpack.c.h.b16 %v378
    %v1708 = vunpack.c.l.b16 %v379
    %v1709 = vunpack.c.h.b16 %v379
    %v1710 = vunpack.c.l.b16 %v380
    %v1711 = vunpack.c.h.b16 %v380
    %v1712 = vunpack.c.l.b16 %v381
    %v1713 = vunpack.c.h.b16 %v381
    %v1714 = vunpack.c.l.b16 %v382
    %v1715 = vunpack.c.h.b16 %v382
    %v1716 = vunpack.c.l.b16 %v383
    %v1717 = vunpack.c.h.b16 %v383
    %v1718 = vunpack.c.l.b16 %v384
    %v1719 = vunpack.c.h.b16 %v384
    %v1720 = vunpack.c.l.b16 %v385
    %v1721 = vunpack.c.h.b16 %v385
    %v1722 = vunpack.c.l.b16 %v386
    %v1723 = vunpack.c.h.b16 %v386
    %v1724 = vunpack.c.l.b16 %v387
    %v1725 = vunpack.c.h.b16 %v387
    %v1726 = vunpack.c.l.b16 %v388
    %v1727 = vunpack.c.h.b16 %v388
    %v1728 = vunpack.c.l.b16 %v389
    %v1729 = vunpack.c.h.b16 %v389
    %v1730 = vunpack.c.l.b16 %v390
    %v1731 = vunpack.c.h.b16 %v390
    %v1732 = vunpack.c.l.b16 %v391
    %v1733 = vunpack.c.h.b16 %v391
    %v1734 = vunpack.c.l.b16 %v392
    %v1735 = vunpack.c.h.b16 %v392
    %v1736 = vunpack.c.l.b16 %v393
    %v1737 = vunpack.c.h.b16 %v393
    %v1738 = vunpack.c.l.b16 %v394
    %v1739 = vunpack.c.h.b16 %v394
    %v1740 = vunpack.c.l.b16 %v395
    %v1741 = vunpack.c.h.b16 %v395
    %v1742 = vunpack.c.l.b16 %v396
    %v1743 = vunpack.c.h.b16 %v396
    %v1744 = vunpack.c.l.b16 %v397
    %v1745 = vunpack.c.h.b16 %v397
    %v1746 = vunpack.c.l.b16 %v398
    %v1747 = vunpack.c.h.b16 %v398
    %v1748 = vunpack.c.l.b16 %v399
    %v1749 = vunpack.c.h.b16 %v399
    %v1750 = vunpack.c.l.b16 %v400
    %v1751 = vunpack.c.h.b16 %v400
    %v1752 = vunpack.c.l.b16 %v401
    %v1753 = vunpack.c.h.b16 %v401
    %v1754 = vunpack.c.l.b16 %v402
    %v1755 = vunpack.c.h.b16 %v402
    %v1756 = vunpack.c.l.b16 %v403
    %v1757 = vunpack.c.h.b16 %v403
    %v1758 = vunpack.c.l.b16 %v404
    %v1759 = vunpack.c.h.b16 %v404
    %v1760 = vunpack.c.l.b16 %v405
    %v1761 = vunpack.c.h.b16 %v405
    %v1762 = vunpack.c.l.b16 %v406
    %v1763 = vunpack.c.h.b16 %v406
    %v1764 = vunpack.c.l.b16 %v407
    %v1765 = vunpack.c.h.b16 %v407
    %v1766 = vunpack.c.l.b16 %v408
    %v1767 = vunpack.c.h.b16 %v408
    %v1768 = vunpack.c.l.b16 %v409
    %v1769 = vunpack.c.h.b16 %v409
    %v1770 = vunpack.c.l.b16 %v410
    %v1771 = vunpack.c.h.b16 %v410
    %v1772 = vunpack.c.l.b16 %v411
    %v1773 = vunpack.c.h.b16 %v411
    %v1774 = vunpack.c.l.b16 %v412
    %v1775 = vunpack.c.h.b16 %v412
    %v1776 = vunpack.c.l.b16 %v413
    %v1777 = vunpack.c.h.b16 %v413
    %v1778 = vunpack.c.l.b16 %v414
    %v1779 = vunpack.c.h.b16 %v414
    %v1780 = vunpack.c.l.b16 %v415
    %v1781 = vunpack.c.h.b16 %v415
    %v1782 = vunpack.c.l.b16 %v416
    %v1783 = vunpack.c.h.b16 %v416
    %v1784 = vunpack.c.l.b16 %v417
    %v1785 = vunpack.c.h.b16 %v417
    %v1786 = vunpack.c.l.b16 %v418
    %v1787 = vunpack.c.h.b16 %v418
    %v1788 = vunpack.c.l.b16 %v419
    %v1789 = vunpack.c.h.b16 %v419
    %v1790 = vunpack.c.l.b16 %v420
    %v1791 = vunpack.c.h.b16 %v420
    %v1792 = vunpack.c.l.b16 %v421
    %v1793 = vunpack.c.h.b16 %v421
    %v1794 = vunpack.c.l.b16 %v422
    %v1795 = vunpack.c.h.b16 %v422
    %v1796 = vunpack.c.l.b16 %v423
    %v1797 = vunpack.c.h.b16 %v423
    %v1798 = vunpack.c.l.b16 %v424
    %v1799 = vunpack.c.h.b16 %v424
    %v1800 = vunpack.c.l.b16 %v425
    %v1801 = vunpack.c.h.b16 %v425
    %v1802 = vunpack.c.l.b16 %v426
    %v1803 = vunpack.c.h.b16 %v426
    %v1804 = vunpack.c.l.b16 %v427
    %v1805 = vunpack.c.h.b16 %v427
    %v1806 = vunpack.c.l.b16 %v428
    %v1807 = vunpack.c.h.b16 %v428
    %v1808 = vunpack.c.l.b16 %v429
    %v1809 = vunpack.c.h.b16 %v429
    %v1810 = vunpack.c.l.b16 %v430
    %v1811 = vunpack.c.h.b16 %v430
    %v1812 = vunpack.c.l.b16 %v431
    %v1813 = vunpack.c.h.b16 %v431
    %v1814 = vunpack.c.l.b16 %v432
    %v1815 = vunpack.c.h.b16 %v432
    %v1816 = vunpack.c.l.b16 %v433
    %v1817 = vunpack.c.h.b16 %v433
    %v1818 = vunpack.c.l.b16 %v434
    %v1819 = vunpack.c.h.b16 %v434
    %v1820 = vunpack.c.l.b16 %v435
    %v1821 = vunpack.c.h.b16 %v435
    %v1822 = vunpack.c.l.b16 %v436
    %v1823 = vunpack.c.h.b16 %v436
    %v1824 = vunpack.c.l.b16 %v437
    %v1825 = vunpack.c.h.b16 %v437
    %v1826 = vunpack.c.l.b16 %v438
    %v1827 = vunpack.c.h.b16 %v438
    %v1828 = vunpack.c.l.b16 %v439
    %v1829 = vunpack.c.h.b16 %v439
    %v1830 = vunpack.c.l.b16 %v440
    %v1831 = vunpack.c.h.b16 %v440
    %v1832 = vunpack.c.l.b16 %v441
    %v1833 = vunpack.c.h.b16 %v441
    %v1834 = vunpack.c.l.b16 %v442
    %v1835 = vunpack.c.h.b16 %v442
    %v1836 = vunpack.c.l.b16 %v443
    %v1837 = vunpack.c.h.b16 %v443
    %v1838 = vunpack.c.l.b16 %v444
    %v1839 = vunpack.c.h.b16 %v444
    %v1840 = vunpack.c.l.b16 %v445
    %v1841 = vunpack.c.h.b16 %v445
    %v1842 = vunpack.c.l.b16 %v446
    %v1843 = vunpack.c.h.b16 %v446
    %v1844 = vunpack.c.l.b16 %v447
    %v1845 = vunpack.c.h.b16 %v447
    %v1846 = vunpack.c.l.b16 %v448
    %v1847 = vunpack.c.h.b16 %v448
    %v1848 = vunpack.c.l.b16 %v449
    %v1849 = vunpack.c.h.b16 %v449
    %v1850 = vunpack.c.l.b16 %v450
    %v1851 = vunpack.c.h.b16 %v450
    %v1852 = vunpack.c.l.b16 %v451
    %v1853 = vunpack.c.h.b16 %v451
    %v1854 = vunpack.c.l.b16 %v452
    %v1855 = vunpack.c.h.b16 %v452
    %v1856 = vunpack.c.l.b16 %v453
    %v1857 = vunpack.c.h.b16 %v453
    %v1858 = vunpack.c.l.b16 %v454
    %v1859 = vunpack.c.h.b16 %v454
    %v1860 = vunpack.c.l.b16 %v455
    %v1861 = vunpack.c.h.b16 %v455
    %v1862 = vunpack.c.l.b16 %v456
    %v1863 = vunpack.c.h.b16 %v456
    %v1864 = vunpack.c.l.b16 %v457
    %v1865 = vunpack.c.h.b16 %v457
    %v1866 = vunpack.c.l.b16 %v458
    %v1867 = vunpack.c.h.b16 %v458
    %v1868 = vunpack.c.l.b16 %v459
    %v1869 = vunpack.c.h.b16 %v459
    %v1870 = vunpack.c.l.b16 %v460
    %v1871 = vunpack.c.h.b16 %v460
    %v1872 = vunpack.c.l.b16 %v461
    %v1873 = vunpack.c.h.b16 %v461
    %v1874 = vunpack.c.l.b16 %v462
    %v1875 = vunpack.c.h.b16 %v462
    %v1876 = vunpack.c.l.b16 %v463
    %v1877 = vunpack.c.h.b16 %v463
    %v1878 = vunpack.c.l.b16 %v464
    %v1879 = vunpack.c.h.b16 %v464
    %v1880 = vunpack.c.l.b16 %v465
    %v1881 = vunpack.c.h.b16 %v465
    %v1882 = vunpack.c.l.b16 %v466
    %v1883 = vunpack.c.h.b16 %v466
    %v1884 = vunpack.c.l.b16 %v467
    %v1885 = vunpack.c.h.b16 %v467
    %v1886 = vunpack.c.l.b16 %v468
    %v1887 = vunpack.c.h.b16 %v468
    %v1888 = vunpack.c.l.b16 %v469
    %v1889 = vunpack.c.h.b16 %v469
    %v1890 = vunpack.c.l.b16 %v470
    %v1891 = vunpack.c.h.b16 %v470
    %v1892 = vunpack.c.l.b16 %v471
    %v1893 = vunpack.c.h.b16 %v471
    %v1894 = vunpack.c.l.b16 %v472
    %v1895 = vunpack.c.h.b16 %v472
    %v1896 = vunpack.c.l.b16 %v473
    %v1897 = vunpack.c.h.b16 %v473
    %v1898 = vunpack.c.l.b16 %v474
    %v1899 = vunpack.c.h.b16 %v474
    %v1900 = vunpack.c.l.b16 %v475
    %v1901 = vunpack.c.h.b16 %v475
    %v1902 = vunpack.c.l.b16 %v476
    %v1903 = vunpack.c.h.b16 %v476
    %v1904 = vunpack.c.l.b16 %v477
    %v1905 = vunpack.c.h.b16 %v477
    %v1906 = vunpack.c.l.b16 %v478
    %v1907 = vunpack.c.h.b16 %v478
    %v1908 = vunpack.c.l.b16 %v479
    %v1909 = vunpack.c.h.b16 %v479
    %v1910 = vunpack.c.l.b16 %v480
    %v1911 = vunpack.c.h.b16 %v480
    %v1912 = vunpack.c.l.b16 %v481
    %v1913 = vunpack.c.h.b16 %v481
    %v1914 = vunpack.c.l.b16 %v482
    %v1915 = vunpack.c.h.b16 %v482
    %v1916 = vunpack.c.l.b16 %v483
    %v1917 = vunpack.c.h.b16 %v483
    %v1918 = vunpack.c.l.b16 %v484
    %v1919 = vunpack.c.h.b16 %v484
    %v1920 = vunpack.c.l.b16 %v485
    %v1921 = vunpack.c.h.b16 %v485
    %v1922 = vunpack.c.l.b16 %v486
    %v1923 = vunpack.c.h.b16 %v486
    %v1924 = vunpack.c.l.b16 %v487
    %v1925 = vunpack.c.h.b16 %v487
    %v1926 = vunpack.c.l.b16 %v488
    %v1927 = vunpack.c.h.b16 %v488
    %v1928 = vunpack.c.l.b16 %v489
    %v1929 = vunpack.c.h.b16 %v489
    %v1930 = vunpack.c.l.b16 %v490
    %v1931 = vunpack.c.h.b16 %v490
    %v1932 = vunpack.c.l.b16 %v491
    %v1933 = vunpack.c.h.b16 %v491
    %v1934 = vunpack.c.l.b16 %v492
    %v1935 = vunpack.c.h.b16 %v492
    %v1936 = vunpack.c.l.b16 %v493
    %v1937 = vunpack.c.h.b16 %v493
    %v1938 = vunpack.c.l.b16 %v494
    %v1939 = vunpack.c.h.b16 %v494
    %v1940 = vunpack.c.l.b16 %v495
    %v1941 = vunpack.c.h.b16 %v495
    %v1942 = vunpack.c.l.b16 %v496
    %v1943 = vunpack.c.h.b16 %v496
    %v1944 = vunpack.c.l.b16 %v497
    %v1945 = vunpack.c.h.b16 %v497
    %v1946 = vunpack.c.l.b16 %v498
    %v1947 = vunpack.c.h.b16 %v498
    %v1948 = vunpack.c.l.b16 %v499
    %v1949 = vunpack.c.h.b16 %v499
    %v1950 = vunpack.c.l.b16 %v500
    %v1951 = vunpack.c.h.b16 %v500
    %v1952 = vunpack.c.l.b16 %v501
    %v1953 = vunpack.c.h.b16 %v501
    %v1954 = vunpack.c.l.b16 %v502
    %v1955 = vunpack.c.h.b16 %v502
    %v1956 = vunpack.c.l.b16 %v503
    %v1957 = vunpack.c.h.b16 %v503
    %v1958 = vunpack.c.l.b16 %v504
    %v1959 = vunpack.c.h.b16 %v504
    %v1960 = vunpack.c.l.b16 %v505
    %v1961 = vunpack.c.h.b16 %v505
    %v1962 = vunpack.c.l.b16 %v506
    %v1963 = vunpack.c.h.b16 %v506
    %v1964 = vunpack.c.l.b16 %v507
    %v1965 = vunpack.c.h.b16 %v507
    %v1966 = vunpack.c.l.b16 %v508
    %v1967 = vunpack.c.h.b16 %v508
    %v1968 = vunpack.c.l.b16 %v509
    %v1969 = vunpack.c.h.b16 %v509
    %v1970 = vunpack.c.l.b16 %v510
    %v1971 = vunpack.c.h.b16 %v510
    %v1972 = vunpack.c.l.b16 %v511
    %v1973 = vunpack.c.h.b16 %v511
    %v1974 = vunpack.c.l.b16 %v512
    %v1975 = vunpack.c.h.b16 %v512
    %v1976 = vunpack.c.l.b16 %v513
    %v1977 = vunpack.c.h.b16 %v513
    %v1978 = vunpack.c.l.b16 %v514
    %v1979 = vunpack.c.h.b16 %v514
    %v1980 = vunpack.c.l.b16 %v515
    %v1981 = vunpack.c.h.b16 %v515
    %v1982 = vunpack.c.l.b16 %v516
    %v1983 = vunpack.c.h.b16 %v516
    %v1984 = vunpack.c.l.b16 %v517
    %v1985 = vunpack.c.h.b16 %v517
    %v1986 = vunpack.c.l.b16 %v518
    %v1987 = vunpack.c.h.b16 %v518
    %v1988 = vunpack.c.l.b16 %v519
    %v1989 = vunpack.c.h.b16 %v519
    %v1990 = vunpack.c.l.b16 %v520
    %v1991 = vunpack.c.h.b16 %v520
    %v1992 = vunpack.c.l.b16 %v521
    %v1993 = vunpack.c.h.b16 %v521
    %v1994 = vunpack.c.l.b16 %v522
    %v1995 = vunpack.c.h.b16 %v522
    %v1996 = vunpack.c.l.b16 %v523
    %v1997 = vunpack.c.h.b16 %v523
    %v1998 = vunpack.c.l.b16 %v524
    %v1999 = vunpack.c.h.b16 %v524
    %v2000 = vunpack.c.l.b16 %v525
    %v2001 = vunpack.c.h.b16 %v525
    %v2002 = vunpack.c.l.b16 %v526
    %v2003 = vunpack.c.h.b16 %v526
    %v2004 = vunpack.c.l.b16 %v527
    %v2005 = vunpack.c.h.b16 %v527
    %v2006 = vunpack.c.l.b16 %v528
    %v2007 = vunpack.c.h.b16 %v528
    %v2008 = vunpack.c.l.b16 %v529
    %v2009 = vunpack.c.h.b16 %v529
    %v2010 = vunpack.c.l.b16 %v530
    %v2011 = vunpack.c.h.b16 %v530
    %v2012 = vunpack.c.l.b16 %v531
    %v2013 = vunpack.c.h.b16 %v531
    %v2014 = vunpack.c.l.b16 %v532
    %v2015 = vunpack.c.h.b16 %v532
    %v2016 = vunpack.c.l.b16 %v533
    %v2017 = vunpack.c.h.b16 %v533
    %v2018 = vunpack.c.l.b16 %v534
    %v2019 = vunpack.c.h.b16 %v534
    %v2020 = vunpack.c.l.b16 %v535
    %v2021 = vunpack.c.h.b16 %v535
    %v2022 = vunpack.c.l.b16 %v536
    %v2023 = vunpack.c.h.b16 %v536
    %v2024 = vunpack.c.l.b16 %v537
    %v2025 = vunpack.c.h.b16 %v537
    %v2026 = vunpack.c.l.b16 %v538
    %v2027 = vunpack.c.h.b16 %v538
    %v2028 = vunpack.c.l.b16 %v539
    %v2029 = vunpack.c.h.b16 %v539
    %v2030 = vunpack.c.l.b16 %v540
    %v2031 = vunpack.c.h.b16 %v540
    %v2032 = vunpack.c.l.b16 %v541
    %v2033 = vunpack.c.h.b16 %v541
    %v2034 = vunpack.c.l.b16 %v542
    %v2035 = vunpack.c.h.b16 %v542
    %v2036 = vunpack.c.l.b16 %v543
    %v2037 = vunpack.c.h.b16 %v543
    %v2038 = vunpack.c.l.b16 %v544
    %v2039 = vunpack.c.h.b16 %v544
    %v2040 = vunpack.c.l.b16 %v545
    %v2041 = vunpack.c.h.b16 %v545
    %v2042 = vunpack.c.l.b16 %v546
    %v2043 = vunpack.c.h.b16 %v546
    %v2044 = vunpack.c.l.b16 %v547
    %v2045 = vunpack.c.h.b16 %v547
    %v2046 = vunpack.c.l.b16 %v548
    %v2047 = vunpack.c.h.b16 %v548
    %v2048 = vunpack.c.l.b16 %v549
    %v2049 = vunpack.c.h.b16 %v549
    %v2050 = vunpack.c.l.b16 %v550
    %v2051 = vunpack.c.h.b16 %v550
    %v2052 = vunpack.c.l.b16 %v551
    %v2053 = vunpack.c.h.b16 %v551
    %v2054 = vunpack.c.l.b16 %v552
    %v2055 = vunpack.c.h.b16 %v552
    %v2056 = vunpack.c.l.b16 %v553
    %v2057 = vunpack.c.h.b16 %v553
    %v2058 = vunpack.c.l.b16 %v554
    %v2059 = vunpack.c.h.b16 %v554
    %v2060 = vunpack.c.l.b16 %v555
    %v2061 = vunpack.c.h.b16 %v555
    %v2062 = vunpack.c.l.b16 %v556
    %v2063 = vunpack.c.h.b16 %v556
    %v2064 = vunpack.c.l.b16 %v557
    %v2065 = vunpack.c.h.b16 %v557
    %v2066 = vunpack.c.l.b16 %v558
    %v2067 = vunpack.c.h.b16 %v558
    %v2068 = vunpack.c.l.b16 %v559
    %v2069 = vunpack.c.h.b16 %v559
    %v2070 = vunpack.c.l.b16 %v560
    %v2071 = vunpack.c.h.b16 %v560
    %v2072 = vunpack.c.l.b16 %v561
    %v2073 = vunpack.c.h.b16 %v561
    %v2074 = vunpack.c.l.b16 %v562
    %v2075 = vunpack.c.h.b16 %v562
    %v2076 = vunpack.c.l.b16 %v563
    %v2077 = vunpack.c.h.b16 %v563
    %v2078 = vunpack.c.l.b16 %v564
    %v2079 = vunpack.c.h.b16 %v564
    %v2080 = vunpack.c.l.b16 %v565
    %v2081 = vunpack.c.h.b16 %v565
    %v2082 = vunpack.c.l.b16 %v566
    %v2083 = vunpack.c.h.b16 %v566
    %v2084 = vunpack.c.l.b16 %v567
    %v2085 = vunpack.c.h.b16 %v567
    %v2086 = vunpack.c.l.b16 %v568
    %v2087 = vunpack.c.h.b16 %v568
    %v2088 = vunpack.c.l.b16 %v569
    %v2089 = vunpack.c.h.b16 %v569
    %v2090 = vunpack.c.l.b16 %v570
    %v2091 = vunpack.c.h.b16 %v570
    %v2092 = vunpack.c.l.b16 %v571
    %v2093 = vunpack.c.h.b16 %v571
    %v2094 = vunpack.c.l.b16 %v572
    %v2095 = vunpack.c.h.b16 %v572
    %v2096 = vunpack.c.l.b16 %v573
    %v2097 = vunpack.c.h.b16 %v573
    %v2098 = vunpack.c.l.b16 %v574
    %v2099 = vunpack.c.h.b16 %v574
    %v2100 = vunpack.c.l.b16 %v575
    %v2101 = vunpack.c.h.b16 %v575
    %v2102 = vunpack.c.l.b16 %v576
    %v2103 = vunpack.c.h.b16 %v576
    %v2104 = vunpack.c.l.b16 %v577
    %v2105 = vunpack.c.h.b16 %v577
    %v2106 = vunpack.c.l.b16 %v578
    %v2107 = vunpack.c.h.b16 %v578
    %v2108 = vunpack.c.l.b16 %v579
    %v2109 = vunpack.c.h.b16 %v579
    %v2110 = vunpack.c.l.b16 %v580
    %v2111 = vunpack.c.h.b16 %v580
    %v2112 = vunpack.c.l.b16 %v581
    %v2113 = vunpack.c.h.b16 %v581
    %v2114 = vunpack.c.l.b16 %v582
    %v2115 = vunpack.c.h.b16 %v582
    %v2116 = vunpack.c.l.b16 %v583
    %v2117 = vunpack.c.h.b16 %v583
    %v2118 = vunpack.c.l.b16 %v584
    %v2119 = vunpack.c.h.b16 %v584
    %v2120 = vunpack.c.l.b16 %v585
    %v2121 = vunpack.c.h.b16 %v585
    %v2122 = vunpack.c.l.b16 %v586
    %v2123 = vunpack.c.h.b16 %v586
    %v2124 = vunpack.c.l.b16 %v587
    %v2125 = vunpack.c.h.b16 %v587
    %v2126 = vunpack.c.l.b16 %v588
    %v2127 = vunpack.c.h.b16 %v588
    %v2128 = vunpack.c.l.b16 %v589
    %v2129 = vunpack.c.h.b16 %v589
    %v2130 = vunpack.c.l.b16 %v590
    %v2131 = vunpack.c.h.b16 %v590
    %v2132 = vunpack.c.l.b16 %v591
    %v2133 = vunpack.c.h.b16 %v591
    %v2134 = vunpack.c.l.b16 %v592
    %v2135 = vunpack.c.h.b16 %v592
    %v2136 = vunpack.c.l.b16 %v593
    %v2137 = vunpack.c.h.b16 %v593
    %v2138 = vunpack.c.l.b16 %v594
    %v2139 = vunpack.c.h.b16 %v594
    %v2140 = vunpack.c.l.b16 %v595
    %v2141 = vunpack.c.h.b16 %v595
    %v2142 = vunpack.c.l.b16 %v596
    %v2143 = vunpack.c.h.b16 %v596
    %v2144 = vunpack.c.l.b16 %v597
    %v2145 = vunpack.c.h.b16 %v597
    %v2146 = vunpack.c.l.b16 %v598
    %v2147 = vunpack.c.h.b16 %v598
    %v2148 = vunpack.c.l.b16 %v599
    %v2149 = vunpack.c.h.b16 %v599
    %v2150 = vunpack.c.l.b16 %v600
    %v2151 = vunpack.c.h.b16 %v600
    %v2152 = vunpack.c.l.b16 %v601
    %v2153 = vunpack.c.h.b16 %v601
    %v2154 = vunpack.c.l.b16 %v602
    %v2155 = vunpack.c.h.b16 %v602
    %v2156 = vunpack.c.l.b16 %v603
    %v2157 = vunpack.c.h.b16 %v603
    %v2158 = vunpack.c.l.b16 %v604
    %v2159 = vunpack.c.h.b16 %v604
    %v2160 = vunpack.c.l.b16 %v605
    %v2161 = vunpack.c.h.b16 %v605
    %v2162 = vunpack.c.l.b16 %v606
    %v2163 = vunpack.c.h.b16 %v606
    %v2164 = vunpack.c.l.b16 %v607
    %v2165 = vunpack.c.h.b16 %v607
    %v2166 = vunpack.c.l.b16 %v608
    %v2167 = vunpack.c.h.b16 %v608
    %v2168 = vunpack.c.l.b16 %v609
    %v2169 = vunpack.c.h.b16 %v609
    %v2170 = vunpack.c.l.b16 %v610
    %v2171 = vunpack.c.h.b16 %v610
    %v2172 = vunpack.c.l.b16 %v611
    %v2173 = vunpack.c.h.b16 %v611
    %v2174 = vunpack.c.l.b16 %v612
    %v2175 = vunpack.c.h.b16 %v612
    %v2176 = vunpack.c.l.b16 %v613
    %v2177 = vunpack.c.h.b16 %v613
    %v2178 = vunpack.c.l.b16 %v614
    %v2179 = vunpack.c.h.b16 %v614
    %v2180 = vunpack.c.l.b16 %v615
    %v2181 = vunpack.c.h.b16 %v615
    %v2182 = vunpack.c.l.b16 %v616
    %v2183 = vunpack.c.h.b16 %v616
    %v2184 = vunpack.c.l.b16 %v617
    %v2185 = vunpack.c.h.b16 %v617
    %v2186 = vunpack.c.l.b16 %v618
    %v2187 = vunpack.c.h.b16 %v618
    %v2188 = vunpack.c.l.b16 %v619
    %v2189 = vunpack.c.h.b16 %v619
    %v2190 = vunpack.c.l.b16 %v620
    %v2191 = vunpack.c.h.b16 %v620
    %v2192 = vunpack.c.l.b16 %v621
    %v2193 = vunpack.c.h.b16 %v621
    %v2194 = vunpack.c.l.b16 %v622
    %v2195 = vunpack.c.h.b16 %v622
    %v2196 = vunpack.c.l.b16 %v623
    %v2197 = vunpack.c.h.b16 %v623
    %v2198 = vunpack.c.l.b16 %v624
    %v2199 = vunpack.c.h.b16 %v624
    %v2200 = vunpack.c.l.b16 %v625
    %v2201 = vunpack.c.h.b16 %v625
    %v2202 = vunpack.c.l.b16 %v626
    %v2203 = vunpack.c.h.b16 %v626
    %v2204 = vunpack.c.l.b16 %v627
    %v2205 = vunpack.c.h.b16 %v627
    %v2206 = vunpack.c.l.b16 %v628
    %v2207 = vunpack.c.h.b16 %v628
    %v2208 = vunpack.c.l.b16 %v629
    %v2209 = vunpack.c.h.b16 %v629
    %v2210 = vunpack.c.l.b16 %v630
    %v2211 = vunpack.c.h.b16 %v630
    %v2212 = vunpack.c.l.b16 %v631
    %v2213 = vunpack.c.h.b16 %v631
    %v2214 = vunpack.c.l.b16 %v632
    %v2215 = vunpack.c.h.b16 %v632
    %v2216 = vunpack.c.l.b16 %v633
    %v2217 = vunpack.c.h.b16 %v633
    %v2218 = vunpack.c.l.b16 %v634
    %v2219 = vunpack.c.h.b16 %v634
    %v2220 = vunpack.c.l.b16 %v635
    %v2221 = vunpack.c.h.b16 %v635
    %v2222 = vunpack.c.l.b16 %v636
    %v2223 = vunpack.c.h.b16 %v636
    %v2224 = vunpack.c.l.b16 %v637
    %v2225 = vunpack.c.h.b16 %v637
    %v2226 = vunpack.c.l.b16 %v638
    %v2227 = vunpack.c.h.b16 %v638
    %v2228 = vunpack.c.l.b16 %v639
    %v2229 = vunpack.c.h.b16 %v639
    %v2230 = vunpack.c.l.b16 %v640
    %v2231 = vunpack.c.h.b16 %v640
    %v2232 = vunpack.c.l.b16 %v641
    %v2233 = vunpack.c.h.b16 %v641
    %v2234 = vunpack.c.l.b16 %v642
    %v2235 = vunpack.c.h.b16 %v642
    %v2236 = vunpack.c.l.b16 %v643
    %v2237 = vunpack.c.h.b16 %v643
    %v2238 = vunpack.c.l.b16 %v644
    %v2239 = vunpack.c.h.b16 %v644
    %v2240 = vunpack.c.l.b16 %v645
    %v2241 = vunpack.c.h.b16 %v645
    %v2242 = vunpack.c.l.b16 %v646
    %v2243 = vunpack.c.h.b16 %v646
    %v2244 = vunpack.c.l.b16 %v647
    %v2245 = vunpack.c.h.b16 %v647
    %v2246 = vunpack.c.l.b16 %v648
    %v2247 = vunpack.c.h.b16 %v648
    %v2248 = vunpack.c.l.b16 %v649
    %v2249 = vunpack.c.h.b16 %v649
    %v2250 = vunpack.c.l.b16 %v650
    %v2251 = vunpack.c.h.b16 %v650
    %v2252 = vunpack.c.l.b16 %v651
    %v2253 = vunpack.c.h.b16 %v651
    %v2254 = vunpack.c.l.b16 %v652
    %v2255 = vunpack.c.h.b16 %v652
    %v2256 = vunpack.c.l.b16 %v653
    %v2257 = vunpack.c.h.b16 %v653
    %v2258 = vunpack.c.l.b16 %v654
    %v2259 = vunpack.c.h.b16 %v654
    %v2260 = vunpack.c.l.b16 %v655
    %v2261 = vunpack.c.h.b16 %v655
    %v2262 = vunpack.c.l.b16 %v656
    %v2263 = vunpack.c.h.b16 %v656
    %v2264 = vunpack.c.l.b16 %v657
    %v2265 = vunpack.c.h.b16 %v657
    %v2266 = vunpack.c.l.b16 %v658
    %v2267 = vunpack.c.h.b16 %v658
    %v2268 = vunpack.c.l.b16 %v659
    %v2269 = vunpack.c.h.b16 %v659
    %v2270 = vunpack.c.l.b16 %v660
    %v2271 = vunpack.c.h.b16 %v660
    %v2272 = vunpack.c.l.b16 %v661
    %v2273 = vunpack.c.h.b16 %v661
    %v2274 = vunpack.c.l.b16 %v662
    %v2275 = vunpack.c.h.b16 %v662
    %v2276 = vunpack.c.l.b16 %v663
    %v2277 = vunpack.c.h.b16 %v663
    %v2278 = vpack.c.b16 %v1258, %v1254
    %v2279 = vpack.c.b16 %v1259, %v1255
    %v2280 = vpack.c.b16 %v1260, %v1256
    %v2281 = vpack.c.b16 %v1261, %v1257
    %v2282 = vpack.c.b16 %v1266, %v1262
    %v2283 = vpack.c.b16 %v1267, %v1263
    %v2284 = vpack.c.b16 %v1268, %v1264
    %v2285 = vpack.c.b16 %v1269, %v1265
    %v2286 = vpack.c.b16 %v1274, %v1270
    %v2287 = vpack.c.b16 %v1275, %v1271
    %v2288 = vpack.c.b16 %v1276, %v1272
    %v2289 = vpack.c.b16 %v1277, %v1273
    %v2290 = vpack.c.b16 %v1282, %v1278
    %v2291 = vpack.c.b16 %v1283, %v1279
    %v2292 = vpack.c.b16 %v1284, %v1280
    %v2293 = vpack.c.b16 %v1285, %v1281
    %v2294 = vpack.c.b16 %v1290, %v1286
    %v2295 = vpack.c.b16 %v1291, %v1287
    %v2296 = vpack.c.b16 %v1292, %v1288
    %v2297 = vpack.c.b16 %v1293, %v1289
    %v2298 = vpack.c.b16 %v1298, %v1294
    %v2299 = vpack.c.b16 %v1299, %v1295
    %v2300 = vpack.c.b16 %v1300, %v1296
    %v2301 = vpack.c.b16 %v1301, %v1297
    %v2302 = vpack.c.b16 %v1306, %v1302
    %v2303 = vpack.c.b16 %v1307, %v1303
    %v2304 = vpack.c.b16 %v1308, %v1304
    %v2305 = vpack.c.b16 %v1309, %v1305
    %v2306 = vpack.c.b16 %v1314, %v1310
    %v2307 = vpack.c.b16 %v1315, %v1311
    %v2308 = vpack.c.b16 %v1316, %v1312
    %v2309 = vpack.c.b16 %v1317, %v1313
    %v2310 = vpack.c.b16 %v1322, %v1318
    %v2311 = vpack.c.b16 %v1323, %v1319
    %v2312 = vpack.c.b16 %v1324, %v1320
    %v2313 = vpack.c.b16 %v1325, %v1321
    %v2314 = vpack.c.b16 %v1330, %v1326
    %v2315 = vpack.c.b16 %v1331, %v1327
    %v2316 = vpack.c.b16 %v1332, %v1328
    %v2317 = vpack.c.b16 %v1333, %v1329
    %v2318 = vpack.c.b16 %v1338, %v1334
    %v2319 = vpack.c.b16 %v1339, %v1335
    %v2320 = vpack.c.b16 %v1340, %v1336
    %v2321 = vpack.c.b16 %v1341, %v1337
    %v2322 = vpack.c.b16 %v1346, %v1342
    %v2323 = vpack.c.b16 %v1347, %v1343
    %v2324 = vpack.c.b16 %v1348, %v1344
    %v2325 = vpack.c.b16 %v1349, %v1345
    %v2326 = vpack.c.b16 %v1354, %v1350
    %v2327 = vpack.c.b16 %v1355, %v1351
    %v2328 = vpack.c.b16 %v1356, %v1352
    %v2329 = vpack.c.b16 %v1357, %v1353
    %v2330 = vpack.c.b16 %v1362, %v1358
    %v2331 = vpack.c.b16 %v1363, %v1359
    %v2332 = vpack.c.b16 %v1364, %v1360
    %v2333 = vpack.c.b16 %v1365, %v1361
    %v2334 = vpack.c.b16 %v1370, %v1366
    %v2335 = vpack.c.b16 %v1371, %v1367
    %v2336 = vpack.c.b16 %v1372, %v1368
    %v2337 = vpack.c.b16 %v1373, %v1369
    %v2338 = vpack.c.b16 %v1378, %v1374
    %v2339 = vpack.c.b16 %v1379, %v1375
    %v2340 = vpack.c.b16 %v1380, %v1376
    %v2341 = vpack.c.b16 %v1381, %v1377
    %v2342 = vpack.c.b16 %v1386, %v1382
    %v2343 = vpack.c.b16 %v1387, %v1383
    %v2344 = vpack.c.b16 %v1388, %v1384
    %v2345 = vpack.c.b16 %v1389, %v1385
    %v2346 = vpack.c.b16 %v1394, %v1390
    %v2347 = vpack.c.b16 %v1395, %v1391
    %v2348 = vpack.c.b16 %v1396, %v1392
    %v2349 = vpack.c.b16 %v1397, %v1393
    %v2350 = vpack.c.b16 %v1402, %v1398
    %v2351 = vpack.c.b16 %v1403, %v1399
    %v2352 = vpack.c.b16 %v1404, %v1400
    %v2353 = vpack.c.b16 %v1405, %v1401
    %v2354 = vpack.c.b16 %v1410, %v1406
    %v2355 = vpack.c.b16 %v1411, %v1407
    %v2356 = vpack.c.b16 %v1412, %v1408
    %v2357 = vpack.c.b16 %v1413, %v1409
    %v2358 = vpack.c.b16 %v1418, %v1414
    %v2359 = vpack.c.b16 %v1419, %v1415
    %v2360 = vpack.c.b16 %v1420, %v1416
    %v2361 = vpack.c.b16 %v1421, %v1417
    %v2362 = vpack.c.b16 %v1426, %v1422
    %v2363 = vpack.c.b16 %v1427, %v1423
    %v2364 = vpack.c.b16 %v1428, %v1424
    %v2365 = vpack.c.b16 %v1429, %v1425
    %v2366 = vpack.c.b16 %v1434, %v1430
    %v2367 = vpack.c.b16 %v1435, %v1431
    %v2368 = vpack.c.b16 %v1436, %v1432
    %v2369 = vpack.c.b16 %v1437, %v1433
    %v2370 = vpack.c.b16 %v1442, %v1438
    %v2371 = vpack.c.b16 %v1443, %v1439
    %v2372 = vpack.c.b16 %v1444, %v1440
    %v2373 = vpack.c.b16 %v1445, %v1441
    %v2374 = vpack.c.b16 %v1450, %v1446
    %v2375 = vpack.c.b16 %v1451, %v1447
    %v2376 = vpack.c.b16 %v1452, %v1448
    %v2377 = vpack.c.b16 %v1453, %v1449
    %v2378 = vpack.c.b16 %v1458, %v1454
    %v2379 = vpack.c.b16 %v1459, %v1455
    %v2380 = vpack.c.b16 %v1460, %v1456
    %v2381 = vpack.c.b16 %v1461, %v1457
    %v2382 = vpack.c.b16 %v1466, %v1462
    %v2383 = vpack.c.b16 %v1467, %v1463
    %v2384 = vpack.c.b16 %v1468, %v1464
    %v2385 = vpack.c.b16 %v1469, %v1465
    %v2386 = vpack.c.b16 %v1474, %v1470
    %v2387 = vpack.c.b16 %v1475, %v1471
    %v2388 = vpack.c.b16 %v1476, %v1472
    %v2389 = vpack.c.b16 %v1477, %v1473
    %v2390 = vpack.c.b16 %v1482, %v1478
    %v2391 = vpack.c.b16 %v1483, %v1479
    %v2392 = vpack.c.b16 %v1484, %v1480
    %v2393 = vpack.c.b16 %v1485, %v1481
    %v2394 = vpack.c.b16 %v1490, %v1486
    %v2395 = vpack.c.b16 %v1491, %v1487
    %v2396 = vpack.c.b16 %v1492, %v1488
    %v2397 = vpack.c.b16 %v1493, %v1489
    %v2398 = vpack.c.b16 %v1498, %v1494
    %v2399 = vpack.c.b16 %v1499, %v1495
    %v2400 = vpack.c.b16 %v1500, %v1496
    %v2401 = vpack.c.b16 %v1501, %v1497
    %v2402 = vpack.c.b16 %v1506, %v1502
    %v2403 = vpack.c.b16 %v1507, %v1503
    %v2404 = vpack.c.b16 %v1508, %v1504
    %v2405 = vpack.c.b16 %v1509, %v1505
    %v2406 = vpack.c.b16 %v1514, %v1510
    %v2407 = vpack.c.b16 %v1515, %v1511
    %v2408 = vpack.c.b16 %v1516, %v1512
    %v2409 = vpack.c.b16 %v1517, %v1513
    %v2410 = vpack.c.b16 %v1522, %v1518
    %v2411 = vpack.c.b16 %v1523, %v1519
    %v2412 = vpack.c.b16 %v1524, %v1520
    %v2413 = vpack.c.b16 %v1525, %v1521
    %v2414 = vpack.c.b16 %v1530, %v1526
    %v2415 = vpack.c.b16 %v1531, %v1527
    %v2416 = vpack.c.b16 %v1532, %v1528
    %v2417 = vpack.c.b16 %v1533, %v1529
    %v2418 = vpack.c.b16 %v1538, %v1534
    %v2419 = vpack.c.b16 %v1539, %v1535
    %v2420 = vpack.c.b16 %v1540, %v1536
    %v2421 = vpack.c.b16 %v1541, %v1537
    %v2422 = vpack.c.b16 %v1546, %v1542
    %v2423 = vpack.c.b16 %v1547, %v1543
    %v2424 = vpack.c.b16 %v1548, %v1544
    %v2425 = vpack.c.b16 %v1549, %v1545
    %v2426 = vpack.c.b16 %v1554, %v1550
    %v2427 = vpack.c.b16 %v1555, %v1551
    %v2428 = vpack.c.b16 %v1556, %v1552
    %v2429 = vpack.c.b16 %v1557, %v1553
    %v2430 = vpack.c.b16 %v1562, %v1558
    %v2431 = vpack.c.b16 %v1563, %v1559
    %v2432 = vpack.c.b16 %v1564, %v1560
    %v2433 = vpack.c.b16 %v1565, %v1561
    %v2434 = vpack.c.b16 %v1570, %v1566
    %v2435 = vpack.c.b16 %v1571, %v1567
    %v2436 = vpack.c.b16 %v1572, %v1568
    %v2437 = vpack.c.b16 %v1573, %v1569
    %v2438 = vpack.c.b16 %v1578, %v1574
    %v2439 = vpack.c.b16 %v1579, %v1575
    %v2440 = vpack.c.b16 %v1580, %v1576
    %v2441 = vpack.c.b16 %v1581, %v1577
    %v2442 = vpack.c.b16 %v1586, %v1582
    %v2443 = vpack.c.b16 %v1587, %v1583
    %v2444 = vpack.c.b16 %v1588, %v1584
    %v2445 = vpack.c.b16 %v1589, %v1585
    %v2446 = vpack.c.b16 %v1594, %v1590
    %v2447 = vpack.c.b16 %v1595, %v1591
    %v2448 = vpack.c.b16 %v1596, %v1592
    %v2449 = vpack.c.b16 %v1597, %v1593
    %v2450 = vpack.c.b16 %v1602, %v1598
    %v2451 = vpack.c.b16 %v1603, %v1599
    %v2452 = vpack.c.b16 %v1604, %v1600
    %v2453 = vpack.c.b16 %v1605, %v1601
    %v2454 = vpack.c.b16 %v1610, %v1606
    %v2455 = vpack.c.b16 %v1611, %v1607
    %v2456 = vpack.c.b16 %v1612, %v1608
    %v2457 = vpack.c.b16 %v1613, %v1609
    %v2458 = vpack.c.b16 %v1618, %v1614
    %v2459 = vpack.c.b16 %v1619, %v1615
    %v2460 = vpack.c.b16 %v1620, %v1616
    %v2461 = vpack.c.b16 %v1621, %v1617
    %v2462 = vpack.c.b16 %v1626, %v1622
    %v2463 = vpack.c.b16 %v1627, %v1623
    %v2464 = vpack.c.b16 %v1628, %v1624
    %v2465 = vpack.c.b16 %v1629, %v1625
    %v2466 = vpack.c.b16 %v1634, %v1630
    %v2467 = vpack.c.b16 %v1635, %v1631
    %v2468 = vpack.c.b16 %v1636, %v1632
    %v2469 = vpack.c.b16 %v1637, %v1633
    %v2470 = vpack.c.b16 %v1642, %v1638
    %v2471 = vpack.c.b16 %v1643, %v1639
    %v2472 = vpack.c.b16 %v1644, %v1640
    %v2473 = vpack.c.b16 %v1645, %v1641
    %v2474 = vpack.c.b16 %v1650, %v1646
    %v2475 = vpack.c.b16 %v1651, %v1647
    %v2476 = vpack.c.b16 %v1652, %v1648
    %v2477 = vpack.c.b16 %v1653, %v1649
    %v2478 = vpack.c.b16 %v1658, %v1654
    %v2479 = vpack.c.b16 %v1659, %v1655
    %v2480 = vpack.c.b16 %v1660, %v1656
    %v2481 = vpack.c.b16 %v1661, %v1657
    %v2482 = vpack.c.b16 %v1666, %v1662
    %v2483 = vpack.c.b16 %v1667, %v1663
    %v2484 = vpack.c.b16 %v1668, %v1664
    %v2485 = vpack.c.b16 %v1669, %v1665
    %v2486 = vpack.c.b16 %v1674, %v1670
    %v2487 = vpack.c.b16 %v1675, %v1671
    %v2488 = vpack.c.b16 %v1676, %v1672
    %v2489 = vpack.c.b16 %v1677, %v1673
    %v2490 = vpack.c.b16 %v1682, %v1678
    %v2491 = vpack.c.b16 %v1683, %v1679
    %v2492 = vpack.c.b16 %v1684, %v1680
    %v2493 = vpack.c.b16 %v1685, %v1681
    %v2494 = vpack.c.b16 %v1690, %v1686
    %v2495 = vpack.c.b16 %v1691, %v1687
    %v2496 = vpack.c.b16 %v1692, %v1688
    %v2497 = vpack.c.b16 %v1693, %v1689
    %v2498 = vpack.c.b16 %v1698, %v1694
    %v2499 = vpack.c.b16 %v1699, %v1695
    %v2500 = vpack.c.b16 %v1700, %v1696
    %v2501 = vpack.c.b16 %v1701, %v1697
    %v2502 = vpack.c.b16 %v1706, %v1702
    %v2503 = vpack.c.b16 %v1707, %v1703
    %v2504 = vpack.c.b16 %v1708, %v1704
    %v2505 = vpack.c.b16 %v1709, %v1705
    %v2506 = vpack.c.b16 %v1714, %v1710
    %v2507 = vpack.c.b16 %v1715, %v1711
    %v2508 = vpack.c.b16 %v1716, %v1712
    %v2509 = vpack.c.b16 %v1717, %v1713
    %v2510 = vpack.c.b16 %v1722, %v1718
    %v2511 = vpack.c.b16 %v1723, %v1719
    %v2512 = vpack.c.b16 %v1724, %v1720
    %v2513 = vpack.c.b16 %v1725, %v1721
    %v2514 = vpack.c.b16 %v1730, %v1726
    %v2515 = vpack.c.b16 %v1731, %v1727
    %v2516 = vpack.c.b16 %v1732, %v1728
    %v2517 = vpack.c.b16 %v1733, %v1729
    %v2518 = vpack.c.b16 %v1738, %v1734
    %v2519 = vpack.c.b16 %v1739, %v1735
    %v2520 = vpack.c.b16 %v1740, %v1736
    %v2521 = vpack.c.b16 %v1741, %v1737
    %v2522 = vpack.c.b16 %v1746, %v1742
    %v2523 = vpack.c.b16 %v1747, %v1743
    %v2524 = vpack.c.b16 %v1748, %v1744
    %v2525 = vpack.c.b16 %v1749, %v1745
    %v2526 = vpack.c.b16 %v1754, %v1750
    %v2527 = vpack.c.b16 %v1755, %v1751
    %v2528 = vpack.c.b16 %v1756, %v1752
    %v2529 = vpack.c.b16 %v1757, %v1753
    %v2530 = vpack.c.b16 %v1762, %v1758
    %v2531 = vpack.c.b16 %v1763, %v1759
    %v2532 = vpack.c.b16 %v1764, %v1760
    %v2533 = vpack.c.b16 %v1765, %v1761
    %v2534 = vpack.c.b16 %v1770, %v1766
    %v2535 = vpack.c.b16 %v1771, %v1767
    %v2536 = vpack.c.b16 %v1772, %v1768
    %v2537 = vpack.c.b16 %v1773, %v1769
    %v2538 = vpack.c.b16 %v1778, %v1774
    %v2539 = vpack.c.b16 %v1779, %v1775
    %v2540 = vpack.c.b16 %v1780, %v1776
    %v2541 = vpack.c.b16 %v1781, %v1777
    %v2542 = vpack.c.b16 %v1786, %v1782
    %v2543 = vpack.c.b16 %v1787, %v1783
    %v2544 = vpack.c.b16 %v1788, %v1784
    %v2545 = vpack.c.b16 %v1789, %v1785
    %v2546 = vpack.c.b16 %v1794, %v1790
    %v2547 = vpack.c.b16 %v1795, %v1791
    %v2548 = vpack.c.b16 %v1796, %v1792
    %v2549 = vpack.c.b16 %v1797, %v1793
    %v2550 = vpack.c.b16 %v1802, %v1798
    %v2551 = vpack.c.b16 %v1803, %v1799
    %v2552 = vpack.c.b16 %v1804, %v1800
    %v2553 = vpack.c.b16 %v1805, %v1801
    %v2554 = vpack.c.b16 %v1810, %v1806
    %v2555 = vpack.c.b16 %v1811, %v1807
    %v2556 = vpack.c.b16 %v1812, %v1808
    %v2557 = vpack.c.b16 %v1813, %v1809
    %v2558 = vpack.c.b16 %v1818, %v1814
    %v2559 = vpack.c.b16 %v1819, %v1815
    %v2560 = vpack.c.b16 %v1820, %v1816
    %v2561 = vpack.c.b16 %v1821, %v1817
    %v2562 = vpack.c.b16 %v1826, %v1822
    %v2563 = vpack.c.b16 %v1827, %v1823
    %v2564 = vpack.c.b16 %v1828, %v1824
    %v2565 = vpack.c.b16 %v1829, %v1825
    %v2566 = vpack.c.b16 %v1834, %v1830
    %v2567 = vpack.c.b16 %v1835, %v1831
    %v2568 = vpack.c.b16 %v1836, %v1832
    %v2569 = vpack.c.b16 %v1837, %v1833
    %v2570 = vpack.c.b16 %v1842, %v1838
    %v2571 = vpack.c.b16 %v1843, %v1839
    %v2572 = vpack.c.b16 %v1844, %v1840
    %v2573 = vpack.c.b16 %v1845, %v1841
    %v2574 = vpack.c.b16 %v1850, %v1846
    %v2575 = vpack.c.b16 %v1851, %v1847
    %v2576 = vpack.c.b16 %v1852, %v1848
    %v2577 = vpack.c.b16 %v1853, %v1849
    %v2578 = vpack.c.b16 %v1858, %v1854
    %v2579 = vpack.c.b16 %v1859, %v1855
    %v2580 = vpack.c.b16 %v1860, %v1856
    %v2581 = vpack.c.b16 %v1861, %v1857
    %v2582 = vpack.c.b16 %v1866, %v1862
    %v2583 = vpack.c.b16 %v1867, %v1863
    %v2584 = vpack.c.b16 %v1868, %v1864
    %v2585 = vpack.c.b16 %v1869, %v1865
    %v2586 = vpack.c.b16 %v1874, %v1870
    %v2587 = vpack.c.b16 %v1875, %v1871
    %v2588 = vpack.c.b16 %v1876, %v1872
    %v2589 = vpack.c.b16 %v1877, %v1873
    %v2590 = vpack.c.b16 %v1882, %v1878
    %v2591 = vpack.c.b16 %v1883, %v1879
    %v2592 = vpack.c.b16 %v1884, %v1880
    %v2593 = vpack.c.b16 %v1885, %v1881
    %v2594 = vpack.c.b16 %v1890, %v1886
    %v2595 = vpack.c.b16 %v1891, %v1887
    %v2596 = vpack.c.b16 %v1892, %v1888
    %v2597 = vpack.c.b16 %v1893, %v1889
    %v2598 = vpack.c.b16 %v1898, %v1894
    %v2599 = vpack.c.b16 %v1899, %v1895
    %v2600 = vpack.c.b16 %v1900, %v1896
    %v2601 = vpack.c.b16 %v1901, %v1897
    %v2602 = vpack.c.b16 %v1906, %v1902
    %v2603 = vpack.c.b16 %v1907, %v1903
    %v2604 = vpack.c.b16 %v1908, %v1904
    %v2605 = vpack.c.b16 %v1909, %v1905
    %v2606 = vpack.c.b16 %v1914, %v1910
    %v2607 = vpack.c.b16 %v1915, %v1911
    %v2608 = vpack.c.b16 %v1916, %v1912
    %v2609 = vpack.c.b16 %v1917, %v1913
    %v2610 = vpack.c.b16 %v1922, %v1918
    %v2611 = vpack.c.b16 %v1923, %v1919
    %v2612 = vpack.c.b16 %v1924, %v1920
    %v2613 = vpack.c.b16 %v1925, %v1921
    %v2614 = vpack.c.b16 %v1930, %v1926
    %v2615 = vpack.c.b16 %v1931, %v1927
    %v2616 = vpack.c.b16 %v1932, %v1928
    %v2617 = vpack.c.b16 %v1933, %v1929
    %v2618 = vpack.c.b16 %v1938, %v1934
    %v2619 = vpack.c.b16 %v1939, %v1935
    %v2620 = vpack.c.b16 %v1940, %v1936
    %v2621 = vpack.c.b16 %v1941, %v1937
    %v2622 = vpack.c.b16 %v1946, %v1942
    %v2623 = vpack.c.b16 %v1947, %v1943
    %v2624 = vpack.c.b16 %v1948, %v1944
    %v2625 = vpack.c.b16 %v1949, %v1945
    %v2626 = vpack.c.b16 %v1954, %v1950
    %v2627 = vpack.c.b16 %v1955, %v1951
    %v2628 = vpack.c.b16 %v1956, %v1952
    %v2629 = vpack.c.b16 %v1957, %v1953
    %v2630 = vpack.c.b16 %v1962, %v1958
    %v2631 = vpack.c.b16 %v1963, %v1959
    %v2632 = vpack.c.b16 %v1964, %v1960
    %v2633 = vpack.c.b16 %v1965, %v1961
    %v2634 = vpack.c.b16 %v1970, %v1966
    %v2635 = vpack.c.b16 %v1971, %v1967
    %v2636 = vpack.c.b16 %v1972, %v1968
    %v2637 = vpack.c.b16 %v1973, %v1969
    %v2638 = vpack.c.b16 %v1978, %v1974
    %v2639 = vpack.c.b16 %v1979, %v1975
    %v2640 = vpack.c.b16 %v1980, %v1976
    %v2641 = vpack.c.b16 %v1981, %v1977
    %v2642 = vpack.c.b16 %v1986, %v1982
    %v2643 = vpack.c.b16 %v1987, %v1983
    %v2644 = vpack.c.b16 %v1988, %v1984
    %v2645 = vpack.c.b16 %v1989, %v1985
    %v2646 = vpack.c.b16 %v1994, %v1990
    %v2647 = vpack.c.b16 %v1995, %v1991
    %v2648 = vpack.c.b16 %v1996, %v1992
    %v2649 = vpack.c.b16 %v1997, %v1993
    %v2650 = vpack.c.b16 %v2002, %v1998
    %v2651 = vpack.c.b16 %v2003, %v1999
    %v2652 = vpack.c.b16 %v2004, %v2000
    %v2653 = vpack.c.b16 %v2005, %v2001
    %v2654 = vpack.c.b16 %v2010, %v2006
    %v2655 = vpack.c.b16 %v2011, %v2007
    %v2656 = vpack.c.b16 %v2012, %v2008
    %v2657 = vpack.c.b16 %v2013, %v2009
    %v2658 = vpack.c.b16 %v2018, %v2014
    %v2659 = vpack.c.b16 %v2019, %v2015
    %v2660 = vpack.c.b16 %v2020, %v2016
    %v2661 = vpack.c.b16 %v2021, %v2017
    %v2662 = vpack.c.b16 %v2026, %v2022
    %v2663 = vpack.c.b16 %v2027, %v2023
    %v2664 = vpack.c.b16 %v2028, %v2024
    %v2665 = vpack.c.b16 %v2029, %v2025
    %v2666 = vpack.c.b16 %v2034, %v2030
    %v2667 = vpack.c.b16 %v2035, %v2031
    %v2668 = vpack.c.b16 %v2036, %v2032
    %v2669 = vpack.c.b16 %v2037, %v2033
    %v2670 = vpack.c.b16 %v2042, %v2038
    %v2671 = vpack.c.b16 %v2043, %v2039
    %v2672 = vpack.c.b16 %v2044, %v2040
    %v2673 = vpack.c.b16 %v2045, %v2041
    %v2674 = vpack.c.b16 %v2050, %v2046
    %v2675 = vpack.c.b16 %v2051, %v2047
    %v2676 = vpack.c.b16 %v2052, %v2048
    %v2677 = vpack.c.b16 %v2053, %v2049
    %v2678 = vpack.c.b16 %v2058, %v2054
    %v2679 = vpack.c.b16 %v2059, %v2055
    %v2680 = vpack.c.b16 %v2060, %v2056
    %v2681 = vpack.c.b16 %v2061, %v2057
    %v2682 = vpack.c.b16 %v2066, %v2062
    %v2683 = vpack.c.b16 %v2067, %v2063
    %v2684 = vpack.c.b16 %v2068, %v2064
    %v2685 = vpack.c.b16 %v2069, %v2065
    %v2686 = vpack.c.b16 %v2074, %v2070
    %v2687 = vpack.c.b16 %v2075, %v2071
    %v2688 = vpack.c.b16 %v2076, %v2072
    %v2689 = vpack.c.b16 %v2077, %v2073
    %v2690 = vpack.c.b16 %v2082, %v2078
    %v2691 = vpack.c.b16 %v2083, %v2079
    %v2692 = vpack.c.b16 %v2084, %v2080
    %v2693 = vpack.c.b16 %v2085, %v2081
    %v2694 = vpack.c.b16 %v2090, %v2086
    %v2695 = vpack.c.b16 %v2091, %v2087
    %v2696 = vpack.c.b16 %v2092, %v2088
    %v2697 = vpack.c.b16 %v2093, %v2089
    %v2698 = vpack.c.b16 %v2098, %v2094
    %v2699 = vpack.c.b16 %v2099, %v2095
    %v2700 = vpack.c.b16 %v2100, %v2096
    %v2701 = vpack.c.b16 %v2101, %v2097
    %v2702 = vpack.c.b16 %v2106, %v2102
    %v2703 = vpack.c.b16 %v2107, %v2103
    %v2704 = vpack.c.b16 %v2108, %v2104
    %v2705 = vpack.c.b16 %v2109, %v2105
    %v2706 = vpack.c.b16 %v2114, %v2110
    %v2707 = vpack.c.b16 %v2115, %v2111
    %v2708 = vpack.c.b16 %v2116, %v2112
    %v2709 = vpack.c.b16 %v2117, %v2113
    %v2710 = vpack.c.b16 %v2122, %v2118
    %v2711 = vpack.c.b16 %v2123, %v2119
    %v2712 = vpack.c.b16 %v2124, %v2120
    %v2713 = vpack.c.b16 %v2125, %v2121
    %v2714 = vpack.c.b16 %v2130, %v2126
    %v2715 = vpack.c.b16 %v2131, %v2127
    %v2716 = vpack.c.b16 %v2132, %v2128
    %v2717 = vpack.c.b16 %v2133, %v2129
    %v2718 = vpack.c.b16 %v2138, %v2134
    %v2719 = vpack.c.b16 %v2139, %v2135
    %v2720 = vpack.c.b16 %v2140, %v2136
    %v2721 = vpack.c.b16 %v2141, %v2137
    %v2722 = vpack.c.b16 %v2146, %v2142
    %v2723 = vpack.c.b16 %v2147, %v2143
    %v2724 = vpack.c.b16 %v2148, %v2144
    %v2725 = vpack.c.b16 %v2149, %v2145
    %v2726 = vpack.c.b16 %v2154, %v2150
    %v2727 = vpack.c.b16 %v2155, %v2151
    %v2728 = vpack.c.b16 %v2156, %v2152
    %v2729 = vpack.c.b16 %v2157, %v2153
    %v2730 = vpack.c.b16 %v2162, %v2158
    %v2731 = vpack.c.b16 %v2163, %v2159
    %v2732 = vpack.c.b16 %v2164, %v2160
    %v2733 = vpack.c.b16 %v2165, %v2161
    %v2734 = vpack.c.b16 %v2170, %v2166
    %v2735 = vpack.c.b16 %v2171, %v2167
    %v2736 = vpack.c.b16 %v2172, %v2168
    %v2737 = vpack.c.b16 %v2173, %v2169
    %v2738 = vpack.c.b16 %v2178, %v2174
    %v2739 = vpack.c.b16 %v2179, %v2175
    %v2740 = vpack.c.b16 %v2180, %v2176
    %v2741 = vpack.c.b16 %v2181, %v2177
    %v2742 = vpack.c.b16 %v2186, %v2182
    %v2743 = vpack.c.b16 %v2187, %v2183
    %v2744 = vpack.c.b16 %v2188, %v2184
    %v2745 = vpack.c.b16 %v2189, %v2185
    %v2746 = vpack.c.b16 %v2194, %v2190
    %v2747 = vpack.c.b16 %v2195, %v2191
    %v2748 = vpack.c.b16 %v2196, %v2192
    %v2749 = vpack.c.b16 %v2197, %v2193
    %v2750 = vpack.c.b16 %v2202, %v2198
    %v2751 = vpack.c.b16 %v2203, %v2199
    %v2752 = vpack.c.b16 %v2204, %v2200
    %v2753 = vpack.c.b16 %v2205, %v2201
    %v2754 = vpack.c.b16 %v2210, %v2206
    %v2755 = vpack.c.b16 %v2211, %v2207
    %v2756 = vpack.c.b16 %v2212, %v2208
    %v2757 = vpack.c.b16 %v2213, %v2209
    %v2758 = vpack.c.b16 %v2218, %v2214
    %v2759 = vpack.c.b16 %v2219, %v2215
    %v2760 = vpack.c.b16 %v2220, %v2216
    %v2761 = vpack.c.b16 %v2221, %v2217
    %v2762 = vpack.c.b16 %v2226, %v2222
    %v2763 = vpack.c.b16 %v2227, %v2223
    %v2764 = vpack.c.b16 %v2228, %v2224
    %v2765 = vpack.c.b16 %v2229, %v2225
    %v2766 = vpack.c.b16 %v2234, %v2230
    %v2767 = vpack.c.b16 %v2235, %v2231
    %v2768 = vpack.c.b16 %v2236, %v2232
    %v2769 = vpack.c.b16 %v2237, %v2233
    %v2770 = vpack.c.b16 %v2242, %v2238
    %v2771 = vpack.c.b16 %v2243, %v2239
    %v2772 = vpack.c.b16 %v2244, %v2240
    %v2773 = vpack.c.b16 %v2245, %v2241
    %v2774 = vpack.c.b16 %v2250, %v2246
    %v2775 = vpack.c.b16 %v2251, %v2247
    %v2776 = vpack.c.b16 %v2252, %v2248
    %v2777 = vpack.c.b16 %v2253, %v2249
    %v2778 = vpack.c.b16 %v2258, %v2254
    %v2779 = vpack.c.b16 %v2259, %v2255
    %v2780 = vpack.c.b16 %v2260, %v2256
    %v2781 = vpack.c.b16 %v2261, %v2257
    %v2782 = vpack.c.b16 %v2266, %v2262
    %v2783 = vpack.c.b16 %v2267, %v2263
    %v2784 = vpack.c.b16 %v2268, %v2264
    %v2785 = vpack.c.b16 %v2269, %v2265
    %v2786 = vpack.c.b16 %v2274, %v2270
    %v2787 = vpack.c.b16 %v2275, %v2271
    %v2788 = vpack.c.b16 %v2276, %v2272
    %v2789 = vpack.c.b16 %v2277, %v2273
    %3302 = vmatprep.subr.bf16.mxu0 %v2307
    %3303 = vmatpush1.bf16.msra.mxu0 %v2306
    %3304 = vmatprep.subr.bf16.mxu0 %v2303
    %3305 = vmatpush1.bf16.msra.mxu0 %v2302
    %3306 = vmatprep.subr.bf16.mxu0 %v2299
    %3307 = vmatpush1.bf16.msra.mxu0 %v2298
    %3308 = vmatprep.subr.bf16.mxu0 %v2295
    %3309 = vmatpush1.bf16.msra.mxu0 %v2294
    %3310 = vmatprep.subr.bf16.mxu0 %v2291
    %3311 = vmatpush1.bf16.msra.mxu0 %v2290
    %3312 = vmatprep.subr.bf16.mxu0 %v2287
    %3313 = vmatpush1.bf16.msra.mxu0 %v2286
    %3314 = vmatprep.subr.bf16.mxu0 %v2283
    %3315 = vmatpush1.bf16.msra.mxu0 %v2282
    %3316 = vmatprep.subr.bf16.mxu0 %v2279
    %3317 = vmatpush1.bf16.msra.mxu0 %v2278
    %3318 = vmatprep.subr.bf16.mxu0 %v2339
    %3319 = vmatpush2.bf16.msra.mxu0 %v2338
    %3320 = vmatprep.subr.bf16.mxu0 %v2335
    %3321 = vmatpush2.bf16.msra.mxu0 %v2334
    %3322 = vmatprep.subr.bf16.mxu0 %v2331
    %3323 = vmatpush2.bf16.msra.mxu0 %v2330
    %3324 = vmatprep.subr.bf16.mxu0 %v2327
    %3325 = vmatpush2.bf16.msra.mxu0 %v2326
    %3326 = vmatprep.subr.bf16.mxu0 %v2323
    %3327 = vmatpush2.bf16.msra.mxu0 %v2322
    %3328 = vmatprep.subr.bf16.mxu0 %v2319
    %3329 = vmatpush2.bf16.msra.mxu0 %v2318
    %3330 = vmatprep.subr.bf16.mxu0 %v2315
    %3331 = vmatpush2.bf16.msra.mxu0 %v2314
    %3332 = vmatprep.subr.bf16.mxu0 %v2311
    %3333 = vmatpush2.bf16.msra.mxu0 %v2310
    %3334 = vmatprep.mubr.bf16.mxu0 %v711
    %3335 = vmatmul.mubr.bf16.gmra.mxu0 %v710
    %v3336 = vpop.f32.mrf.mxu0
    %v3337 = vadd.f32 %v669, %v3336
    %v3338 = vpop.f32.mrf.mxu0
    %v3339 = vadd.f32 %v673, %v3338
    %v3340 = vpop.f32.mrf.mxu0
    %v3341 = vpop.f32.mrf.mxu0
    %3342 = vdwg.mxu0
    %3343 = vmatprep.subr.bf16.mxu0 %v2371
    %3344 = vmatpush1.bf16.msra.mxu0 %v2370
    %3345 = vmatprep.subr.bf16.mxu0 %v2367
    %3346 = vmatpush1.bf16.msra.mxu0 %v2366
    %3347 = vmatprep.subr.bf16.mxu0 %v2363
    %3348 = vmatpush1.bf16.msra.mxu0 %v2362
    %3349 = vmatprep.subr.bf16.mxu0 %v2359
    %3350 = vmatpush1.bf16.msra.mxu0 %v2358
    %3351 = vmatprep.subr.bf16.mxu0 %v2355
    %3352 = vmatpush1.bf16.msra.mxu0 %v2354
    %3353 = vmatprep.subr.bf16.mxu0 %v2351
    %3354 = vmatpush1.bf16.msra.mxu0 %v2350
    %3355 = vmatprep.subr.bf16.mxu0 %v2347
    %3356 = vmatpush1.bf16.msra.mxu0 %v2346
    %3357 = vmatprep.subr.bf16.mxu0 %v2343
    %3358 = vmatpush1.bf16.msra.mxu0 %v2342
    %3359 = vmatprep.subr.bf16.mxu0 %v2403
    %3360 = vmatpush2.bf16.msra.mxu0 %v2402
    %3361 = vmatprep.subr.bf16.mxu0 %v2399
    %3362 = vmatpush2.bf16.msra.mxu0 %v2398
    %3363 = vmatprep.subr.bf16.mxu0 %v2395
    %3364 = vmatpush2.bf16.msra.mxu0 %v2394
    %3365 = vmatprep.subr.bf16.mxu0 %v2391
    %3366 = vmatpush2.bf16.msra.mxu0 %v2390
    %3367 = vmatprep.subr.bf16.mxu0 %v2387
    %3368 = vmatpush2.bf16.msra.mxu0 %v2386
    %3369 = vmatprep.subr.bf16.mxu0 %v2383
    %3370 = vmatpush2.bf16.msra.mxu0 %v2382
    %3371 = vmatprep.subr.bf16.mxu0 %v2379
    %3372 = vmatpush2.bf16.msra.mxu0 %v2378
    %3373 = vmatprep.subr.bf16.mxu0 %v2375
    %3374 = vmatpush2.bf16.msra.mxu0 %v2374
    %3375 = vmatprep.mubr.bf16.mxu0 %v713
    %3376 = vmatmul.mubr.bf16.gmra.mxu0 %v712
    %v3377 = vpop.f32.mrf.mxu0
    %v3378 = vadd.f32 %v3337, %v3377
    %v3379 = vpop.f32.mrf.mxu0
    %v3380 = vadd.f32 %v3339, %v3379
    %v3381 = vpop.f32.mrf.mxu0
    %v3382 = vpop.f32.mrf.mxu0
    %3383 = vdwg.mxu0
    %3384 = vmatprep.subr.bf16.mxu0 %v2435
    %3385 = vmatpush1.bf16.msra.mxu0 %v2434
    %3386 = vmatprep.subr.bf16.mxu0 %v2431
    %3387 = vmatpush1.bf16.msra.mxu0 %v2430
    %3388 = vmatprep.subr.bf16.mxu0 %v2427
    %3389 = vmatpush1.bf16.msra.mxu0 %v2426
    %3390 = vmatprep.subr.bf16.mxu0 %v2423
    %3391 = vmatpush1.bf16.msra.mxu0 %v2422
    %3392 = vmatprep.subr.bf16.mxu0 %v2419
    %3393 = vmatpush1.bf16.msra.mxu0 %v2418
    %3394 = vmatprep.subr.bf16.mxu0 %v2415
    %3395 = vmatpush1.bf16.msra.mxu0 %v2414
    %3396 = vmatprep.subr.bf16.mxu0 %v2411
    %3397 = vmatpush1.bf16.msra.mxu0 %v2410
    %3398 = vmatprep.subr.bf16.mxu0 %v2407
    %3399 = vmatpush1.bf16.msra.mxu0 %v2406
    %3400 = vmatprep.subr.bf16.mxu0 %v2467
    %3401 = vmatpush2.bf16.msra.mxu0 %v2466
    %3402 = vmatprep.subr.bf16.mxu0 %v2463
    %3403 = vmatpush2.bf16.msra.mxu0 %v2462
    %3404 = vmatprep.subr.bf16.mxu0 %v2459
    %3405 = vmatpush2.bf16.msra.mxu0 %v2458
    %3406 = vmatprep.subr.bf16.mxu0 %v2455
    %3407 = vmatpush2.bf16.msra.mxu0 %v2454
    %3408 = vmatprep.subr.bf16.mxu0 %v2451
    %3409 = vmatpush2.bf16.msra.mxu0 %v2450
    %3410 = vmatprep.subr.bf16.mxu0 %v2447
    %3411 = vmatpush2.bf16.msra.mxu0 %v2446
    %3412 = vmatprep.subr.bf16.mxu0 %v2443
    %3413 = vmatpush2.bf16.msra.mxu0 %v2442
    %3414 = vmatprep.subr.bf16.mxu0 %v2439
    %3415 = vmatpush2.bf16.msra.mxu0 %v2438
    %3416 = vmatprep.mubr.bf16.mxu0 %v715
    %3417 = vmatmul.mubr.bf16.gmra.mxu0 %v714
    %v3418 = vpop.f32.mrf.mxu0
    %v3419 = vadd.f32 %v3378, %v3418
    %v3420 = vpop.f32.mrf.mxu0
    %v3421 = vadd.f32 %v3380, %v3420
    %v3422 = vpop.f32.mrf.mxu0
    %v3423 = vpop.f32.mrf.mxu0
    %3424 = vdwg.mxu0
    %3425 = vmatprep.subr.bf16.mxu0 %v2499
    %3426 = vmatpush1.bf16.msra.mxu0 %v2498
    %3427 = vmatprep.subr.bf16.mxu0 %v2495
    %3428 = vmatpush1.bf16.msra.mxu0 %v2494
    %3429 = vmatprep.subr.bf16.mxu0 %v2491
    %3430 = vmatpush1.bf16.msra.mxu0 %v2490
    %3431 = vmatprep.subr.bf16.mxu0 %v2487
    %3432 = vmatpush1.bf16.msra.mxu0 %v2486
    %3433 = vmatprep.subr.bf16.mxu0 %v2483
    %3434 = vmatpush1.bf16.msra.mxu0 %v2482
    %3435 = vmatprep.subr.bf16.mxu0 %v2479
    %3436 = vmatpush1.bf16.msra.mxu0 %v2478
    %3437 = vmatprep.subr.bf16.mxu0 %v2475
    %3438 = vmatpush1.bf16.msra.mxu0 %v2474
    %3439 = vmatprep.subr.bf16.mxu0 %v2471
    %3440 = vmatpush1.bf16.msra.mxu0 %v2470
    %3441 = vmatprep.subr.bf16.mxu0 %v2531
    %3442 = vmatpush2.bf16.msra.mxu0 %v2530
    %3443 = vmatprep.subr.bf16.mxu0 %v2527
    %3444 = vmatpush2.bf16.msra.mxu0 %v2526
    %3445 = vmatprep.subr.bf16.mxu0 %v2523
    %3446 = vmatpush2.bf16.msra.mxu0 %v2522
    %3447 = vmatprep.subr.bf16.mxu0 %v2519
    %3448 = vmatpush2.bf16.msra.mxu0 %v2518
    %3449 = vmatprep.subr.bf16.mxu0 %v2515
    %3450 = vmatpush2.bf16.msra.mxu0 %v2514
    %3451 = vmatprep.subr.bf16.mxu0 %v2511
    %3452 = vmatpush2.bf16.msra.mxu0 %v2510
    %3453 = vmatprep.subr.bf16.mxu0 %v2507
    %3454 = vmatpush2.bf16.msra.mxu0 %v2506
    %3455 = vmatprep.subr.bf16.mxu0 %v2503
    %3456 = vmatpush2.bf16.msra.mxu0 %v2502
    %3457 = vmatprep.mubr.bf16.mxu0 %v717
    %3458 = vmatmul.mubr.bf16.gmra.mxu0 %v716
    %v3459 = vpop.f32.mrf.mxu0
    %v3460 = vadd.f32 %v3419, %v3459
    %v3461 = vpop.f32.mrf.mxu0
    %v3462 = vadd.f32 %v3421, %v3461
    %v3463 = vpop.f32.mrf.mxu0
    %v3464 = vpop.f32.mrf.mxu0
    %3465 = vdwg.mxu0
    %3466 = vmatprep.subr.bf16.mxu0 %v2563
    %3467 = vmatpush1.bf16.msra.mxu0 %v2562
    %3468 = vmatprep.subr.bf16.mxu0 %v2559
    %3469 = vmatpush1.bf16.msra.mxu0 %v2558
    %3470 = vmatprep.subr.bf16.mxu0 %v2555
    %3471 = vmatpush1.bf16.msra.mxu0 %v2554
    %3472 = vmatprep.subr.bf16.mxu0 %v2551
    %3473 = vmatpush1.bf16.msra.mxu0 %v2550
    %3474 = vmatprep.subr.bf16.mxu0 %v2547
    %3475 = vmatpush1.bf16.msra.mxu0 %v2546
    %3476 = vmatprep.subr.bf16.mxu0 %v2543
    %3477 = vmatpush1.bf16.msra.mxu0 %v2542
    %3478 = vmatprep.subr.bf16.mxu0 %v2539
    %3479 = vmatpush1.bf16.msra.mxu0 %v2538
    %3480 = vmatprep.subr.bf16.mxu0 %v2535
    %3481 = vmatpush1.bf16.msra.mxu0 %v2534
    %3482 = vmatprep.subr.bf16.mxu0 %v2595
    %3483 = vmatpush2.bf16.msra.mxu0 %v2594
    %3484 = vmatprep.subr.bf16.mxu0 %v2591
    %3485 = vmatpush2.bf16.msra.mxu0 %v2590
    %3486 = vmatprep.subr.bf16.mxu0 %v2587
    %3487 = vmatpush2.bf16.msra.mxu0 %v2586
    %3488 = vmatprep.subr.bf16.mxu0 %v2583
    %3489 = vmatpush2.bf16.msra.mxu0 %v2582
    %3490 = vmatprep.subr.bf16.mxu0 %v2579
    %3491 = vmatpush2.bf16.msra.mxu0 %v2578
    %3492 = vmatprep.subr.bf16.mxu0 %v2575
    %3493 = vmatpush2.bf16.msra.mxu0 %v2574
    %3494 = vmatprep.subr.bf16.mxu0 %v2571
    %3495 = vmatpush2.bf16.msra.mxu0 %v2570
    %3496 = vmatprep.subr.bf16.mxu0 %v2567
    %3497 = vmatpush2.bf16.msra.mxu0 %v2566
    %3498 = vmatprep.mubr.bf16.mxu0 %v719
    %3499 = vmatmul.mubr.bf16.gmra.mxu0 %v718
    %v3500 = vpop.f32.mrf.mxu0
    %v3501 = vadd.f32 %v3460, %v3500
    %v3502 = vpop.f32.mrf.mxu0
    %v3503 = vadd.f32 %v3462, %v3502
    %v3504 = vpop.f32.mrf.mxu0
    %v3505 = vpop.f32.mrf.mxu0
    %3506 = vdwg.mxu0
    %3507 = vmatprep.subr.bf16.mxu0 %v2627
    %3508 = vmatpush1.bf16.msra.mxu0 %v2626
    %3509 = vmatprep.subr.bf16.mxu0 %v2623
    %3510 = vmatpush1.bf16.msra.mxu0 %v2622
    %3511 = vmatprep.subr.bf16.mxu0 %v2619
    %3512 = vmatpush1.bf16.msra.mxu0 %v2618
    %3513 = vmatprep.subr.bf16.mxu0 %v2615
    %3514 = vmatpush1.bf16.msra.mxu0 %v2614
    %3515 = vmatprep.subr.bf16.mxu0 %v2611
    %3516 = vmatpush1.bf16.msra.mxu0 %v2610
    %3517 = vmatprep.subr.bf16.mxu0 %v2607
    %3518 = vmatpush1.bf16.msra.mxu0 %v2606
    %3519 = vmatprep.subr.bf16.mxu0 %v2603
    %3520 = vmatpush1.bf16.msra.mxu0 %v2602
    %3521 = vmatprep.subr.bf16.mxu0 %v2599
    %3522 = vmatpush1.bf16.msra.mxu0 %v2598
    %3523 = vmatprep.subr.bf16.mxu0 %v2659
    %3524 = vmatpush2.bf16.msra.mxu0 %v2658
    %3525 = vmatprep.subr.bf16.mxu0 %v2655
    %3526 = vmatpush2.bf16.msra.mxu0 %v2654
    %3527 = vmatprep.subr.bf16.mxu0 %v2651
    %3528 = vmatpush2.bf16.msra.mxu0 %v2650
    %3529 = vmatprep.subr.bf16.mxu0 %v2647
    %3530 = vmatpush2.bf16.msra.mxu0 %v2646
    %3531 = vmatprep.subr.bf16.mxu0 %v2643
    %3532 = vmatpush2.bf16.msra.mxu0 %v2642
    %3533 = vmatprep.subr.bf16.mxu0 %v2639
    %3534 = vmatpush2.bf16.msra.mxu0 %v2638
    %3535 = vmatprep.subr.bf16.mxu0 %v2635
    %3536 = vmatpush2.bf16.msra.mxu0 %v2634
    %3537 = vmatprep.subr.bf16.mxu0 %v2631
    %3538 = vmatpush2.bf16.msra.mxu0 %v2630
    %3539 = vmatprep.mubr.bf16.mxu0 %v721
    %3540 = vmatmul.mubr.bf16.gmra.mxu0 %v720
    %v3541 = vpop.f32.mrf.mxu0
    %v3542 = vadd.f32 %v3501, %v3541
    %v3543 = vpop.f32.mrf.mxu0
    %v3544 = vadd.f32 %v3503, %v3543
    %v3545 = vpop.f32.mrf.mxu0
    %v3546 = vpop.f32.mrf.mxu0
    %3547 = vdwg.mxu0
    %3548 = vmatprep.subr.bf16.mxu0 %v2691
    %3549 = vmatpush1.bf16.msra.mxu0 %v2690
    %3550 = vmatprep.subr.bf16.mxu0 %v2687
    %3551 = vmatpush1.bf16.msra.mxu0 %v2686
    %3552 = vmatprep.subr.bf16.mxu0 %v2683
    %3553 = vmatpush1.bf16.msra.mxu0 %v2682
    %3554 = vmatprep.subr.bf16.mxu0 %v2679
    %3555 = vmatpush1.bf16.msra.mxu0 %v2678
    %3556 = vmatprep.subr.bf16.mxu0 %v2675
    %3557 = vmatpush1.bf16.msra.mxu0 %v2674
    %3558 = vmatprep.subr.bf16.mxu0 %v2671
    %3559 = vmatpush1.bf16.msra.mxu0 %v2670
    %3560 = vmatprep.subr.bf16.mxu0 %v2667
    %3561 = vmatpush1.bf16.msra.mxu0 %v2666
    %3562 = vmatprep.subr.bf16.mxu0 %v2663
    %3563 = vmatpush1.bf16.msra.mxu0 %v2662
    %3564 = vmatprep.subr.bf16.mxu0 %v2723
    %3565 = vmatpush2.bf16.msra.mxu0 %v2722
    %3566 = vmatprep.subr.bf16.mxu0 %v2719
    %3567 = vmatpush2.bf16.msra.mxu0 %v2718
    %3568 = vmatprep.subr.bf16.mxu0 %v2715
    %3569 = vmatpush2.bf16.msra.mxu0 %v2714
    %3570 = vmatprep.subr.bf16.mxu0 %v2711
    %3571 = vmatpush2.bf16.msra.mxu0 %v2710
    %3572 = vmatprep.subr.bf16.mxu0 %v2707
    %3573 = vmatpush2.bf16.msra.mxu0 %v2706
    %3574 = vmatprep.subr.bf16.mxu0 %v2703
    %3575 = vmatpush2.bf16.msra.mxu0 %v2702
    %3576 = vmatprep.subr.bf16.mxu0 %v2699
    %3577 = vmatpush2.bf16.msra.mxu0 %v2698
    %3578 = vmatprep.subr.bf16.mxu0 %v2695
    %3579 = vmatpush2.bf16.msra.mxu0 %v2694
    %3580 = vmatprep.mubr.bf16.mxu0 %v723
    %3581 = vmatmul.mubr.bf16.gmra.mxu0 %v722
    %v3582 = vpop.f32.mrf.mxu0
    %v3583 = vadd.f32 %v3542, %v3582
    %v3584 = vpop.f32.mrf.mxu0
    %v3585 = vadd.f32 %v3544, %v3584
    %v3586 = vpop.f32.mrf.mxu0
    %v3587 = vpop.f32.mrf.mxu0
    %3588 = vdwg.mxu0
    %3589 = vmatprep.subr.bf16.mxu0 %v2755
    %3590 = vmatpush1.bf16.msra.mxu0 %v2754
    %3591 = vmatprep.subr.bf16.mxu0 %v2751
    %3592 = vmatpush1.bf16.msra.mxu0 %v2750
    %3593 = vmatprep.subr.bf16.mxu0 %v2747
    %3594 = vmatpush1.bf16.msra.mxu0 %v2746
    %3595 = vmatprep.subr.bf16.mxu0 %v2743
    %3596 = vmatpush1.bf16.msra.mxu0 %v2742
    %3597 = vmatprep.subr.bf16.mxu0 %v2739
    %3598 = vmatpush1.bf16.msra.mxu0 %v2738
    %3599 = vmatprep.subr.bf16.mxu0 %v2735
    %3600 = vmatpush1.bf16.msra.mxu0 %v2734
    %3601 = vmatprep.subr.bf16.mxu0 %v2731
    %3602 = vmatpush1.bf16.msra.mxu0 %v2730
    %3603 = vmatprep.subr.bf16.mxu0 %v2727
    %3604 = vmatpush1.bf16.msra.mxu0 %v2726
    %3605 = vmatprep.subr.bf16.mxu0 %v2787
    %3606 = vmatpush2.bf16.msra.mxu0 %v2786
    %3607 = vmatprep.subr.bf16.mxu0 %v2783
    %3608 = vmatpush2.bf16.msra.mxu0 %v2782
    %3609 = vmatprep.subr.bf16.mxu0 %v2779
    %3610 = vmatpush2.bf16.msra.mxu0 %v2778
    %3611 = vmatprep.subr.bf16.mxu0 %v2775
    %3612 = vmatpush2.bf16.msra.mxu0 %v2774
    %3613 = vmatprep.subr.bf16.mxu0 %v2771
    %3614 = vmatpush2.bf16.msra.mxu0 %v2770
    %3615 = vmatprep.subr.bf16.mxu0 %v2767
    %3616 = vmatpush2.bf16.msra.mxu0 %v2766
    %3617 = vmatprep.subr.bf16.mxu0 %v2763
    %3618 = vmatpush2.bf16.msra.mxu0 %v2762
    %3619 = vmatprep.subr.bf16.mxu0 %v2759
    %3620 = vmatpush2.bf16.msra.mxu0 %v2758
    %3621 = vmatprep.mubr.bf16.mxu0 %v725
    %3622 = vmatmul.mubr.bf16.gmra.mxu0 %v724
    %v3623 = vpop.f32.mrf.mxu0
    %v3624 = vadd.f32 %v3583, %v3623
    %v3625 = vpop.f32.mrf.mxu0
    %v3626 = vadd.f32 %v3585, %v3625
    %v3627 = vpop.f32.mrf.mxu0
    %v3628 = vpop.f32.mrf.mxu0
    %3629 = vdwg.mxu0
    %3630 = vmatprep.subr.bf16.mxu0 %v2309
    %3631 = vmatpush1.bf16.msra.mxu0 %v2308
    %3632 = vmatprep.subr.bf16.mxu0 %v2305
    %3633 = vmatpush1.bf16.msra.mxu0 %v2304
    %3634 = vmatprep.subr.bf16.mxu0 %v2301
    %3635 = vmatpush1.bf16.msra.mxu0 %v2300
    %3636 = vmatprep.subr.bf16.mxu0 %v2297
    %3637 = vmatpush1.bf16.msra.mxu0 %v2296
    %3638 = vmatprep.subr.bf16.mxu0 %v2293
    %3639 = vmatpush1.bf16.msra.mxu0 %v2292
    %3640 = vmatprep.subr.bf16.mxu0 %v2289
    %3641 = vmatpush1.bf16.msra.mxu0 %v2288
    %3642 = vmatprep.subr.bf16.mxu0 %v2285
    %3643 = vmatpush1.bf16.msra.mxu0 %v2284
    %3644 = vmatprep.subr.bf16.mxu0 %v2281
    %3645 = vmatpush1.bf16.msra.mxu0 %v2280
    %3646 = vmatprep.subr.bf16.mxu0 %v2341
    %3647 = vmatpush2.bf16.msra.mxu0 %v2340
    %3648 = vmatprep.subr.bf16.mxu0 %v2337
    %3649 = vmatpush2.bf16.msra.mxu0 %v2336
    %3650 = vmatprep.subr.bf16.mxu0 %v2333
    %3651 = vmatpush2.bf16.msra.mxu0 %v2332
    %3652 = vmatprep.subr.bf16.mxu0 %v2329
    %3653 = vmatpush2.bf16.msra.mxu0 %v2328
    %3654 = vmatprep.subr.bf16.mxu0 %v2325
    %3655 = vmatpush2.bf16.msra.mxu0 %v2324
    %3656 = vmatprep.subr.bf16.mxu0 %v2321
    %3657 = vmatpush2.bf16.msra.mxu0 %v2320
    %3658 = vmatprep.subr.bf16.mxu0 %v2317
    %3659 = vmatpush2.bf16.msra.mxu0 %v2316
    %3660 = vmatprep.subr.bf16.mxu0 %v2313
    %3661 = vmatpush2.bf16.msra.mxu0 %v2312
    %3662 = vmatprep.mubr.bf16.mxu0 %v711
    %3663 = vmatmul.mubr.bf16.gmra.mxu0 %v710
    %v3664 = vpop.f32.mrf.mxu0
    %v3665 = vadd.f32 %v677, %v3664
    %v3666 = vpop.f32.mrf.mxu0
    %v3667 = vadd.f32 %v681, %v3666
    %v3668 = vpop.f32.mrf.mxu0
    %v3669 = vpop.f32.mrf.mxu0
    %3670 = vdwg.mxu0
    %3671 = vmatprep.subr.bf16.mxu0 %v2373
    %3672 = vmatpush1.bf16.msra.mxu0 %v2372
    %3673 = vmatprep.subr.bf16.mxu0 %v2369
    %3674 = vmatpush1.bf16.msra.mxu0 %v2368
    %3675 = vmatprep.subr.bf16.mxu0 %v2365
    %3676 = vmatpush1.bf16.msra.mxu0 %v2364
    %3677 = vmatprep.subr.bf16.mxu0 %v2361
    %3678 = vmatpush1.bf16.msra.mxu0 %v2360
    %3679 = vmatprep.subr.bf16.mxu0 %v2357
    %3680 = vmatpush1.bf16.msra.mxu0 %v2356
    %3681 = vmatprep.subr.bf16.mxu0 %v2353
    %3682 = vmatpush1.bf16.msra.mxu0 %v2352
    %3683 = vmatprep.subr.bf16.mxu0 %v2349
    %3684 = vmatpush1.bf16.msra.mxu0 %v2348
    %3685 = vmatprep.subr.bf16.mxu0 %v2345
    %3686 = vmatpush1.bf16.msra.mxu0 %v2344
    %3687 = vmatprep.subr.bf16.mxu0 %v2405
    %3688 = vmatpush2.bf16.msra.mxu0 %v2404
    %3689 = vmatprep.subr.bf16.mxu0 %v2401
    %3690 = vmatpush2.bf16.msra.mxu0 %v2400
    %3691 = vmatprep.subr.bf16.mxu0 %v2397
    %3692 = vmatpush2.bf16.msra.mxu0 %v2396
    %3693 = vmatprep.subr.bf16.mxu0 %v2393
    %3694 = vmatpush2.bf16.msra.mxu0 %v2392
    %3695 = vmatprep.subr.bf16.mxu0 %v2389
    %3696 = vmatpush2.bf16.msra.mxu0 %v2388
    %3697 = vmatprep.subr.bf16.mxu0 %v2385
    %3698 = vmatpush2.bf16.msra.mxu0 %v2384
    %3699 = vmatprep.subr.bf16.mxu0 %v2381
    %3700 = vmatpush2.bf16.msra.mxu0 %v2380
    %3701 = vmatprep.subr.bf16.mxu0 %v2377
    %3702 = vmatpush2.bf16.msra.mxu0 %v2376
    %3703 = vmatprep.mubr.bf16.mxu0 %v713
    %3704 = vmatmul.mubr.bf16.gmra.mxu0 %v712
    %v3705 = vpop.f32.mrf.mxu0
    %v3706 = vadd.f32 %v3665, %v3705
    %v3707 = vpop.f32.mrf.mxu0
    %v3708 = vadd.f32 %v3667, %v3707
    %v3709 = vpop.f32.mrf.mxu0
    %v3710 = vpop.f32.mrf.mxu0
    %3711 = vdwg.mxu0
    %3712 = vmatprep.subr.bf16.mxu0 %v2437
    %3713 = vmatpush1.bf16.msra.mxu0 %v2436
    %3714 = vmatprep.subr.bf16.mxu0 %v2433
    %3715 = vmatpush1.bf16.msra.mxu0 %v2432
    %3716 = vmatprep.subr.bf16.mxu0 %v2429
    %3717 = vmatpush1.bf16.msra.mxu0 %v2428
    %3718 = vmatprep.subr.bf16.mxu0 %v2425
    %3719 = vmatpush1.bf16.msra.mxu0 %v2424
    %3720 = vmatprep.subr.bf16.mxu0 %v2421
    %3721 = vmatpush1.bf16.msra.mxu0 %v2420
    %3722 = vmatprep.subr.bf16.mxu0 %v2417
    %3723 = vmatpush1.bf16.msra.mxu0 %v2416
    %3724 = vmatprep.subr.bf16.mxu0 %v2413
    %3725 = vmatpush1.bf16.msra.mxu0 %v2412
    %3726 = vmatprep.subr.bf16.mxu0 %v2409
    %3727 = vmatpush1.bf16.msra.mxu0 %v2408
    %3728 = vmatprep.subr.bf16.mxu0 %v2469
    %3729 = vmatpush2.bf16.msra.mxu0 %v2468
    %3730 = vmatprep.subr.bf16.mxu0 %v2465
    %3731 = vmatpush2.bf16.msra.mxu0 %v2464
    %3732 = vmatprep.subr.bf16.mxu0 %v2461
    %3733 = vmatpush2.bf16.msra.mxu0 %v2460
    %3734 = vmatprep.subr.bf16.mxu0 %v2457
    %3735 = vmatpush2.bf16.msra.mxu0 %v2456
    %3736 = vmatprep.subr.bf16.mxu0 %v2453
    %3737 = vmatpush2.bf16.msra.mxu0 %v2452
    %3738 = vmatprep.subr.bf16.mxu0 %v2449
    %3739 = vmatpush2.bf16.msra.mxu0 %v2448
    %3740 = vmatprep.subr.bf16.mxu0 %v2445
    %3741 = vmatpush2.bf16.msra.mxu0 %v2444
    %3742 = vmatprep.subr.bf16.mxu0 %v2441
    %3743 = vmatpush2.bf16.msra.mxu0 %v2440
    %3744 = vmatprep.mubr.bf16.mxu0 %v715
    %3745 = vmatmul.mubr.bf16.gmra.mxu0 %v714
    %v3746 = vpop.f32.mrf.mxu0
    %v3747 = vadd.f32 %v3706, %v3746
    %v3748 = vpop.f32.mrf.mxu0
    %v3749 = vadd.f32 %v3708, %v3748
    %v3750 = vpop.f32.mrf.mxu0
    %v3751 = vpop.f32.mrf.mxu0
    %3752 = vdwg.mxu0
    %3753 = vmatprep.subr.bf16.mxu0 %v2501
    %3754 = vmatpush1.bf16.msra.mxu0 %v2500
    %3755 = vmatprep.subr.bf16.mxu0 %v2497
    %3756 = vmatpush1.bf16.msra.mxu0 %v2496
    %3757 = vmatprep.subr.bf16.mxu0 %v2493
    %3758 = vmatpush1.bf16.msra.mxu0 %v2492
    %3759 = vmatprep.subr.bf16.mxu0 %v2489
    %3760 = vmatpush1.bf16.msra.mxu0 %v2488
    %3761 = vmatprep.subr.bf16.mxu0 %v2485
    %3762 = vmatpush1.bf16.msra.mxu0 %v2484
    %3763 = vmatprep.subr.bf16.mxu0 %v2481
    %3764 = vmatpush1.bf16.msra.mxu0 %v2480
    %3765 = vmatprep.subr.bf16.mxu0 %v2477
    %3766 = vmatpush1.bf16.msra.mxu0 %v2476
    %3767 = vmatprep.subr.bf16.mxu0 %v2473
    %3768 = vmatpush1.bf16.msra.mxu0 %v2472
    %3769 = vmatprep.subr.bf16.mxu0 %v2533
    %3770 = vmatpush2.bf16.msra.mxu0 %v2532
    %3771 = vmatprep.subr.bf16.mxu0 %v2529
    %3772 = vmatpush2.bf16.msra.mxu0 %v2528
    %3773 = vmatprep.subr.bf16.mxu0 %v2525
    %3774 = vmatpush2.bf16.msra.mxu0 %v2524
    %3775 = vmatprep.subr.bf16.mxu0 %v2521
    %3776 = vmatpush2.bf16.msra.mxu0 %v2520
    %3777 = vmatprep.subr.bf16.mxu0 %v2517
    %3778 = vmatpush2.bf16.msra.mxu0 %v2516
    %3779 = vmatprep.subr.bf16.mxu0 %v2513
    %3780 = vmatpush2.bf16.msra.mxu0 %v2512
    %3781 = vmatprep.subr.bf16.mxu0 %v2509
    %3782 = vmatpush2.bf16.msra.mxu0 %v2508
    %3783 = vmatprep.subr.bf16.mxu0 %v2505
    %3784 = vmatpush2.bf16.msra.mxu0 %v2504
    %3785 = vmatprep.mubr.bf16.mxu0 %v717
    %3786 = vmatmul.mubr.bf16.gmra.mxu0 %v716
    %v3787 = vpop.f32.mrf.mxu0
    %v3788 = vadd.f32 %v3747, %v3787
    %v3789 = vpop.f32.mrf.mxu0
    %v3790 = vadd.f32 %v3749, %v3789
    %v3791 = vpop.f32.mrf.mxu0
    %v3792 = vpop.f32.mrf.mxu0
    %3793 = vdwg.mxu0
    %3794 = vmatprep.subr.bf16.mxu0 %v2565
    %3795 = vmatpush1.bf16.msra.mxu0 %v2564
    %3796 = vmatprep.subr.bf16.mxu0 %v2561
    %3797 = vmatpush1.bf16.msra.mxu0 %v2560
    %3798 = vmatprep.subr.bf16.mxu0 %v2557
    %3799 = vmatpush1.bf16.msra.mxu0 %v2556
    %3800 = vmatprep.subr.bf16.mxu0 %v2553
    %3801 = vmatpush1.bf16.msra.mxu0 %v2552
    %3802 = vmatprep.subr.bf16.mxu0 %v2549
    %3803 = vmatpush1.bf16.msra.mxu0 %v2548
    %3804 = vmatprep.subr.bf16.mxu0 %v2545
    %3805 = vmatpush1.bf16.msra.mxu0 %v2544
    %3806 = vmatprep.subr.bf16.mxu0 %v2541
    %3807 = vmatpush1.bf16.msra.mxu0 %v2540
    %3808 = vmatprep.subr.bf16.mxu0 %v2537
    %3809 = vmatpush1.bf16.msra.mxu0 %v2536
    %3810 = vmatprep.subr.bf16.mxu0 %v2597
    %3811 = vmatpush2.bf16.msra.mxu0 %v2596
    %3812 = vmatprep.subr.bf16.mxu0 %v2593
    %3813 = vmatpush2.bf16.msra.mxu0 %v2592
    %3814 = vmatprep.subr.bf16.mxu0 %v2589
    %3815 = vmatpush2.bf16.msra.mxu0 %v2588
    %3816 = vmatprep.subr.bf16.mxu0 %v2585
    %3817 = vmatpush2.bf16.msra.mxu0 %v2584
    %3818 = vmatprep.subr.bf16.mxu0 %v2581
    %3819 = vmatpush2.bf16.msra.mxu0 %v2580
    %3820 = vmatprep.subr.bf16.mxu0 %v2577
    %3821 = vmatpush2.bf16.msra.mxu0 %v2576
    %3822 = vmatprep.subr.bf16.mxu0 %v2573
    %3823 = vmatpush2.bf16.msra.mxu0 %v2572
    %3824 = vmatprep.subr.bf16.mxu0 %v2569
    %3825 = vmatpush2.bf16.msra.mxu0 %v2568
    %3826 = vmatprep.mubr.bf16.mxu0 %v719
    %3827 = vmatmul.mubr.bf16.gmra.mxu0 %v718
    %v3828 = vpop.f32.mrf.mxu0
    %v3829 = vadd.f32 %v3788, %v3828
    %v3830 = vpop.f32.mrf.mxu0
    %v3831 = vadd.f32 %v3790, %v3830
    %v3832 = vpop.f32.mrf.mxu0
    %v3833 = vpop.f32.mrf.mxu0
    %3834 = vdwg.mxu0
    %3835 = vmatprep.subr.bf16.mxu0 %v2629
    %3836 = vmatpush1.bf16.msra.mxu0 %v2628
    %3837 = vmatprep.subr.bf16.mxu0 %v2625
    %3838 = vmatpush1.bf16.msra.mxu0 %v2624
    %3839 = vmatprep.subr.bf16.mxu0 %v2621
    %3840 = vmatpush1.bf16.msra.mxu0 %v2620
    %3841 = vmatprep.subr.bf16.mxu0 %v2617
    %3842 = vmatpush1.bf16.msra.mxu0 %v2616
    %3843 = vmatprep.subr.bf16.mxu0 %v2613
    %3844 = vmatpush1.bf16.msra.mxu0 %v2612
    %3845 = vmatprep.subr.bf16.mxu0 %v2609
    %3846 = vmatpush1.bf16.msra.mxu0 %v2608
    %3847 = vmatprep.subr.bf16.mxu0 %v2605
    %3848 = vmatpush1.bf16.msra.mxu0 %v2604
    %3849 = vmatprep.subr.bf16.mxu0 %v2601
    %3850 = vmatpush1.bf16.msra.mxu0 %v2600
    %3851 = vmatprep.subr.bf16.mxu0 %v2661
    %3852 = vmatpush2.bf16.msra.mxu0 %v2660
    %3853 = vmatprep.subr.bf16.mxu0 %v2657
    %3854 = vmatpush2.bf16.msra.mxu0 %v2656
    %3855 = vmatprep.subr.bf16.mxu0 %v2653
    %3856 = vmatpush2.bf16.msra.mxu0 %v2652
    %3857 = vmatprep.subr.bf16.mxu0 %v2649
    %3858 = vmatpush2.bf16.msra.mxu0 %v2648
    %3859 = vmatprep.subr.bf16.mxu0 %v2645
    %3860 = vmatpush2.bf16.msra.mxu0 %v2644
    %3861 = vmatprep.subr.bf16.mxu0 %v2641
    %3862 = vmatpush2.bf16.msra.mxu0 %v2640
    %3863 = vmatprep.subr.bf16.mxu0 %v2637
    %3864 = vmatpush2.bf16.msra.mxu0 %v2636
    %3865 = vmatprep.subr.bf16.mxu0 %v2633
    %3866 = vmatpush2.bf16.msra.mxu0 %v2632
    %3867 = vmatprep.mubr.bf16.mxu0 %v721
    %3868 = vmatmul.mubr.bf16.gmra.mxu0 %v720
    %v3869 = vpop.f32.mrf.mxu0
    %v3870 = vadd.f32 %v3829, %v3869
    %v3871 = vpop.f32.mrf.mxu0
    %v3872 = vadd.f32 %v3831, %v3871
    %v3873 = vpop.f32.mrf.mxu0
    %v3874 = vpop.f32.mrf.mxu0
    %3875 = vdwg.mxu0
    %3876 = vmatprep.subr.bf16.mxu0 %v2693
    %3877 = vmatpush1.bf16.msra.mxu0 %v2692
    %3878 = vmatprep.subr.bf16.mxu0 %v2689
    %3879 = vmatpush1.bf16.msra.mxu0 %v2688
    %3880 = vmatprep.subr.bf16.mxu0 %v2685
    %3881 = vmatpush1.bf16.msra.mxu0 %v2684
    %3882 = vmatprep.subr.bf16.mxu0 %v2681
    %3883 = vmatpush1.bf16.msra.mxu0 %v2680
    %3884 = vmatprep.subr.bf16.mxu0 %v2677
    %3885 = vmatpush1.bf16.msra.mxu0 %v2676
    %3886 = vmatprep.subr.bf16.mxu0 %v2673
    %3887 = vmatpush1.bf16.msra.mxu0 %v2672
    %3888 = vmatprep.subr.bf16.mxu0 %v2669
    %3889 = vmatpush1.bf16.msra.mxu0 %v2668
    %3890 = vmatprep.subr.bf16.mxu0 %v2665
    %3891 = vmatpush1.bf16.msra.mxu0 %v2664
    %3892 = vmatprep.subr.bf16.mxu0 %v2725
    %3893 = vmatpush2.bf16.msra.mxu0 %v2724
    %3894 = vmatprep.subr.bf16.mxu0 %v2721
    %3895 = vmatpush2.bf16.msra.mxu0 %v2720
    %3896 = vmatprep.subr.bf16.mxu0 %v2717
    %3897 = vmatpush2.bf16.msra.mxu0 %v2716
    %3898 = vmatprep.subr.bf16.mxu0 %v2713
    %3899 = vmatpush2.bf16.msra.mxu0 %v2712
    %3900 = vmatprep.subr.bf16.mxu0 %v2709
    %3901 = vmatpush2.bf16.msra.mxu0 %v2708
    %3902 = vmatprep.subr.bf16.mxu0 %v2705
    %3903 = vmatpush2.bf16.msra.mxu0 %v2704
    %3904 = vmatprep.subr.bf16.mxu0 %v2701
    %3905 = vmatpush2.bf16.msra.mxu0 %v2700
    %3906 = vmatprep.subr.bf16.mxu0 %v2697
    %3907 = vmatpush2.bf16.msra.mxu0 %v2696
    %3908 = vmatprep.mubr.bf16.mxu0 %v723
    %3909 = vmatmul.mubr.bf16.gmra.mxu0 %v722
    %v3910 = vpop.f32.mrf.mxu0
    %v3911 = vadd.f32 %v3870, %v3910
    %v3912 = vpop.f32.mrf.mxu0
    %v3913 = vadd.f32 %v3872, %v3912
    %v3914 = vpop.f32.mrf.mxu0
    %v3915 = vpop.f32.mrf.mxu0
    %3916 = vdwg.mxu0
    %3917 = vmatprep.subr.bf16.mxu0 %v2757
    %3918 = vmatpush1.bf16.msra.mxu0 %v2756
    %3919 = vmatprep.subr.bf16.mxu0 %v2753
    %3920 = vmatpush1.bf16.msra.mxu0 %v2752
    %3921 = vmatprep.subr.bf16.mxu0 %v2749
    %3922 = vmatpush1.bf16.msra.mxu0 %v2748
    %3923 = vmatprep.subr.bf16.mxu0 %v2745
    %3924 = vmatpush1.bf16.msra.mxu0 %v2744
    %3925 = vmatprep.subr.bf16.mxu0 %v2741
    %3926 = vmatpush1.bf16.msra.mxu0 %v2740
    %3927 = vmatprep.subr.bf16.mxu0 %v2737
    %3928 = vmatpush1.bf16.msra.mxu0 %v2736
    %3929 = vmatprep.subr.bf16.mxu0 %v2733
    %3930 = vmatpush1.bf16.msra.mxu0 %v2732
    %3931 = vmatprep.subr.bf16.mxu0 %v2729
    %3932 = vmatpush1.bf16.msra.mxu0 %v2728
    %3933 = vmatprep.subr.bf16.mxu0 %v2789
    %3934 = vmatpush2.bf16.msra.mxu0 %v2788
    %3935 = vmatprep.subr.bf16.mxu0 %v2785
    %3936 = vmatpush2.bf16.msra.mxu0 %v2784
    %3937 = vmatprep.subr.bf16.mxu0 %v2781
    %3938 = vmatpush2.bf16.msra.mxu0 %v2780
    %3939 = vmatprep.subr.bf16.mxu0 %v2777
    %3940 = vmatpush2.bf16.msra.mxu0 %v2776
    %3941 = vmatprep.subr.bf16.mxu0 %v2773
    %3942 = vmatpush2.bf16.msra.mxu0 %v2772
    %3943 = vmatprep.subr.bf16.mxu0 %v2769
    %3944 = vmatpush2.bf16.msra.mxu0 %v2768
    %3945 = vmatprep.subr.bf16.mxu0 %v2765
    %3946 = vmatpush2.bf16.msra.mxu0 %v2764
    %3947 = vmatprep.subr.bf16.mxu0 %v2761
    %3948 = vmatpush2.bf16.msra.mxu0 %v2760
    %3949 = vmatprep.mubr.bf16.mxu0 %v725
    %3950 = vmatmul.mubr.bf16.gmra.mxu0 %v724
    %v3951 = vpop.f32.mrf.mxu0
    %v3952 = vadd.f32 %v3911, %v3951
    %v3953 = vpop.f32.mrf.mxu0
    %v3954 = vadd.f32 %v3913, %v3953
    %v3955 = vpop.f32.mrf.mxu0
    %v3956 = vpop.f32.mrf.mxu0
    %3957 = vdwg.mxu0
    %v3958 = vmax.f32 %v3624, 0.0
    %v3959 = vmax.f32 %v3626, 0.0
    %v3960 = vmax.f32 %v3952, 0.0
    %v3961 = vmax.f32 %v3954, 0.0
    %v3962 = vpack.c.bf16 %v3958, %v3958
    %v3963 = vpack.c.bf16 %v3959, %v3959
    %v3964 = vpack.c.bf16 %v3960, %v3960
    %v3965 = vpack.c.bf16 %v3961, %v3961
    %v3966 = vld [vmem:[#allocation8] sm:$0xf]
    %v3967 = vld [vmem:[#allocation8 + $0x4] sm:$0xf]
    %v3968 = vld [vmem:[#allocation8 + $0x8] sm:$0xf]
    %v3969 = vld [vmem:[#allocation8 + $0xc] sm:$0xf]
    %v3970 = vld [vmem:[#allocation8 + $0x10] sm:$0xf]
    %v3971 = vld [vmem:[#allocation8 + $0x14] sm:$0xf]
    %v3972 = vld [vmem:[#allocation8 + $0x18] sm:$0xf]
    %v3973 = vld [vmem:[#allocation8 + $0x1c] sm:$0xf]
    %v3974 = vld [vmem:[#allocation8 + $0x20] sm:$0xf]
    %v3975 = vld [vmem:[#allocation8 + $0x24] sm:$0xf]
    %v3976 = vld [vmem:[#allocation8 + $0x28] sm:$0xf]
    %v3977 = vld [vmem:[#allocation8 + $0x2c] sm:$0xf]
    %v3978 = vld [vmem:[#allocation8 + $0x30] sm:$0xf]
    %v3979 = vld [vmem:[#allocation8 + $0x34] sm:$0xf]
    %v3980 = vld [vmem:[#allocation8 + $0x38] sm:$0xf]
    %v3981 = vld [vmem:[#allocation8 + $0x3c] sm:$0xf]
    %v3982 = vld [vmem:[#allocation8 + $0x40] sm:$0xf]
    %v3983 = vld [vmem:[#allocation8 + $0x44] sm:$0xf]
    %v3984 = vld [vmem:[#allocation8 + $0x48] sm:$0xf]
    %v3985 = vld [vmem:[#allocation8 + $0x4c] sm:$0xf]
    %v3986 = vld [vmem:[#allocation8 + $0x50] sm:$0xf]
    %v3987 = vld [vmem:[#allocation8 + $0x54] sm:$0xf]
    %v3988 = vld [vmem:[#allocation8 + $0x58] sm:$0xf]
    %v3989 = vld [vmem:[#allocation8 + $0x5c] sm:$0xf]
    %v3990 = vld [vmem:[#allocation8 + $0x60] sm:$0xf]
    %v3991 = vld [vmem:[#allocation8 + $0x64] sm:$0xf]
    %v3992 = vld [vmem:[#allocation8 + $0x68] sm:$0xf]
    %v3993 = vld [vmem:[#allocation8 + $0x6c] sm:$0xf]
    %v3994 = vld [vmem:[#allocation8 + $0x70] sm:$0xf]
    %v3995 = vld [vmem:[#allocation8 + $0x74] sm:$0xf]
    %v3996 = vld [vmem:[#allocation8 + $0x78] sm:$0xf]
    %v3997 = vld [vmem:[#allocation8 + $0x7c] sm:$0xf]
    %v3998 = vld [vmem:[#allocation8 + $0x80] sm:$0xf]
    %v3999 = vld [vmem:[#allocation8 + $0x84] sm:$0xf]
    %v4000 = vld [vmem:[#allocation8 + $0x88] sm:$0xf]
    %v4001 = vld [vmem:[#allocation8 + $0x8c] sm:$0xf]
    %v4002 = vld [vmem:[#allocation8 + $0x90] sm:$0xf]
    %v4003 = vld [vmem:[#allocation8 + $0x94] sm:$0xf]
    %v4004 = vld [vmem:[#allocation8 + $0x98] sm:$0xf]
    %v4005 = vld [vmem:[#allocation8 + $0x9c] sm:$0xf]
    %v4006 = vld [vmem:[#allocation8 + $0xa0] sm:$0xf]
    %v4007 = vld [vmem:[#allocation8 + $0xa4] sm:$0xf]
    %v4008 = vld [vmem:[#allocation8 + $0xa8] sm:$0xf]
    %v4009 = vld [vmem:[#allocation8 + $0xac] sm:$0xf]
    %v4010 = vld [vmem:[#allocation8 + $0xb0] sm:$0xf]
    %v4011 = vld [vmem:[#allocation8 + $0xb4] sm:$0xf]
    %v4012 = vld [vmem:[#allocation8 + $0xb8] sm:$0xf]
    %v4013 = vld [vmem:[#allocation8 + $0xbc] sm:$0xf]
    %v4014 = vld [vmem:[#allocation8 + $0xc0] sm:$0xf]
    %v4015 = vld [vmem:[#allocation8 + $0xc4] sm:$0xf]
    %v4016 = vld [vmem:[#allocation8 + $0xc8] sm:$0xf]
    %v4017 = vld [vmem:[#allocation8 + $0xcc] sm:$0xf]
    %v4018 = vld [vmem:[#allocation8 + $0xd0] sm:$0xf]
    %v4019 = vld [vmem:[#allocation8 + $0xd4] sm:$0xf]
    %v4020 = vld [vmem:[#allocation8 + $0xd8] sm:$0xf]
    %v4021 = vld [vmem:[#allocation8 + $0xdc] sm:$0xf]
    %v4022 = vld [vmem:[#allocation8 + $0xe0] sm:$0xf]
    %v4023 = vld [vmem:[#allocation8 + $0xe4] sm:$0xf]
    %v4024 = vld [vmem:[#allocation8 + $0xe8] sm:$0xf]
    %v4025 = vld [vmem:[#allocation8 + $0xec] sm:$0xf]
    %v4026 = vld [vmem:[#allocation8 + $0xf0] sm:$0xf]
    %v4027 = vld [vmem:[#allocation8 + $0xf4] sm:$0xf]
    %v4028 = vld [vmem:[#allocation8 + $0xf8] sm:$0xf]
    %v4029 = vld [vmem:[#allocation8 + $0xfc] sm:$0xf]
    %v4030 = vld [vmem:[#allocation10] sm:$0x1]
    %v4032 = vlaneseq
    %v4033 = vshrl.u32 %v4032, 7
    %v4034 = vsub.s32 0, %v4033
    %v4035 = vrot.slane %v4030, %v4034
    %v4101 = vunpack.c.l.b16 %v3966
    %v4102 = vunpack.c.l.b16 %v3967
    %v4103 = vunpack.c.l.b16 %v3968
    %v4104 = vunpack.c.l.b16 %v3969
    %v4105 = vunpack.c.l.b16 %v3970
    %v4106 = vunpack.c.l.b16 %v3971
    %v4107 = vunpack.c.l.b16 %v3972
    %v4108 = vunpack.c.l.b16 %v3973
    %v4109 = vunpack.c.l.b16 %v3974
    %v4110 = vunpack.c.l.b16 %v3975
    %v4111 = vunpack.c.l.b16 %v3976
    %v4112 = vunpack.c.l.b16 %v3977
    %v4113 = vunpack.c.l.b16 %v3978
    %v4114 = vunpack.c.l.b16 %v3979
    %v4115 = vunpack.c.l.b16 %v3980
    %v4116 = vunpack.c.l.b16 %v3981
    %v4117 = vunpack.c.l.b16 %v3982
    %v4118 = vunpack.c.l.b16 %v3983
    %v4119 = vunpack.c.l.b16 %v3984
    %v4120 = vunpack.c.l.b16 %v3985
    %v4121 = vunpack.c.l.b16 %v3986
    %v4122 = vunpack.c.l.b16 %v3987
    %v4123 = vunpack.c.l.b16 %v3988
    %v4124 = vunpack.c.l.b16 %v3989
    %v4125 = vunpack.c.l.b16 %v3990
    %v4126 = vunpack.c.l.b16 %v3991
    %v4127 = vunpack.c.l.b16 %v3992
    %v4128 = vunpack.c.l.b16 %v3993
    %v4129 = vunpack.c.l.b16 %v3994
    %v4130 = vunpack.c.l.b16 %v3995
    %v4131 = vunpack.c.l.b16 %v3996
    %v4132 = vunpack.c.l.b16 %v3997
    %v4133 = vunpack.c.l.b16 %v3998
    %v4134 = vunpack.c.l.b16 %v3999
    %v4135 = vunpack.c.l.b16 %v4000
    %v4136 = vunpack.c.l.b16 %v4001
    %v4137 = vunpack.c.l.b16 %v4002
    %v4138 = vunpack.c.l.b16 %v4003
    %v4139 = vunpack.c.l.b16 %v4004
    %v4140 = vunpack.c.l.b16 %v4005
    %v4141 = vunpack.c.l.b16 %v4006
    %v4142 = vunpack.c.l.b16 %v4007
    %v4143 = vunpack.c.l.b16 %v4008
    %v4144 = vunpack.c.l.b16 %v4009
    %v4145 = vunpack.c.l.b16 %v4010
    %v4146 = vunpack.c.l.b16 %v4011
    %v4147 = vunpack.c.l.b16 %v4012
    %v4148 = vunpack.c.l.b16 %v4013
    %v4149 = vunpack.c.l.b16 %v4014
    %v4150 = vunpack.c.l.b16 %v4015
    %v4151 = vunpack.c.l.b16 %v4016
    %v4152 = vunpack.c.l.b16 %v4017
    %v4153 = vunpack.c.l.b16 %v4018
    %v4154 = vunpack.c.l.b16 %v4019
    %v4155 = vunpack.c.l.b16 %v4020
    %v4156 = vunpack.c.l.b16 %v4021
    %v4157 = vunpack.c.l.b16 %v4022
    %v4158 = vunpack.c.l.b16 %v4023
    %v4159 = vunpack.c.l.b16 %v4024
    %v4160 = vunpack.c.l.b16 %v4025
    %v4161 = vunpack.c.l.b16 %v4026
    %v4162 = vunpack.c.l.b16 %v4027
    %v4163 = vunpack.c.l.b16 %v4028
    %v4164 = vunpack.c.l.b16 %v4029
    %v4165 = vpack.c.b16 %v4102, %v4101
    %v4166 = vpack.c.b16 %v4104, %v4103
    %v4167 = vpack.c.b16 %v4106, %v4105
    %v4168 = vpack.c.b16 %v4108, %v4107
    %v4169 = vpack.c.b16 %v4110, %v4109
    %v4170 = vpack.c.b16 %v4112, %v4111
    %v4171 = vpack.c.b16 %v4114, %v4113
    %v4172 = vpack.c.b16 %v4116, %v4115
    %v4173 = vpack.c.b16 %v4118, %v4117
    %v4174 = vpack.c.b16 %v4120, %v4119
    %v4175 = vpack.c.b16 %v4122, %v4121
    %v4176 = vpack.c.b16 %v4124, %v4123
    %v4177 = vpack.c.b16 %v4126, %v4125
    %v4178 = vpack.c.b16 %v4128, %v4127
    %v4179 = vpack.c.b16 %v4130, %v4129
    %v4180 = vpack.c.b16 %v4132, %v4131
    %v4181 = vpack.c.b16 %v4134, %v4133
    %v4182 = vpack.c.b16 %v4136, %v4135
    %v4183 = vpack.c.b16 %v4138, %v4137
    %v4184 = vpack.c.b16 %v4140, %v4139
    %v4185 = vpack.c.b16 %v4142, %v4141
    %v4186 = vpack.c.b16 %v4144, %v4143
    %v4187 = vpack.c.b16 %v4146, %v4145
    %v4188 = vpack.c.b16 %v4148, %v4147
    %v4189 = vpack.c.b16 %v4150, %v4149
    %v4190 = vpack.c.b16 %v4152, %v4151
    %v4191 = vpack.c.b16 %v4154, %v4153
    %v4192 = vpack.c.b16 %v4156, %v4155
    %v4193 = vpack.c.b16 %v4158, %v4157
    %v4194 = vpack.c.b16 %v4160, %v4159
    %v4195 = vpack.c.b16 %v4162, %v4161
    %v4196 = vpack.c.b16 %v4164, %v4163
    %4229 = vmatprep.subr.bf16.mxu0 0
    %4230 = vmatpush1.bf16.msra.mxu0 %v4172
    %4231 = vmatprep.subr.bf16.mxu0 0
    %4232 = vmatpush1.bf16.msra.mxu0 %v4171
    %4233 = vmatprep.subr.bf16.mxu0 0
    %4234 = vmatpush1.bf16.msra.mxu0 %v4170
    %4235 = vmatprep.subr.bf16.mxu0 0
    %4236 = vmatpush1.bf16.msra.mxu0 %v4169
    %4237 = vmatprep.subr.bf16.mxu0 0
    %4238 = vmatpush1.bf16.msra.mxu0 %v4168
    %4239 = vmatprep.subr.bf16.mxu0 0
    %4240 = vmatpush1.bf16.msra.mxu0 %v4167
    %4241 = vmatprep.subr.bf16.mxu0 0
    %4242 = vmatpush1.bf16.msra.mxu0 %v4166
    %4243 = vmatprep.subr.bf16.mxu0 0
    %4244 = vmatpush1.bf16.msra.mxu0 %v4165
    %4245 = vmatprep.subr.bf16.mxu0 0
    %4246 = vmatpush2.bf16.msra.mxu0 %v4180
    %4247 = vmatprep.subr.bf16.mxu0 0
    %4248 = vmatpush2.bf16.msra.mxu0 %v4179
    %4249 = vmatprep.subr.bf16.mxu0 0
    %4250 = vmatpush2.bf16.msra.mxu0 %v4178
    %4251 = vmatprep.subr.bf16.mxu0 0
    %4252 = vmatpush2.bf16.msra.mxu0 %v4177
    %4253 = vmatprep.subr.bf16.mxu0 0
    %4254 = vmatpush2.bf16.msra.mxu0 %v4176
    %4255 = vmatprep.subr.bf16.mxu0 0
    %4256 = vmatpush2.bf16.msra.mxu0 %v4175
    %4257 = vmatprep.subr.bf16.mxu0 0
    %4258 = vmatpush2.bf16.msra.mxu0 %v4174
    %4259 = vmatprep.subr.bf16.mxu0 0
    %4260 = vmatpush2.bf16.msra.mxu0 %v4173
    %4261 = vmatprep.mubr.bf16.mxu0 %v3963
    %4262 = vmatmul.mubr.bf16.gmra.mxu0 %v3962
    %v4263 = vpop.f32.mrf.mxu0
    %v4264 = vadd.f32 %v4035, %v4263
    %v4265 = vpop.f32.mrf.mxu0
    %v4266 = vpop.f32.mrf.mxu0
    %v4267 = vpop.f32.mrf.mxu0
    %4268 = vdwg.mxu0
    %4269 = vmatprep.subr.bf16.mxu0 0
    %4270 = vmatpush1.bf16.msra.mxu0 %v4188
    %4271 = vmatprep.subr.bf16.mxu0 0
    %4272 = vmatpush1.bf16.msra.mxu0 %v4187
    %4273 = vmatprep.subr.bf16.mxu0 0
    %4274 = vmatpush1.bf16.msra.mxu0 %v4186
    %4275 = vmatprep.subr.bf16.mxu0 0
    %4276 = vmatpush1.bf16.msra.mxu0 %v4185
    %4277 = vmatprep.subr.bf16.mxu0 0
    %4278 = vmatpush1.bf16.msra.mxu0 %v4184
    %4279 = vmatprep.subr.bf16.mxu0 0
    %4280 = vmatpush1.bf16.msra.mxu0 %v4183
    %4281 = vmatprep.subr.bf16.mxu0 0
    %4282 = vmatpush1.bf16.msra.mxu0 %v4182
    %4283 = vmatprep.subr.bf16.mxu0 0
    %4284 = vmatpush1.bf16.msra.mxu0 %v4181
    %4285 = vmatprep.subr.bf16.mxu0 0
    %4286 = vmatpush2.bf16.msra.mxu0 %v4196
    %4287 = vmatprep.subr.bf16.mxu0 0
    %4288 = vmatpush2.bf16.msra.mxu0 %v4195
    %4289 = vmatprep.subr.bf16.mxu0 0
    %4290 = vmatpush2.bf16.msra.mxu0 %v4194
    %4291 = vmatprep.subr.bf16.mxu0 0
    %4292 = vmatpush2.bf16.msra.mxu0 %v4193
    %4293 = vmatprep.subr.bf16.mxu0 0
    %4294 = vmatpush2.bf16.msra.mxu0 %v4192
    %4295 = vmatprep.subr.bf16.mxu0 0
    %4296 = vmatpush2.bf16.msra.mxu0 %v4191
    %4297 = vmatprep.subr.bf16.mxu0 0
    %4298 = vmatpush2.bf16.msra.mxu0 %v4190
    %4299 = vmatprep.subr.bf16.mxu0 0
    %4300 = vmatpush2.bf16.msra.mxu0 %v4189
    %4301 = vmatprep.mubr.bf16.mxu0 %v3965
    %4302 = vmatmul.mubr.bf16.gmra.mxu0 %v3964
    %v4303 = vpop.f32.mrf.mxu0
    %v4304 = vadd.f32 %v4264, %v4303
    %v4305 = vpop.f32.mrf.mxu0
    %v4306 = vpop.f32.mrf.mxu0
    %v4307 = vpop.f32.mrf.mxu0
    %4308 = vdwg.mxu0
    %v4309 = vmax.f32 %v4304, 0.0
    %v4310 = vpack.c.bf16 %v4309, %v4309
    %v4311 = vld [vmem:[%s5] sm:$0xf]
    %v4312 = vld [vmem:[%s5 + $0x4] sm:$0xf]
    %v4313 = vld [vmem:[%s5 + $0x8] sm:$0xf]
    %v4314 = vld [vmem:[%s5 + $0xc] sm:$0xf]
    %v4315 = vld [vmem:[%s5 + $0x10] sm:$0xf]
    %v4316 = vld [vmem:[%s5 + $0x14] sm:$0xf]
    %v4317 = vld [vmem:[%s5 + $0x18] sm:$0xf]
    %v4318 = vld [vmem:[%s5 + $0x1c] sm:$0xf]
    %v4319 = vld [vmem:[%s5 + $0x20] sm:$0xf]
    %v4320 = vld [vmem:[%s5 + $0x24] sm:$0xf]
    %v4321 = vld [vmem:[%s5 + $0x28] sm:$0xf]
    %v4322 = vld [vmem:[%s5 + $0x2c] sm:$0xf]
    %v4323 = vld [vmem:[%s5 + $0x30] sm:$0xf]
    %v4324 = vld [vmem:[%s5 + $0x34] sm:$0xf]
    %v4325 = vld [vmem:[%s5 + $0x38] sm:$0xf]
    %v4326 = vld [vmem:[%s5 + $0x3c] sm:$0xf]
    %v4327 = vld [vmem:[#allocation11] sm:$0x1]
    %v4329 = vlaneseq
    %v4330 = vshrl.u32 %v4329, 7
    %v4331 = vsub.s32 0, %v4330
    %v4332 = vrot.slane %v4327, %v4331
    %v4350 = vunpack.c.l.b16 %v4311
    %v4351 = vunpack.c.l.b16 %v4312
    %v4352 = vunpack.c.l.b16 %v4313
    %v4353 = vunpack.c.l.b16 %v4314
    %v4354 = vunpack.c.l.b16 %v4315
    %v4355 = vunpack.c.l.b16 %v4316
    %v4356 = vunpack.c.l.b16 %v4317
    %v4357 = vunpack.c.l.b16 %v4318
    %v4358 = vunpack.c.l.b16 %v4319
    %v4359 = vunpack.c.l.b16 %v4320
    %v4360 = vunpack.c.l.b16 %v4321
    %v4361 = vunpack.c.l.b16 %v4322
    %v4362 = vunpack.c.l.b16 %v4323
    %v4363 = vunpack.c.l.b16 %v4324
    %v4364 = vunpack.c.l.b16 %v4325
    %v4365 = vunpack.c.l.b16 %v4326
    %v4366 = vpack.c.b16 %v4351, %v4350
    %v4367 = vpack.c.b16 %v4353, %v4352
    %v4368 = vpack.c.b16 %v4355, %v4354
    %v4369 = vpack.c.b16 %v4357, %v4356
    %v4370 = vpack.c.b16 %v4359, %v4358
    %v4371 = vpack.c.b16 %v4361, %v4360
    %v4372 = vpack.c.b16 %v4363, %v4362
    %v4373 = vpack.c.b16 %v4365, %v4364
    %4382 = vmatprep.subr.bf16.mxu0 0
    %4383 = vmatpush1.bf16.msra.mxu0 %v4373
    %4384 = vmatprep.subr.bf16.mxu0 0
    %4385 = vmatpush1.bf16.msra.mxu0 %v4372
    %4386 = vmatprep.subr.bf16.mxu0 0
    %4387 = vmatpush1.bf16.msra.mxu0 %v4371
    %4388 = vmatprep.subr.bf16.mxu0 0
    %4389 = vmatpush1.bf16.msra.mxu0 %v4370
    %4390 = vmatprep.subr.bf16.mxu0 0
    %4391 = vmatpush1.bf16.msra.mxu0 %v4369
    %4392 = vmatprep.subr.bf16.mxu0 0
    %4393 = vmatpush1.bf16.msra.mxu0 %v4368
    %4394 = vmatprep.subr.bf16.mxu0 0
    %4395 = vmatpush1.bf16.msra.mxu0 %v4367
    %4396 = vmatprep.subr.bf16.mxu0 0
    %4397 = vmatpush1.bf16.msra.mxu0 %v4366
    %4398 = vmatprep.subr.bf16.mxu0 0
    %4399 = vmatpush2.bf16.msra.mxu0 0
    %4400 = vmatprep.subr.bf16.mxu0 0
    %4401 = vmatpush2.bf16.msra.mxu0 0
    %4402 = vmatprep.subr.bf16.mxu0 0
    %4403 = vmatpush2.bf16.msra.mxu0 0
    %4404 = vmatprep.subr.bf16.mxu0 0
    %4405 = vmatpush2.bf16.msra.mxu0 0
    %4406 = vmatprep.subr.bf16.mxu0 0
    %4407 = vmatpush2.bf16.msra.mxu0 0
    %4408 = vmatprep.subr.bf16.mxu0 0
    %4409 = vmatpush2.bf16.msra.mxu0 0
    %4410 = vmatprep.subr.bf16.mxu0 0
    %4411 = vmatpush2.bf16.msra.mxu0 0
    %4412 = vmatprep.subr.bf16.mxu0 0
    %4413 = vmatpush2.bf16.msra.mxu0 0
    %4414 = vmatprep.mubr.bf16.mxu0 0
    %4415 = vmatmul.mubr.bf16.gmra.mxu0 %v4310
    %v4416 = vpop.f32.mrf.mxu0
    %v4417 = vadd.f32 %v4332, %v4416
    %v4418 = vpop.f32.mrf.mxu0
    %v4419 = vpop.f32.mrf.mxu0
    %v4420 = vpop.f32.mrf.mxu0
    %4421 = vdwg.mxu0
    %v4422 = vmax.f32 %v4417, 0.0
    %v4423 = vld [vmem:[%s7] sm:$0xff]
    %v4424 = vld [vmem:[%s7 + $0x8] sm:$0xff]
    %v4425 = vld [vmem:[%s7 + $0x10] sm:$0xff]
    %v4426 = vld [vmem:[%s7 + $0x18] sm:$0xff]
    %v4427 = vld [vmem:[#allocation13] sm:$0x1]
    %v4429 = vlaneseq
    %v4430 = vshrl.u32 %v4429, 7
    %v4431 = vsub.s32 0, %v4430
    %v4432 = vrot.slane %v4427, %v4431
    %vm4434 = vcmask 261120
    %v4436 = vsel %vm4434, %v4422, 0
    %4438 = vmatprep.subr.mxu0 0.0
    %4439 = vmatpush1.msra.mxu0 0.0
    %4440 = vmatprep.subr.mxu0 0.0
    %4441 = vmatpush1.msra.mxu0 0.0
    %4442 = vmatprep.subr.mxu0 0.0
    %4443 = vmatpush1.msra.mxu0 0.0
    %4444 = vmatprep.subr.mxu0 0.0
    %4445 = vmatpush1.msra.mxu0 0.0
    %4446 = vmatprep.subr.mxu0 0.0
    %4447 = vmatpush1.msra.mxu0 0.0
    %4448 = vmatprep.subr.mxu0 0.0
    %4449 = vmatpush1.msra.mxu0 0.0
    %4450 = vmatprep.subr.mxu0 0.0
    %4451 = vmatpush1.msra.mxu0 0.0
    %4452 = vmatprep.subr.mxu0 0.0
    %4453 = vmatpush1.msra.mxu0 0.0
    %4454 = vmatprep.subr.mxu0 0.0
    %4455 = vmatpush1.msra.mxu0 0.0
    %4456 = vmatprep.subr.mxu0 0.0
    %4457 = vmatpush1.msra.mxu0 0.0
    %4458 = vmatprep.subr.mxu0 0.0
    %4459 = vmatpush1.msra.mxu0 0.0
    %4460 = vmatprep.subr.mxu0 0.0
    %4461 = vmatpush1.msra.mxu0 0.0
    %4462 = vmatprep.subr.mxu0 0.0
    %4463 = vmatpush1.msra.mxu0 %v4426
    %4464 = vmatprep.subr.mxu0 0.0
    %4465 = vmatpush1.msra.mxu0 %v4425
    %4466 = vmatprep.subr.mxu0 0.0
    %4467 = vmatpush1.msra.mxu0 %v4424
    %4468 = vmatprep.subr.mxu0 0.0
    %4469 = vmatpush1.msra.mxu0 %v4423
    %4470 = vmatprep.subr.mxu0 0.0
    %4471 = vmatpush2.msra.mxu0 0.0
    %4472 = vmatprep.subr.mxu0 0.0
    %4473 = vmatpush2.msra.mxu0 0.0
    %4474 = vmatprep.subr.mxu0 0.0
    %4475 = vmatpush2.msra.mxu0 0.0
    %4476 = vmatprep.subr.mxu0 0.0
    %4477 = vmatpush2.msra.mxu0 0.0
    %4478 = vmatprep.subr.mxu0 0.0
    %4479 = vmatpush2.msra.mxu0 0.0
    %4480 = vmatprep.subr.mxu0 0.0
    %4481 = vmatpush2.msra.mxu0 0.0
    %4482 = vmatprep.subr.mxu0 0.0
    %4483 = vmatpush2.msra.mxu0 0.0
    %4484 = vmatprep.subr.mxu0 0.0
    %4485 = vmatpush2.msra.mxu0 0.0
    %4486 = vmatprep.subr.mxu0 0.0
    %4487 = vmatpush2.msra.mxu0 0.0
    %4488 = vmatprep.subr.mxu0 0.0
    %4489 = vmatpush2.msra.mxu0 0.0
    %4490 = vmatprep.subr.mxu0 0.0
    %4491 = vmatpush2.msra.mxu0 0.0
    %4492 = vmatprep.subr.mxu0 0.0
    %4493 = vmatpush2.msra.mxu0 0.0
    %4494 = vmatprep.subr.mxu0 0.0
    %4495 = vmatpush2.msra.mxu0 0.0
    %4496 = vmatprep.subr.mxu0 0.0
    %4497 = vmatpush2.msra.mxu0 0.0
    %4498 = vmatprep.subr.mxu0 0.0
    %4499 = vmatpush2.msra.mxu0 0.0
    %4500 = vmatprep.subr.mxu0 0.0
    %4501 = vmatpush2.msra.mxu0 0.0
    %4502 = vmatprep.mubr.f32.mxu0 0.0
    %4503 = vmatmul.mubr.f32.gmra.mxu0 %v4436
    %v4504 = vpop.f32.mrf.mxu0
    %v4505 = vadd.f32 %v4432, %v4504
    %v4506 = vpop.f32.mrf.mxu0
    %4507 = vdwg.mxu0
    %v4508 = vmax.f32 %v4505, 0.0
    %v4509 = vld [vmem:[%s9] sm:$0xff]
    %v4510 = vld [vmem:[#allocation14] sm:$0x1]
    %v4512 = vlaneseq
    %v4513 = vshrl.u32 %v4512, 7
    %v4514 = vsub.s32 0, %v4513
    %v4515 = vrot.slane %v4510, %v4514
    %vm4517 = vcmask 64512
    %v4519 = vsel %vm4517, %v4508, 0
    %4521 = vmatprep.subr.mxu0 0.0
    %4522 = vmatpush1.msra.mxu0 0.0
    %4523 = vmatprep.subr.mxu0 0.0
    %4524 = vmatpush1.msra.mxu0 0.0
    %4525 = vmatprep.subr.mxu0 0.0
    %4526 = vmatpush1.msra.mxu0 0.0
    %4527 = vmatprep.subr.mxu0 0.0
    %4528 = vmatpush1.msra.mxu0 0.0
    %4529 = vmatprep.subr.mxu0 0.0
    %4530 = vmatpush1.msra.mxu0 0.0
    %4531 = vmatprep.subr.mxu0 0.0
    %4532 = vmatpush1.msra.mxu0 0.0
    %4533 = vmatprep.subr.mxu0 0.0
    %4534 = vmatpush1.msra.mxu0 0.0
    %4535 = vmatprep.subr.mxu0 0.0
    %4536 = vmatpush1.msra.mxu0 0.0
    %4537 = vmatprep.subr.mxu0 0.0
    %4538 = vmatpush1.msra.mxu0 0.0
    %4539 = vmatprep.subr.mxu0 0.0
    %4540 = vmatpush1.msra.mxu0 0.0
    %4541 = vmatprep.subr.mxu0 0.0
    %4542 = vmatpush1.msra.mxu0 0.0
    %4543 = vmatprep.subr.mxu0 0.0
    %4544 = vmatpush1.msra.mxu0 0.0
    %4545 = vmatprep.subr.mxu0 0.0
    %4546 = vmatpush1.msra.mxu0 0.0
    %4547 = vmatprep.subr.mxu0 0.0
    %4548 = vmatpush1.msra.mxu0 0.0
    %4549 = vmatprep.subr.mxu0 0.0
    %4550 = vmatpush1.msra.mxu0 0.0
    %4551 = vmatprep.subr.mxu0 0.0
    %4552 = vmatpush1.msra.mxu0 %v4509
    %4553 = vmatprep.subr.mxu0 0.0
    %4554 = vmatpush2.msra.mxu0 0.0
    %4555 = vmatprep.subr.mxu0 0.0
    %4556 = vmatpush2.msra.mxu0 0.0
    %4557 = vmatprep.subr.mxu0 0.0
    %4558 = vmatpush2.msra.mxu0 0.0
    %4559 = vmatprep.subr.mxu0 0.0
    %4560 = vmatpush2.msra.mxu0 0.0
    %4561 = vmatprep.subr.mxu0 0.0
    %4562 = vmatpush2.msra.mxu0 0.0
    %4563 = vmatprep.subr.mxu0 0.0
    %4564 = vmatpush2.msra.mxu0 0.0
    %4565 = vmatprep.subr.mxu0 0.0
    %4566 = vmatpush2.msra.mxu0 0.0
    %4567 = vmatprep.subr.mxu0 0.0
    %4568 = vmatpush2.msra.mxu0 0.0
    %4569 = vmatprep.subr.mxu0 0.0
    %4570 = vmatpush2.msra.mxu0 0.0
    %4571 = vmatprep.subr.mxu0 0.0
    %4572 = vmatpush2.msra.mxu0 0.0
    %4573 = vmatprep.subr.mxu0 0.0
    %4574 = vmatpush2.msra.mxu0 0.0
    %4575 = vmatprep.subr.mxu0 0.0
    %4576 = vmatpush2.msra.mxu0 0.0
    %4577 = vmatprep.subr.mxu0 0.0
    %4578 = vmatpush2.msra.mxu0 0.0
    %4579 = vmatprep.subr.mxu0 0.0
    %4580 = vmatpush2.msra.mxu0 0.0
    %4581 = vmatprep.subr.mxu0 0.0
    %4582 = vmatpush2.msra.mxu0 0.0
    %4583 = vmatprep.subr.mxu0 0.0
    %4584 = vmatpush2.msra.mxu0 0.0
    %4585 = vmatprep.mubr.f32.mxu0 0.0
    %4586 = vmatmul.mubr.f32.gmra.mxu0 %v4519
    %v4587 = vpop.f32.mrf.mxu0
    %v4588 = vadd.f32 %v4515, %v4587
    %v4589 = vpop.f32.mrf.mxu0
    %4590 = vdwg.mxu0
    %v4591 = vmax.f32 %v4588, 0.0
    %v4592 = vld [vmem:[%s11] sm:$0x3]
    %v4593 = vld [vmem:[#allocation2] sm:$0x1]
    %v4595 = vlaneseq
    %v4596 = vshrl.u32 %v4595, 7
    %v4597 = vsub.s32 0, %v4596
    %v4598 = vrot.slane %v4593, %v4597
    %vm4600 = vcmask 15360
    %v4602 = vsel %vm4600, %v4591, 0
    %vm4604 = vcmask 1041408
    %v4606 = vsel %vm4604, %v4592, 0
    %4608 = vmatprep.subr.mxu0 0.0
    %4609 = vmatpush1.msra.mxu0 0.0
    %4610 = vmatprep.subr.mxu0 0.0
    %4611 = vmatpush1.msra.mxu0 0.0
    %4612 = vmatprep.subr.mxu0 0.0
    %4613 = vmatpush1.msra.mxu0 0.0
    %4614 = vmatprep.subr.mxu0 0.0
    %4615 = vmatpush1.msra.mxu0 0.0
    %4616 = vmatprep.subr.mxu0 0.0
    %4617 = vmatpush1.msra.mxu0 0.0
    %4618 = vmatprep.subr.mxu0 0.0
    %4619 = vmatpush1.msra.mxu0 0.0
    %4620 = vmatprep.subr.mxu0 0.0
    %4621 = vmatpush1.msra.mxu0 0.0
    %4622 = vmatprep.subr.mxu0 0.0
    %4623 = vmatpush1.msra.mxu0 0.0
    %4624 = vmatprep.subr.mxu0 0.0
    %4625 = vmatpush1.msra.mxu0 0.0
    %4626 = vmatprep.subr.mxu0 0.0
    %4627 = vmatpush1.msra.mxu0 0.0
    %4628 = vmatprep.subr.mxu0 0.0
    %4629 = vmatpush1.msra.mxu0 0.0
    %4630 = vmatprep.subr.mxu0 0.0
    %4631 = vmatpush1.msra.mxu0 0.0
    %4632 = vmatprep.subr.mxu0 0.0
    %4633 = vmatpush1.msra.mxu0 0.0
    %4634 = vmatprep.subr.mxu0 0.0
    %4635 = vmatpush1.msra.mxu0 0.0
    %4636 = vmatprep.subr.mxu0 0.0
    %4637 = vmatpush1.msra.mxu0 0.0
    %4638 = vmatprep.subr.mxu0 0.0
    %4639 = vmatpush1.msra.mxu0 %v4606
    %4640 = vmatprep.subr.mxu0 0.0
    %4641 = vmatpush2.msra.mxu0 0.0
    %4642 = vmatprep.subr.mxu0 0.0
    %4643 = vmatpush2.msra.mxu0 0.0
    %4644 = vmatprep.subr.mxu0 0.0
    %4645 = vmatpush2.msra.mxu0 0.0
    %4646 = vmatprep.subr.mxu0 0.0
    %4647 = vmatpush2.msra.mxu0 0.0
    %4648 = vmatprep.subr.mxu0 0.0
    %4649 = vmatpush2.msra.mxu0 0.0
    %4650 = vmatprep.subr.mxu0 0.0
    %4651 = vmatpush2.msra.mxu0 0.0
    %4652 = vmatprep.subr.mxu0 0.0
    %4653 = vmatpush2.msra.mxu0 0.0
    %4654 = vmatprep.subr.mxu0 0.0
    %4655 = vmatpush2.msra.mxu0 0.0
    %4656 = vmatprep.subr.mxu0 0.0
    %4657 = vmatpush2.msra.mxu0 0.0
    %4658 = vmatprep.subr.mxu0 0.0
    %4659 = vmatpush2.msra.mxu0 0.0
    %4660 = vmatprep.subr.mxu0 0.0
    %4661 = vmatpush2.msra.mxu0 0.0
    %4662 = vmatprep.subr.mxu0 0.0
    %4663 = vmatpush2.msra.mxu0 0.0
    %4664 = vmatprep.subr.mxu0 0.0
    %4665 = vmatpush2.msra.mxu0 0.0
    %4666 = vmatprep.subr.mxu0 0.0
    %4667 = vmatpush2.msra.mxu0 0.0
    %4668 = vmatprep.subr.mxu0 0.0
    %4669 = vmatpush2.msra.mxu0 0.0
    %4670 = vmatprep.subr.mxu0 0.0
    %4671 = vmatpush2.msra.mxu0 0.0
    %4672 = vmatprep.mubr.f32.mxu0 0.0
    %4673 = vmatmul.mubr.f32.gmra.mxu0 %v4602
    %v4674 = vpop.f32.mrf.mxu0
    %v4675 = vadd.f32 %v4598, %v4674
    %v4676 = vpop.f32.mrf.mxu0
    %4677 = vdwg.mxu0
    %v4678 = vsub.f32 %v4675, %v4675
    %v4679 = vmul.f32 %v4678, 1.442695
    %v4680 = vpow.pop %v4679
    %v4681 = vadd.f32 %v4680, 0.0
    %v4682 = vrcp.pop %v4681
    %v4683 = vmul.f32 %v4680, %v4682
    %vm4684 = vcmask 7168
    %4685 = vst.msk [vmem:[%s13] sm:$0xff] %vm4684, %v4683
    // Predicated region
    $region86: #{tpu_custom_call.1} parent=1 // pred_check
      _
    $region87: #{tpu_custom_call.1} parent=1 // pred_check_branch
      %4687 = sbr.rel (0) target = $region89
    $region88: #{tpu_custom_call.1} parent=1 // pred_region
      _
    $region89: #{tpu_custom_call.1} parent=1 // pred_fallthru
      _
    // Predicated region
    $region90: #{tpu_custom_call.1} parent=1 // pred_check
      _
    $region91: #{tpu_custom_call.1} parent=1 // pred_check_branch
      %4689 = sbr.rel (0) target = $region93
    $region92: #{tpu_custom_call.1} parent=1 // pred_region
      _
    $region93: #{tpu_custom_call.1} parent=1 // pred_fallthru
      _
    %4690 = vsyncpa [#allocation4], 1
    %4691 = vsyncpa [#allocation6], 1
    %4692 = vsyncpa [#allocation9], 1
    %4693 = vsyncpa [#allocation12], 1
    %4694 = vsyncpa [#allocation15], 1

</llo_original>
